<compile_context>
chip_gen: v5e
topology: v5e:2x2
jax: 0.10.0
libtpu: 0.0.40
codegen_flags: <defaults>
</compile_context>

<pallas_src>
import functools
import numpy as np
import jax
import jax.numpy as jnp
from jax.experimental import pallas as pl
from jax.experimental.pallas import tpu as pltpu


# --------------------------------------------------------------- selectors --

def _make_selectors(m: int):
    """Host-side constant selectors (float32).

    sel (3m, m*m): rows [0:m)   = De  (diagonal extraction / placement)
                   rows [m:2m)  = Rt  (row-sum / row broadcast)
                   rows [2m:3m) = Ct  (col-sum / col broadcast)
    pm  (m*m, m*m): flat transpose permutation, vec(X) @ pm == vec(X^T).
    """
    m2 = m * m
    i = np.arange(m)[:, None]
    p = np.arange(m2)[None, :]
    Rt = (p // m == i).astype(np.float32)
    Ct = (p % m == i).astype(np.float32)
    De = Rt * Ct
    sel = np.concatenate([De, Rt, Ct], axis=0)            # (3m, m2)
    q = np.arange(m2)
    Pm = np.zeros((m2, m2), np.float32)
    Pm[(q % m) * m + q // m, q] = 1.0                      # TODO(synk): for very
    # large max_edge, Pm (m^4 floats) should be replaced by a blocked transpose.
    return jnp.asarray(sel), jnp.asarray(Pm)


# ------------------------------------------------------------------ kernel --

def _fused_ign_kernel(x_ref, sel_ref, pm_ref,
                      wx0_ref, wt0_ref, pb0_ref,
                      wxm_ref, wtm_ref, pbm_ref,
                      wt4_ref, b4_ref,
                      o_ref, *, m: int, n_mid: int):
    """Fused IGN2to1 forward for one padded Hodge Laplacian (one grid step).

    x_ref  : (1, 1, m*m)  flattened (L1 + 1) laplacian
    sel_ref: (3m, m*m)    [De; Rt; Ct] selectors (reduce & expand)
    pm_ref : (m*m, m*m)   flat transpose permutation
    layer 0   : wx0 (2S, 1),  wt0 (3S, 5),   pb0 (2S, 1)
    layers 1..: wxm (n_mid, 2S, S), wtm (n_mid, 3S, 5S), pbm (n_mid, 2S, 1)
    final 2->1: wt4 (S, 5S),  b4 (S, 1)
    o_ref  : (1, S, m)
    """
    f32 = jnp.float32
    inv_m = np.float32(1.0 / m)
    inv_m2 = np.float32(1.0 / (m * m))

    sel = sel_ref[...]                                     # (3m, m2)
    de, rt, ct = sel[0:m], sel[m:2 * m], sel[2 * m:3 * m]
    pm = pm_ref[...]                                       # (m2, m2)

    def contract(a, b):  # a:(D, m2), b:(m, m2) -> (D, m); contract lane axis
        return jax.lax.dot_general(a, b, (((1,), (1,)), ((), ())),
                                   preferred_element_type=f32)

    def summaries(x):
        # x: (D, m2) -> (5D, m) = [diag; rowsum/m; colsum/m; trace/m; total/m^2]
        dg = contract(x, de)                               # (D, m) diagonal
        sr = contract(x, rt)                               # (D, m) row sums
        sc = contract(x, ct)                               # (D, m) col sums
        sdiag = jnp.sum(dg, axis=1, keepdims=True) * inv_m
        sall = jnp.sum(sr, axis=1, keepdims=True) * inv_m2
        return jnp.concatenate(
            [dg, sr * inv_m, sc * inv_m,
             jnp.broadcast_to(sdiag, dg.shape),
             jnp.broadcast_to(sall, dg.shape)], axis=0)    # (5D, m)

    def layer_2to2(x, wx, wt, pb):
        # x (D, m2); wx (2S, D); wt (3S, 5D); pb (2S, 1) = [diag_bias; all_bias]
        s = wx.shape[0] // 2
        feats = summaries(x)                               # (5D, m)
        if wx.shape[1] == 1:                               # layer 0 (D == 1)
            u = wx * x                                     # outer product
        else:
            u = jnp.dot(wx, x, preferred_element_type=f32)  # (2S, m2)
        t = jnp.dot(wt, feats, preferred_element_type=f32)  # (3S, m)
        t_diag = t[0:s] + pb[0:s]                          # placed on the diagonal
        t_row = t[s:2 * s] + pb[s:2 * s]                   # broadcast along rows
        t_col = t[2 * s:3 * s]                             # broadcast along cols
        out = u[0:s] + jnp.dot(u[s:2 * s], pm, preferred_element_type=f32)
        out = out + jnp.dot(t_diag, de, preferred_element_type=f32)
        out = out + jnp.dot(t_row, rt, preferred_element_type=f32)
        out = out + jnp.dot(t_col, ct, preferred_element_type=f32)
        return jnp.maximum(out, 0.0)                       # eval-BN folded; ReLU

    x = x_ref[0].astype(f32)                               # (1, m2)
    x = layer_2to2(x, wx0_ref[...], wt0_ref[...], pb0_ref[...])
    for l in range(n_mid):                                 # statically unrolled
        x = layer_2to2(x, wxm_ref[l], wtm_ref[l], pbm_ref[l])

    # final 2 -> 1 layer (5-op basis) + bias
    feats = summaries(x)                                   # (5S, m)
    out = jnp.dot(wt4_ref[...], feats, preferred_element_type=f32) + b4_ref[...]
    o_ref[0] = out                                         # (S, m)


# ----------------------------------------------------------------- wrapper --

def ign2to1_fused_forward(params, x_flat, m):
    """x_flat: (B, 1, m*m) float32 -> (B, S, m) float32 (single pallas_call)."""
    B = x_flat.shape[0]
    m2 = m * m
    S = params["wt4"].shape[0]
    n_mid = params["wxm"].shape[0]
    sel, pm = _make_selectors(m)

    def const(arr):
        n = arr.ndim
        return pl.BlockSpec(arr.shape, lambda b, _n=n: (0,) * _n)

    kernel = functools.partial(_fused_ign_kernel, m=m, n_mid=n_mid)
    return pl.pallas_call(
        kernel,
        out_shape=jax.ShapeDtypeStruct((B, S, m), jnp.float32),
        grid=(B,),
        in_specs=[
            pl.BlockSpec((1, 1, m2), lambda b: (b, 0, 0)),
            const(sel), const(pm),
            const(params["wx0"]), const(params["wt0"]), const(params["pb0"]),
            const(params["wxm"]), const(params["wtm"]), const(params["pbm"]),
            const(params["wt4"]), const(params["b4"]),
        ],
        out_specs=pl.BlockSpec((1, S, m), lambda b: (b, 0, 0)),
        compiler_params=pltpu.CompilerParams(dimension_semantics=("parallel",)),
    )(x_flat, sel, pm,
      params["wx0"], params["wt0"], params["pb0"],
      params["wxm"], params["wtm"], params["pbm"],
      params["wt4"], params["b4"])


# ---------------------------------------------------------- params packing --

def init_ign2to1_packed(key, in_dim, hid_dim, out_dim, num_layers=5, bn_eps=1e-5):
    """Deterministic init; packs weights into the fused-kernel layout.

    2->2 layer (15-op basis, op order identical to v1), BN folded:
      wx (2S, D)  = [W_op10; W_op11]                      (identity / transpose)
      wt (3S, 5D) = rows [T_diag; T_row; T_col], cols [diag|rowsum|colsum|trace|total]
      pb (2S, 1)  = [bn_scale*diag_bias; bn_scale*all_bias + bn_shift]
    2->1 layer (5-op basis): wt4 (S, 5D), b4 (S, 1).
    """
    keys = jax.random.split(key, num_layers)

    def pack_2to2(k, d, s):
        coeffs = jax.random.normal(k, (d, s, 15), jnp.float32) * (
            np.sqrt(2.0) / (d + s))
        W = jnp.transpose(coeffs, (1, 2, 0))                       # (s, 15, d)
        all_bias = jnp.zeros((s,), jnp.float32)
        diag_bias = jnp.zeros((s,), jnp.float32)
        # eval-mode BatchNorm with default stats (mean=0, var=1, gamma=1, beta=0)
        bn_scale = jnp.full((s,), 1.0 / np.sqrt(1.0 + bn_eps), jnp.float32)
        bn_shift = jnp.zeros((s,), jnp.float32)
        Wf = W * bn_scale[:, None, None]                           # fold BN scale
        wx = jnp.concatenate([Wf[:, 9], Wf[:, 10]], axis=0)        # (2s, d)
        t_diag_w = jnp.concatenate(
            [Wf[:, 0], Wf[:, 2], Wf[:, 3], Wf[:, 1], Wf[:, 4]], axis=1)
        t_row_w = jnp.concatenate(
            [Wf[:, 11], Wf[:, 6], Wf[:, 5], Wf[:, 13], Wf[:, 14]], axis=1)
        t_col_w = jnp.concatenate(
            [Wf[:, 12], Wf[:, 8], Wf[:, 7],
             jnp.zeros((s, 2 * d), jnp.float32)], axis=1)
        wt = jnp.concatenate([t_diag_w, t_row_w, t_col_w], axis=0)  # (3s, 5d)
        pb = jnp.concatenate([bn_scale * diag_bias,
                              bn_scale * all_bias + bn_shift], axis=0)[:, None]
        return wx, wt, pb

    wx0, wt0, pb0 = pack_2to2(keys[0], in_dim, hid_dim)
    mids = [pack_2to2(keys[i], hid_dim, hid_dim) for i in range(1, num_layers - 1)]
    wxm = jnp.stack([t[0] for t in mids])
    wtm = jnp.stack([t[1] for t in mids])
    pbm = jnp.stack([t[2] for t in mids])

    d, s = hid_dim, out_dim
    coeffs = jax.random.normal(keys[-1], (d, s, 5), jnp.float32) * (
        np.sqrt(2.0) / (d + s))
    V = jnp.transpose(coeffs, (1, 2, 0))                           # (s, 5, d)
    # 5-op order: [diag, trace/m, rowsum/m, colsum/m, total/m^2]
    wt4 = jnp.concatenate([V[:, 0], V[:, 2], V[:, 3], V[:, 1], V[:, 4]], axis=1)
    b4 = jnp.zeros((s, 1), jnp.float32)
    return dict(wx0=wx0, wt0=wt0, pb0=pb0, wxm=wxm, wtm=wtm, pbm=pbm,
                wt4=wt4, b4=b4)


# ------------------------------------------------------------ glue / model --

def pad_hodge_unsqueeze(x, padlen):
    """Faithful port of the torch helper (concrete per-graph shapes, glue)."""
    x = x + 1
    xlen = x.shape[0]
    mask = np.zeros(padlen, dtype=bool)
    if xlen < padlen:
        new_x = jnp.zeros((padlen, padlen), x.dtype).at[:xlen, :xlen].set(x)
        mask[:xlen] = True
        x = new_x
    else:
        mask[:] = True
    return x[None], mask


def cyclenet_hodge_edge_forward(params, data, hodge_emb=None):
    """Mirrors CycleNet_Hodge_edge.forward (Hodge branch; GNN_edge is a TODO)."""
    if hodge_emb is not None:
        max_edge, max_beta = 0, 0
        for he in hodge_emb:
            max_edge = max(max_edge, he[1].shape[0])
            max_beta = max(max_beta, he[2].shape[0])
        L1, pad_masks = [], []
        for he in hodge_emb:
            he_noncycle = jnp.asarray(he[3], dtype=data["x"].dtype)  # ".to_dense()"
            pad_emb, pad_mask = pad_hodge_unsqueeze(he_noncycle, max_edge)
            L1.append(pad_emb)
            pad_masks.append(pad_mask)
        L1 = jnp.concatenate(L1, axis=0)                     # (B, m, m)
        pad_masks = np.concatenate(pad_masks)                # (B*m,)
        B, m, _ = L1.shape
        x_flat = L1.reshape(B, 1, m * m)                     # layout plumbing (glue)

        emb = ign2to1_fused_forward(params["ign"], x_flat, m)   # (B, C, m)
        C = emb.shape[1]
        emb = jnp.transpose(emb, (0, 2, 1)).reshape(-1, C)   # .transpose(1,2).view(-1,C)
        L1_emb = emb[pad_masks]                              # L1[Pad_Masks]
    else:
        L1_emb = None

    # edge-graph wiring (new_edge_index), as in the reference forward (pure glue)
    edge_index = np.asarray(data["edge_index"])              # (2, E)
    E, N = edge_index.shape[1], data["x"].shape[0]
    Bmat = np.zeros((E, N), np.float32)
    np.add.at(Bmat, (np.arange(E), edge_index[0]), 1.0)
    np.add.at(Bmat, (np.arange(E), edge_index[1]), 1.0)
    new_edge_index = np.stack(np.nonzero(Bmat @ Bmat.T))     # (2, nnz)
    edge_batch = np.asarray(data["batch"])[edge_index[0]]

    # TODO(synk): GNN_edge(...) backbone class is not included in the reference
    # source; return the masked Hodge edge embeddings + graph wiring instead of
    # self.gnn(L1, new_edge_index, data.batch[data.edge_index[0]]).
    return L1_emb, new_edge_index, edge_batch


# --------------------------------------------------------------------- main --

if __name__ == "__main__":
    key = jax.random.PRNGKey(0)
    k_param, k_data, k_node = jax.random.split(key, 3)

    node_feat, edge_feat, n_hid, n_out, nl_gnn = 8, 4, 32, 16, 3   # edge_dim = n_hid
    params = {"ign": init_ign2to1_packed(k_param, 1, n_hid, n_hid, num_layers=5)}

    # synthetic batch: per-graph tuple (cycle_emb, edge_list, betti, dense L1)
    edge_counts = [12, 16]                    # -> max_edge (pad length m) = 16
    hodge_emb = []
    for g, ne in enumerate(edge_counts):
        kg = jax.random.fold_in(k_data, g)
        ka, kb = jax.random.split(kg)
        cycle_emb = jax.random.normal(ka, (ne, 2), jnp.float32)    # he[0] (unused here)
        edge_list = jnp.zeros((ne, 2), jnp.int32)                  # he[1] -> max_edge
        betti = jnp.zeros((1 + g,), jnp.float32)                   # he[2] -> max_beta
        a = jax.random.normal(kb, (ne, ne), jnp.float32)
        l1_dense = 0.5 * (a + a.T)                                 # he[3] ("to_dense()")
        hodge_emb.append((cycle_emb, edge_list, betti, l1_dense))

    n_nodes = 10
    n_edges = sum(edge_counts)
    rng = np.random.RandomState(0)
    data = {
        "x": jax.random.normal(k_node, (n_nodes, node_feat), jnp.float32),
        "edge_index": rng.randint(0, n_nodes, size=(2, n_edges)).astype(np.int32),
        "batch": np.concatenate([np.zeros(5, np.int32), np.ones(5, np.int32)]),
    }

    emb, new_edge_index, edge_batch = cyclenet_hodge_edge_forward(
        params, data, hodge_emb)
    emb = jax.block_until_ready(emb)
    assert emb.shape == (sum(edge_counts), n_hid), emb.shape
    assert bool(jnp.all(jnp.isfinite(emb)))
    assert new_edge_index.shape[0] == 2
    print("KERNEL_OK")
</pallas_src>

<mosaic_0001>
module attributes {stable_mosaic.version = 11 : i64} {
  func.func @_fused_ign_kernel(%arg0: i32, %arg1: memref<1x1x256xf32, #tpu.memory_space<vmem>>, %arg2: memref<48x256xf32, #tpu.memory_space<vmem>>, %arg3: memref<256x256xf32, #tpu.memory_space<vmem>>, %arg4: memref<64x1xf32, #tpu.memory_space<vmem>>, %arg5: memref<96x5xf32, #tpu.memory_space<vmem>>, %arg6: memref<64x1xf32, #tpu.memory_space<vmem>>, %arg7: memref<3x64x32xf32, #tpu.memory_space<vmem>>, %arg8: memref<3x96x160xf32, #tpu.memory_space<vmem>>, %arg9: memref<3x64x1xf32, #tpu.memory_space<vmem>>, %arg10: memref<32x160xf32, #tpu.memory_space<vmem>>, %arg11: memref<32x1xf32, #tpu.memory_space<vmem>>, %arg12: memref<1x32x16xf32, #tpu.memory_space<vmem>>) attributes {dimension_semantics = [#tpu.dimension_semantics<parallel>], iteration_bounds = array<i64: 2>, scalar_prefetch = 0 : i64, scratch_operands = 0 : i64, tpu.core_type = #tpu.core_type<tc>, window_params = [{transform_indices = @transform_0, window_bounds = array<i64: 1, 1, 256>}, {pipeline_mode = #tpu.pipeline_mode<synchronous>, transform_indices = @transform_1, window_bounds = array<i64: 48, 256>}, {pipeline_mode = #tpu.pipeline_mode<synchronous>, transform_indices = @transform_2, window_bounds = array<i64: 256, 256>}, {pipeline_mode = #tpu.pipeline_mode<synchronous>, transform_indices = @transform_3, window_bounds = array<i64: 64, 1>}, {pipeline_mode = #tpu.pipeline_mode<synchronous>, transform_indices = @transform_4, window_bounds = array<i64: 96, 5>}, {pipeline_mode = #tpu.pipeline_mode<synchronous>, transform_indices = @transform_5, window_bounds = array<i64: 64, 1>}, {pipeline_mode = #tpu.pipeline_mode<synchronous>, transform_indices = @transform_6, window_bounds = array<i64: 3, 64, 32>}, {pipeline_mode = #tpu.pipeline_mode<synchronous>, transform_indices = @transform_7, window_bounds = array<i64: 3, 96, 160>}, {pipeline_mode = #tpu.pipeline_mode<synchronous>, transform_indices = @transform_8, window_bounds = array<i64: 3, 64, 1>}, {pipeline_mode = #tpu.pipeline_mode<synchronous>, transform_indices = @transform_9, window_bounds = array<i64: 32, 160>}, {pipeline_mode = #tpu.pipeline_mode<synchronous>, transform_indices = @transform_10, window_bounds = array<i64: 32, 1>}, {transform_indices = @transform_11, window_bounds = array<i64: 1, 32, 16>}]} {
    %c0 = arith.constant 0 : index
    %c0_0 = arith.constant 0 : index
    %0 = vector.load %arg2[%c0, %c0_0] : memref<48x256xf32, #tpu.memory_space<vmem>>, vector<48x256xf32>
    %1 = vector.extract_strided_slice %0 {offsets = [0, 0], sizes = [16, 256], strides = [1, 1]} : vector<48x256xf32> to vector<16x256xf32>
    %2 = vector.extract_strided_slice %0 {offsets = [16, 0], sizes = [16, 256], strides = [1, 1]} : vector<48x256xf32> to vector<16x256xf32>
    %3 = vector.extract_strided_slice %0 {offsets = [32, 0], sizes = [16, 256], strides = [1, 1]} : vector<48x256xf32> to vector<16x256xf32>
    %c0_1 = arith.constant 0 : index
    %c0_2 = arith.constant 0 : index
    %4 = vector.load %arg3[%c0_1, %c0_2] : memref<256x256xf32, #tpu.memory_space<vmem>>, vector<256x256xf32>
    %c0_3 = arith.constant 0 : index
    %c0_4 = arith.constant 0 : index
    %c0_5 = arith.constant 0 : index
    %5 = vector.load %arg1[%c0_3, %c0_4, %c0_5] : memref<1x1x256xf32, #tpu.memory_space<vmem>>, vector<1x1x256xf32>
    %6 = vector.shape_cast %5 : vector<1x1x256xf32> to vector<1x256xf32>
    %c0_6 = arith.constant 0 : index
    %c0_7 = arith.constant 0 : index
    %7 = vector.load %arg4[%c0_6, %c0_7] : memref<64x1xf32, #tpu.memory_space<vmem>>, vector<64x1xf32>
    %c0_8 = arith.constant 0 : index
    %c0_9 = arith.constant 0 : index
    %8 = vector.load %arg5[%c0_8, %c0_9] : memref<96x5xf32, #tpu.memory_space<vmem>>, vector<96x5xf32>
    %c0_10 = arith.constant 0 : index
    %c0_11 = arith.constant 0 : index
    %9 = vector.load %arg6[%c0_10, %c0_11] : memref<64x1xf32, #tpu.memory_space<vmem>>, vector<64x1xf32>
    %cst = arith.constant dense<0.000000e+00> : vector<1x16xf32>
    %10 = tpu.matmul %6, %1, %cst {dimension_numbers = #tpu.dot_dimension_numbers<[1], [1], [0], [0], [0, 0, 1, 0], [], []>} : vector<1x256xf32>, vector<16x256xf32>, vector<1x16xf32> -> vector<1x16xf32>
    %cst_12 = arith.constant dense<0.000000e+00> : vector<1x16xf32>
    %11 = tpu.matmul %6, %2, %cst_12 {dimension_numbers = #tpu.dot_dimension_numbers<[1], [1], [0], [0], [0, 0, 1, 0], [], []>} : vector<1x256xf32>, vector<16x256xf32>, vector<1x16xf32> -> vector<1x16xf32>
    %cst_13 = arith.constant dense<0.000000e+00> : vector<1x16xf32>
    %12 = tpu.matmul %6, %3, %cst_13 {dimension_numbers = #tpu.dot_dimension_numbers<[1], [1], [0], [0], [0, 0, 1, 0], [], []>} : vector<1x256xf32>, vector<16x256xf32>, vector<1x16xf32> -> vector<1x16xf32>
    %cst_14 = arith.constant dense<0.000000e+00> : vector<1xf32>
    %13 = vector.multi_reduction <add>, %10, %cst_14 [1] : vector<1x16xf32> to vector<1xf32>
    %14 = vector.shape_cast %13 : vector<1xf32> to vector<1x1xf32>
    %cst_15 = arith.constant 6.250000e-02 : f32
    %15 = vector.broadcast %cst_15 : f32 to vector<1x1xf32>
    %16 = arith.mulf %14, %15 : vector<1x1xf32>
    %cst_16 = arith.constant dense<0.000000e+00> : vector<1xf32>
    %17 = vector.multi_reduction <add>, %11, %cst_16 [1] : vector<1x16xf32> to vector<1xf32>
    %18 = vector.shape_cast %17 : vector<1xf32> to vector<1x1xf32>
    %cst_17 = arith.constant 3.906250e-03 : f32
    %19 = vector.broadcast %cst_17 : f32 to vector<1x1xf32>
    %20 = arith.mulf %18, %19 : vector<1x1xf32>
    %cst_18 = arith.constant 6.250000e-02 : f32
    %21 = vector.broadcast %cst_18 : f32 to vector<1x16xf32>
    %22 = arith.mulf %11, %21 : vector<1x16xf32>
    %cst_19 = arith.constant 6.250000e-02 : f32
    %23 = vector.broadcast %cst_19 : f32 to vector<1x16xf32>
    %24 = arith.mulf %12, %23 : vector<1x16xf32>
    %25 = vector.shape_cast %16 : vector<1x1xf32> to vector<1x1xf32>
    %26 = vector.broadcast %25 : vector<1x1xf32> to vector<1x16xf32>
    %27 = vector.shape_cast %20 : vector<1x1xf32> to vector<1x1xf32>
    %28 = vector.broadcast %27 : vector<1x1xf32> to vector<1x16xf32>
    %29 = tpu.concatenate %10, %22, %24, %26, %28 in 0 : vector<1x16xf32>, vector<1x16xf32>, vector<1x16xf32>, vector<1x16xf32>, vector<1x16xf32> -> vector<5x16xf32>
    %30 = vector.broadcast %7 : vector<64x1xf32> to vector<64x256xf32>
    %31 = vector.broadcast %6 : vector<1x256xf32> to vector<64x256xf32>
    %32 = arith.mulf %30, %31 : vector<64x256xf32>
    %cst_20 = arith.constant dense<0.000000e+00> : vector<96x16xf32>
    %33 = tpu.matmul %8, %29, %cst_20 {dimension_numbers = #tpu.dot_dimension_numbers<[1], [0], [0], [1], [0, 0, 1, 1], [], []>} : vector<96x5xf32>, vector<5x16xf32>, vector<96x16xf32> -> vector<96x16xf32>
    %34 = vector.extract_strided_slice %33 {offsets = [0, 0], sizes = [32, 16], strides = [1, 1]} : vector<96x16xf32> to vector<32x16xf32>
    %35 = vector.extract_strided_slice %9 {offsets = [0, 0], sizes = [32, 1], strides = [1, 1]} : vector<64x1xf32> to vector<32x1xf32>
    %36 = vector.broadcast %35 : vector<32x1xf32> to vector<32x16xf32>
    %37 = arith.addf %34, %36 : vector<32x16xf32>
    %38 = vector.extract_strided_slice %33 {offsets = [32, 0], sizes = [32, 16], strides = [1, 1]} : vector<96x16xf32> to vector<32x16xf32>
    %39 = vector.extract_strided_slice %9 {offsets = [32, 0], sizes = [32, 1], strides = [1, 1]} : vector<64x1xf32> to vector<32x1xf32>
    %40 = vector.broadcast %39 : vector<32x1xf32> to vector<32x16xf32>
    %41 = arith.addf %38, %40 : vector<32x16xf32>
    %42 = vector.extract_strided_slice %33 {offsets = [64, 0], sizes = [32, 16], strides = [1, 1]} : vector<96x16xf32> to vector<32x16xf32>
    %43 = vector.extract_strided_slice %32 {offsets = [0, 0], sizes = [32, 256], strides = [1, 1]} : vector<64x256xf32> to vector<32x256xf32>
    %44 = vector.extract_strided_slice %32 {offsets = [32, 0], sizes = [32, 256], strides = [1, 1]} : vector<64x256xf32> to vector<32x256xf32>
    %cst_21 = arith.constant dense<0.000000e+00> : vector<32x256xf32>
    %45 = tpu.matmul %44, %4, %cst_21 {dimension_numbers = #tpu.dot_dimension_numbers<[1], [0], [0], [1], [0, 0, 1, 1], [], []>} : vector<32x256xf32>, vector<256x256xf32>, vector<32x256xf32> -> vector<32x256xf32>
    %46 = arith.addf %43, %45 : vector<32x256xf32>
    %cst_22 = arith.constant dense<0.000000e+00> : vector<32x256xf32>
    %47 = tpu.matmul %37, %1, %cst_22 {dimension_numbers = #tpu.dot_dimension_numbers<[1], [0], [0], [1], [0, 0, 1, 1], [], []>} : vector<32x16xf32>, vector<16x256xf32>, vector<32x256xf32> -> vector<32x256xf32>
    %48 = arith.addf %46, %47 : vector<32x256xf32>
    %cst_23 = arith.constant dense<0.000000e+00> : vector<32x256xf32>
    %49 = tpu.matmul %41, %2, %cst_23 {dimension_numbers = #tpu.dot_dimension_numbers<[1], [0], [0], [1], [0, 0, 1, 1], [], []>} : vector<32x16xf32>, vector<16x256xf32>, vector<32x256xf32> -> vector<32x256xf32>
    %50 = arith.addf %48, %49 : vector<32x256xf32>
    %cst_24 = arith.constant dense<0.000000e+00> : vector<32x256xf32>
    %51 = tpu.matmul %42, %3, %cst_24 {dimension_numbers = #tpu.dot_dimension_numbers<[1], [0], [0], [1], [0, 0, 1, 1], [], []>} : vector<32x16xf32>, vector<16x256xf32>, vector<32x256xf32> -> vector<32x256xf32>
    %52 = arith.addf %50, %51 : vector<32x256xf32>
    %cst_25 = arith.constant 0.000000e+00 : f32
    %53 = vector.broadcast %cst_25 : f32 to vector<32x256xf32>
    %54 = arith.maximumf %52, %53 : vector<32x256xf32>
    %c0_26 = arith.constant 0 : index
    %c0_27 = arith.constant 0 : index
    %c0_28 = arith.constant 0 : index
    %55 = vector.load %arg7[%c0_26, %c0_27, %c0_28] : memref<3x64x32xf32, #tpu.memory_space<vmem>>, vector<1x64x32xf32>
    %56 = vector.shape_cast %55 : vector<1x64x32xf32> to vector<64x32xf32>
    %c0_29 = arith.constant 0 : index
    %c0_30 = arith.constant 0 : index
    %c0_31 = arith.constant 0 : index
    %57 = vector.load %arg8[%c0_29, %c0_30, %c0_31] : memref<3x96x160xf32, #tpu.memory_space<vmem>>, vector<1x96x160xf32>
    %58 = vector.shape_cast %57 : vector<1x96x160xf32> to vector<96x160xf32>
    %c0_32 = arith.constant 0 : index
    %c0_33 = arith.constant 0 : index
    %c0_34 = arith.constant 0 : index
    %59 = vector.load %arg9[%c0_32, %c0_33, %c0_34] : memref<3x64x1xf32, #tpu.memory_space<vmem>>, vector<1x64x1xf32>
    %60 = vector.shape_cast %59 : vector<1x64x1xf32> to vector<64x1xf32>
    %cst_35 = arith.constant dense<0.000000e+00> : vector<32x16xf32>
    %61 = tpu.matmul %54, %1, %cst_35 {dimension_numbers = #tpu.dot_dimension_numbers<[1], [1], [0], [0], [0, 0, 1, 0], [], []>} : vector<32x256xf32>, vector<16x256xf32>, vector<32x16xf32> -> vector<32x16xf32>
    %cst_36 = arith.constant dense<0.000000e+00> : vector<32x16xf32>
    %62 = tpu.matmul %54, %2, %cst_36 {dimension_numbers = #tpu.dot_dimension_numbers<[1], [1], [0], [0], [0, 0, 1, 0], [], []>} : vector<32x256xf32>, vector<16x256xf32>, vector<32x16xf32> -> vector<32x16xf32>
    %cst_37 = arith.constant dense<0.000000e+00> : vector<32x16xf32>
    %63 = tpu.matmul %54, %3, %cst_37 {dimension_numbers = #tpu.dot_dimension_numbers<[1], [1], [0], [0], [0, 0, 1, 0], [], []>} : vector<32x256xf32>, vector<16x256xf32>, vector<32x16xf32> -> vector<32x16xf32>
    %cst_38 = arith.constant dense<0.000000e+00> : vector<32xf32>
    %64 = vector.multi_reduction <add>, %61, %cst_38 [1] : vector<32x16xf32> to vector<32xf32>
    %65 = vector.shape_cast %64 : vector<32xf32> to vector<32x1xf32>
    %cst_39 = arith.constant 6.250000e-02 : f32
    %66 = vector.broadcast %cst_39 : f32 to vector<32x1xf32>
    %67 = arith.mulf %65, %66 : vector<32x1xf32>
    %cst_40 = arith.constant dense<0.000000e+00> : vector<32xf32>
    %68 = vector.multi_reduction <add>, %62, %cst_40 [1] : vector<32x16xf32> to vector<32xf32>
    %69 = vector.shape_cast %68 : vector<32xf32> to vector<32x1xf32>
    %cst_41 = arith.constant 3.906250e-03 : f32
    %70 = vector.broadcast %cst_41 : f32 to vector<32x1xf32>
    %71 = arith.mulf %69, %70 : vector<32x1xf32>
    %cst_42 = arith.constant 6.250000e-02 : f32
    %72 = vector.broadcast %cst_42 : f32 to vector<32x16xf32>
    %73 = arith.mulf %62, %72 : vector<32x16xf32>
    %cst_43 = arith.constant 6.250000e-02 : f32
    %74 = vector.broadcast %cst_43 : f32 to vector<32x16xf32>
    %75 = arith.mulf %63, %74 : vector<32x16xf32>
    %76 = vector.shape_cast %67 : vector<32x1xf32> to vector<32x1xf32>
    %77 = vector.broadcast %76 : vector<32x1xf32> to vector<32x16xf32>
    %78 = vector.shape_cast %71 : vector<32x1xf32> to vector<32x1xf32>
    %79 = vector.broadcast %78 : vector<32x1xf32> to vector<32x16xf32>
    %80 = tpu.concatenate %61, %73, %75, %77, %79 in 0 : vector<32x16xf32>, vector<32x16xf32>, vector<32x16xf32>, vector<32x16xf32>, vector<32x16xf32> -> vector<160x16xf32>
    %cst_44 = arith.constant dense<0.000000e+00> : vector<64x256xf32>
    %81 = tpu.matmul %56, %54, %cst_44 {dimension_numbers = #tpu.dot_dimension_numbers<[1], [0], [0], [1], [0, 0, 1, 1], [], []>} : vector<64x32xf32>, vector<32x256xf32>, vector<64x256xf32> -> vector<64x256xf32>
    %cst_45 = arith.constant dense<0.000000e+00> : vector<96x16xf32>
    %82 = tpu.matmul %58, %80, %cst_45 {dimension_numbers = #tpu.dot_dimension_numbers<[1], [0], [0], [1], [0, 0, 1, 1], [], []>} : vector<96x160xf32>, vector<160x16xf32>, vector<96x16xf32> -> vector<96x16xf32>
    %83 = vector.extract_strided_slice %82 {offsets = [0, 0], sizes = [32, 16], strides = [1, 1]} : vector<96x16xf32> to vector<32x16xf32>
    %84 = vector.extract_strided_slice %60 {offsets = [0, 0], sizes = [32, 1], strides = [1, 1]} : vector<64x1xf32> to vector<32x1xf32>
    %85 = vector.broadcast %84 : vector<32x1xf32> to vector<32x16xf32>
    %86 = arith.addf %83, %85 : vector<32x16xf32>
    %87 = vector.extract_strided_slice %82 {offsets = [32, 0], sizes = [32, 16], strides = [1, 1]} : vector<96x16xf32> to vector<32x16xf32>
    %88 = vector.extract_strided_slice %60 {offsets = [32, 0], sizes = [32, 1], strides = [1, 1]} : vector<64x1xf32> to vector<32x1xf32>
    %89 = vector.broadcast %88 : vector<32x1xf32> to vector<32x16xf32>
    %90 = arith.addf %87, %89 : vector<32x16xf32>
    %91 = vector.extract_strided_slice %82 {offsets = [64, 0], sizes = [32, 16], strides = [1, 1]} : vector<96x16xf32> to vector<32x16xf32>
    %92 = vector.extract_strided_slice %81 {offsets = [0, 0], sizes = [32, 256], strides = [1, 1]} : vector<64x256xf32> to vector<32x256xf32>
    %93 = vector.extract_strided_slice %81 {offsets = [32, 0], sizes = [32, 256], strides = [1, 1]} : vector<64x256xf32> to vector<32x256xf32>
    %cst_46 = arith.constant dense<0.000000e+00> : vector<32x256xf32>
    %94 = tpu.matmul %93, %4, %cst_46 {dimension_numbers = #tpu.dot_dimension_numbers<[1], [0], [0], [1], [0, 0, 1, 1], [], []>} : vector<32x256xf32>, vector<256x256xf32>, vector<32x256xf32> -> vector<32x256xf32>
    %95 = arith.addf %92, %94 : vector<32x256xf32>
    %cst_47 = arith.constant dense<0.000000e+00> : vector<32x256xf32>
    %96 = tpu.matmul %86, %1, %cst_47 {dimension_numbers = #tpu.dot_dimension_numbers<[1], [0], [0], [1], [0, 0, 1, 1], [], []>} : vector<32x16xf32>, vector<16x256xf32>, vector<32x256xf32> -> vector<32x256xf32>
    %97 = arith.addf %95, %96 : vector<32x256xf32>
    %cst_48 = arith.constant dense<0.000000e+00> : vector<32x256xf32>
    %98 = tpu.matmul %90, %2, %cst_48 {dimension_numbers = #tpu.dot_dimension_numbers<[1], [0], [0], [1], [0, 0, 1, 1], [], []>} : vector<32x16xf32>, vector<16x256xf32>, vector<32x256xf32> -> vector<32x256xf32>
    %99 = arith.addf %97, %98 : vector<32x256xf32>
    %cst_49 = arith.constant dense<0.000000e+00> : vector<32x256xf32>
    %100 = tpu.matmul %91, %3, %cst_49 {dimension_numbers = #tpu.dot_dimension_numbers<[1], [0], [0], [1], [0, 0, 1, 1], [], []>} : vector<32x16xf32>, vector<16x256xf32>, vector<32x256xf32> -> vector<32x256xf32>
    %101 = arith.addf %99, %100 : vector<32x256xf32>
    %cst_50 = arith.constant 0.000000e+00 : f32
    %102 = vector.broadcast %cst_50 : f32 to vector<32x256xf32>
    %103 = arith.maximumf %101, %102 : vector<32x256xf32>
    %c1 = arith.constant 1 : index
    %c0_51 = arith.constant 0 : index
    %c0_52 = arith.constant 0 : index
    %104 = vector.load %arg7[%c1, %c0_51, %c0_52] : memref<3x64x32xf32, #tpu.memory_space<vmem>>, vector<1x64x32xf32>
    %105 = vector.shape_cast %104 : vector<1x64x32xf32> to vector<64x32xf32>
    %c1_53 = arith.constant 1 : index
    %c0_54 = arith.constant 0 : index
    %c0_55 = arith.constant 0 : index
    %106 = vector.load %arg8[%c1_53, %c0_54, %c0_55] : memref<3x96x160xf32, #tpu.memory_space<vmem>>, vector<1x96x160xf32>
    %107 = vector.shape_cast %106 : vector<1x96x160xf32> to vector<96x160xf32>
    %c1_56 = arith.constant 1 : index
    %c0_57 = arith.constant 0 : index
    %c0_58 = arith.constant 0 : index
    %108 = vector.load %arg9[%c1_56, %c0_57, %c0_58] : memref<3x64x1xf32, #tpu.memory_space<vmem>>, vector<1x64x1xf32>
    %109 = vector.shape_cast %108 : vector<1x64x1xf32> to vector<64x1xf32>
    %cst_59 = arith.constant dense<0.000000e+00> : vector<32x16xf32>
    %110 = tpu.matmul %103, %1, %cst_59 {dimension_numbers = #tpu.dot_dimension_numbers<[1], [1], [0], [0], [0, 0, 1, 0], [], []>} : vector<32x256xf32>, vector<16x256xf32>, vector<32x16xf32> -> vector<32x16xf32>
    %cst_60 = arith.constant dense<0.000000e+00> : vector<32x16xf32>
    %111 = tpu.matmul %103, %2, %cst_60 {dimension_numbers = #tpu.dot_dimension_numbers<[1], [1], [0], [0], [0, 0, 1, 0], [], []>} : vector<32x256xf32>, vector<16x256xf32>, vector<32x16xf32> -> vector<32x16xf32>
    %cst_61 = arith.constant dense<0.000000e+00> : vector<32x16xf32>
    %112 = tpu.matmul %103, %3, %cst_61 {dimension_numbers = #tpu.dot_dimension_numbers<[1], [1], [0], [0], [0, 0, 1, 0], [], []>} : vector<32x256xf32>, vector<16x256xf32>, vector<32x16xf32> -> vector<32x16xf32>
    %cst_62 = arith.constant dense<0.000000e+00> : vector<32xf32>
    %113 = vector.multi_reduction <add>, %110, %cst_62 [1] : vector<32x16xf32> to vector<32xf32>
    %114 = vector.shape_cast %113 : vector<32xf32> to vector<32x1xf32>
    %cst_63 = arith.constant 6.250000e-02 : f32
    %115 = vector.broadcast %cst_63 : f32 to vector<32x1xf32>
    %116 = arith.mulf %114, %115 : vector<32x1xf32>
    %cst_64 = arith.constant dense<0.000000e+00> : vector<32xf32>
    %117 = vector.multi_reduction <add>, %111, %cst_64 [1] : vector<32x16xf32> to vector<32xf32>
    %118 = vector.shape_cast %117 : vector<32xf32> to vector<32x1xf32>
    %cst_65 = arith.constant 3.906250e-03 : f32
    %119 = vector.broadcast %cst_65 : f32 to vector<32x1xf32>
    %120 = arith.mulf %118, %119 : vector<32x1xf32>
    %cst_66 = arith.constant 6.250000e-02 : f32
    %121 = vector.broadcast %cst_66 : f32 to vector<32x16xf32>
    %122 = arith.mulf %111, %121 : vector<32x16xf32>
    %cst_67 = arith.constant 6.250000e-02 : f32
    %123 = vector.broadcast %cst_67 : f32 to vector<32x16xf32>
    %124 = arith.mulf %112, %123 : vector<32x16xf32>
    %125 = vector.shape_cast %116 : vector<32x1xf32> to vector<32x1xf32>
    %126 = vector.broadcast %125 : vector<32x1xf32> to vector<32x16xf32>
    %127 = vector.shape_cast %120 : vector<32x1xf32> to vector<32x1xf32>
    %128 = vector.broadcast %127 : vector<32x1xf32> to vector<32x16xf32>
    %129 = tpu.concatenate %110, %122, %124, %126, %128 in 0 : vector<32x16xf32>, vector<32x16xf32>, vector<32x16xf32>, vector<32x16xf32>, vector<32x16xf32> -> vector<160x16xf32>
    %cst_68 = arith.constant dense<0.000000e+00> : vector<64x256xf32>
    %130 = tpu.matmul %105, %103, %cst_68 {dimension_numbers = #tpu.dot_dimension_numbers<[1], [0], [0], [1], [0, 0, 1, 1], [], []>} : vector<64x32xf32>, vector<32x256xf32>, vector<64x256xf32> -> vector<64x256xf32>
    %cst_69 = arith.constant dense<0.000000e+00> : vector<96x16xf32>
    %131 = tpu.matmul %107, %129, %cst_69 {dimension_numbers = #tpu.dot_dimension_numbers<[1], [0], [0], [1], [0, 0, 1, 1], [], []>} : vector<96x160xf32>, vector<160x16xf32>, vector<96x16xf32> -> vector<96x16xf32>
    %132 = vector.extract_strided_slice %131 {offsets = [0, 0], sizes = [32, 16], strides = [1, 1]} : vector<96x16xf32> to vector<32x16xf32>
    %133 = vector.extract_strided_slice %109 {offsets = [0, 0], sizes = [32, 1], strides = [1, 1]} : vector<64x1xf32> to vector<32x1xf32>
    %134 = vector.broadcast %133 : vector<32x1xf32> to vector<32x16xf32>
    %135 = arith.addf %132, %134 : vector<32x16xf32>
    %136 = vector.extract_strided_slice %131 {offsets = [32, 0], sizes = [32, 16], strides = [1, 1]} : vector<96x16xf32> to vector<32x16xf32>
    %137 = vector.extract_strided_slice %109 {offsets = [32, 0], sizes = [32, 1], strides = [1, 1]} : vector<64x1xf32> to vector<32x1xf32>
    %138 = vector.broadcast %137 : vector<32x1xf32> to vector<32x16xf32>
    %139 = arith.addf %136, %138 : vector<32x16xf32>
    %140 = vector.extract_strided_slice %131 {offsets = [64, 0], sizes = [32, 16], strides = [1, 1]} : vector<96x16xf32> to vector<32x16xf32>
    %141 = vector.extract_strided_slice %130 {offsets = [0, 0], sizes = [32, 256], strides = [1, 1]} : vector<64x256xf32> to vector<32x256xf32>
    %142 = vector.extract_strided_slice %130 {offsets = [32, 0], sizes = [32, 256], strides = [1, 1]} : vector<64x256xf32> to vector<32x256xf32>
    %cst_70 = arith.constant dense<0.000000e+00> : vector<32x256xf32>
    %143 = tpu.matmul %142, %4, %cst_70 {dimension_numbers = #tpu.dot_dimension_numbers<[1], [0], [0], [1], [0, 0, 1, 1], [], []>} : vector<32x256xf32>, vector<256x256xf32>, vector<32x256xf32> -> vector<32x256xf32>
    %144 = arith.addf %141, %143 : vector<32x256xf32>
    %cst_71 = arith.constant dense<0.000000e+00> : vector<32x256xf32>
    %145 = tpu.matmul %135, %1, %cst_71 {dimension_numbers = #tpu.dot_dimension_numbers<[1], [0], [0], [1], [0, 0, 1, 1], [], []>} : vector<32x16xf32>, vector<16x256xf32>, vector<32x256xf32> -> vector<32x256xf32>
    %146 = arith.addf %144, %145 : vector<32x256xf32>
    %cst_72 = arith.constant dense<0.000000e+00> : vector<32x256xf32>
    %147 = tpu.matmul %139, %2, %cst_72 {dimension_numbers = #tpu.dot_dimension_numbers<[1], [0], [0], [1], [0, 0, 1, 1], [], []>} : vector<32x16xf32>, vector<16x256xf32>, vector<32x256xf32> -> vector<32x256xf32>
    %148 = arith.addf %146, %147 : vector<32x256xf32>
    %cst_73 = arith.constant dense<0.000000e+00> : vector<32x256xf32>
    %149 = tpu.matmul %140, %3, %cst_73 {dimension_numbers = #tpu.dot_dimension_numbers<[1], [0], [0], [1], [0, 0, 1, 1], [], []>} : vector<32x16xf32>, vector<16x256xf32>, vector<32x256xf32> -> vector<32x256xf32>
    %150 = arith.addf %148, %149 : vector<32x256xf32>
    %cst_74 = arith.constant 0.000000e+00 : f32
    %151 = vector.broadcast %cst_74 : f32 to vector<32x256xf32>
    %152 = arith.maximumf %150, %151 : vector<32x256xf32>
    %c2 = arith.constant 2 : index
    %c0_75 = arith.constant 0 : index
    %c0_76 = arith.constant 0 : index
    %153 = vector.load %arg7[%c2, %c0_75, %c0_76] : memref<3x64x32xf32, #tpu.memory_space<vmem>>, vector<1x64x32xf32>
    %154 = vector.shape_cast %153 : vector<1x64x32xf32> to vector<64x32xf32>
    %c2_77 = arith.constant 2 : index
    %c0_78 = arith.constant 0 : index
    %c0_79 = arith.constant 0 : index
    %155 = vector.load %arg8[%c2_77, %c0_78, %c0_79] : memref<3x96x160xf32, #tpu.memory_space<vmem>>, vector<1x96x160xf32>
    %156 = vector.shape_cast %155 : vector<1x96x160xf32> to vector<96x160xf32>
    %c2_80 = arith.constant 2 : index
    %c0_81 = arith.constant 0 : index
    %c0_82 = arith.constant 0 : index
    %157 = vector.load %arg9[%c2_80, %c0_81, %c0_82] : memref<3x64x1xf32, #tpu.memory_space<vmem>>, vector<1x64x1xf32>
    %158 = vector.shape_cast %157 : vector<1x64x1xf32> to vector<64x1xf32>
    %cst_83 = arith.constant dense<0.000000e+00> : vector<32x16xf32>
    %159 = tpu.matmul %152, %1, %cst_83 {dimension_numbers = #tpu.dot_dimension_numbers<[1], [1], [0], [0], [0, 0, 1, 0], [], []>} : vector<32x256xf32>, vector<16x256xf32>, vector<32x16xf32> -> vector<32x16xf32>
    %cst_84 = arith.constant dense<0.000000e+00> : vector<32x16xf32>
    %160 = tpu.matmul %152, %2, %cst_84 {dimension_numbers = #tpu.dot_dimension_numbers<[1], [1], [0], [0], [0, 0, 1, 0], [], []>} : vector<32x256xf32>, vector<16x256xf32>, vector<32x16xf32> -> vector<32x16xf32>
    %cst_85 = arith.constant dense<0.000000e+00> : vector<32x16xf32>
    %161 = tpu.matmul %152, %3, %cst_85 {dimension_numbers = #tpu.dot_dimension_numbers<[1], [1], [0], [0], [0, 0, 1, 0], [], []>} : vector<32x256xf32>, vector<16x256xf32>, vector<32x16xf32> -> vector<32x16xf32>
    %cst_86 = arith.constant dense<0.000000e+00> : vector<32xf32>
    %162 = vector.multi_reduction <add>, %159, %cst_86 [1] : vector<32x16xf32> to vector<32xf32>
    %163 = vector.shape_cast %162 : vector<32xf32> to vector<32x1xf32>
    %cst_87 = arith.constant 6.250000e-02 : f32
    %164 = vector.broadcast %cst_87 : f32 to vector<32x1xf32>
    %165 = arith.mulf %163, %164 : vector<32x1xf32>
    %cst_88 = arith.constant dense<0.000000e+00> : vector<32xf32>
    %166 = vector.multi_reduction <add>, %160, %cst_88 [1] : vector<32x16xf32> to vector<32xf32>
    %167 = vector.shape_cast %166 : vector<32xf32> to vector<32x1xf32>
    %cst_89 = arith.constant 3.906250e-03 : f32
    %168 = vector.broadcast %cst_89 : f32 to vector<32x1xf32>
    %169 = arith.mulf %167, %168 : vector<32x1xf32>
    %cst_90 = arith.constant 6.250000e-02 : f32
    %170 = vector.broadcast %cst_90 : f32 to vector<32x16xf32>
    %171 = arith.mulf %160, %170 : vector<32x16xf32>
    %cst_91 = arith.constant 6.250000e-02 : f32
    %172 = vector.broadcast %cst_91 : f32 to vector<32x16xf32>
    %173 = arith.mulf %161, %172 : vector<32x16xf32>
    %174 = vector.shape_cast %165 : vector<32x1xf32> to vector<32x1xf32>
    %175 = vector.broadcast %174 : vector<32x1xf32> to vector<32x16xf32>
    %176 = vector.shape_cast %169 : vector<32x1xf32> to vector<32x1xf32>
    %177 = vector.broadcast %176 : vector<32x1xf32> to vector<32x16xf32>
    %178 = tpu.concatenate %159, %171, %173, %175, %177 in 0 : vector<32x16xf32>, vector<32x16xf32>, vector<32x16xf32>, vector<32x16xf32>, vector<32x16xf32> -> vector<160x16xf32>
    %cst_92 = arith.constant dense<0.000000e+00> : vector<64x256xf32>
    %179 = tpu.matmul %154, %152, %cst_92 {dimension_numbers = #tpu.dot_dimension_numbers<[1], [0], [0], [1], [0, 0, 1, 1], [], []>} : vector<64x32xf32>, vector<32x256xf32>, vector<64x256xf32> -> vector<64x256xf32>
    %cst_93 = arith.constant dense<0.000000e+00> : vector<96x16xf32>
    %180 = tpu.matmul %156, %178, %cst_93 {dimension_numbers = #tpu.dot_dimension_numbers<[1], [0], [0], [1], [0, 0, 1, 1], [], []>} : vector<96x160xf32>, vector<160x16xf32>, vector<96x16xf32> -> vector<96x16xf32>
    %181 = vector.extract_strided_slice %180 {offsets = [0, 0], sizes = [32, 16], strides = [1, 1]} : vector<96x16xf32> to vector<32x16xf32>
    %182 = vector.extract_strided_slice %158 {offsets = [0, 0], sizes = [32, 1], strides = [1, 1]} : vector<64x1xf32> to vector<32x1xf32>
    %183 = vector.broadcast %182 : vector<32x1xf32> to vector<32x16xf32>
    %184 = arith.addf %181, %183 : vector<32x16xf32>
    %185 = vector.extract_strided_slice %180 {offsets = [32, 0], sizes = [32, 16], strides = [1, 1]} : vector<96x16xf32> to vector<32x16xf32>
    %186 = vector.extract_strided_slice %158 {offsets = [32, 0], sizes = [32, 1], strides = [1, 1]} : vector<64x1xf32> to vector<32x1xf32>
    %187 = vector.broadcast %186 : vector<32x1xf32> to vector<32x16xf32>
    %188 = arith.addf %185, %187 : vector<32x16xf32>
    %189 = vector.extract_strided_slice %180 {offsets = [64, 0], sizes = [32, 16], strides = [1, 1]} : vector<96x16xf32> to vector<32x16xf32>
    %190 = vector.extract_strided_slice %179 {offsets = [0, 0], sizes = [32, 256], strides = [1, 1]} : vector<64x256xf32> to vector<32x256xf32>
    %191 = vector.extract_strided_slice %179 {offsets = [32, 0], sizes = [32, 256], strides = [1, 1]} : vector<64x256xf32> to vector<32x256xf32>
    %cst_94 = arith.constant dense<0.000000e+00> : vector<32x256xf32>
    %192 = tpu.matmul %191, %4, %cst_94 {dimension_numbers = #tpu.dot_dimension_numbers<[1], [0], [0], [1], [0, 0, 1, 1], [], []>} : vector<32x256xf32>, vector<256x256xf32>, vector<32x256xf32> -> vector<32x256xf32>
    %193 = arith.addf %190, %192 : vector<32x256xf32>
    %cst_95 = arith.constant dense<0.000000e+00> : vector<32x256xf32>
    %194 = tpu.matmul %184, %1, %cst_95 {dimension_numbers = #tpu.dot_dimension_numbers<[1], [0], [0], [1], [0, 0, 1, 1], [], []>} : vector<32x16xf32>, vector<16x256xf32>, vector<32x256xf32> -> vector<32x256xf32>
    %195 = arith.addf %193, %194 : vector<32x256xf32>
    %cst_96 = arith.constant dense<0.000000e+00> : vector<32x256xf32>
    %196 = tpu.matmul %188, %2, %cst_96 {dimension_numbers = #tpu.dot_dimension_numbers<[1], [0], [0], [1], [0, 0, 1, 1], [], []>} : vector<32x16xf32>, vector<16x256xf32>, vector<32x256xf32> -> vector<32x256xf32>
    %197 = arith.addf %195, %196 : vector<32x256xf32>
    %cst_97 = arith.constant dense<0.000000e+00> : vector<32x256xf32>
    %198 = tpu.matmul %189, %3, %cst_97 {dimension_numbers = #tpu.dot_dimension_numbers<[1], [0], [0], [1], [0, 0, 1, 1], [], []>} : vector<32x16xf32>, vector<16x256xf32>, vector<32x256xf32> -> vector<32x256xf32>
    %199 = arith.addf %197, %198 : vector<32x256xf32>
    %cst_98 = arith.constant 0.000000e+00 : f32
    %200 = vector.broadcast %cst_98 : f32 to vector<32x256xf32>
    %201 = arith.maximumf %199, %200 : vector<32x256xf32>
    %cst_99 = arith.constant dense<0.000000e+00> : vector<32x16xf32>
    %202 = tpu.matmul %201, %1, %cst_99 {dimension_numbers = #tpu.dot_dimension_numbers<[1], [1], [0], [0], [0, 0, 1, 0], [], []>} : vector<32x256xf32>, vector<16x256xf32>, vector<32x16xf32> -> vector<32x16xf32>
    %cst_100 = arith.constant dense<0.000000e+00> : vector<32x16xf32>
    %203 = tpu.matmul %201, %2, %cst_100 {dimension_numbers = #tpu.dot_dimension_numbers<[1], [1], [0], [0], [0, 0, 1, 0], [], []>} : vector<32x256xf32>, vector<16x256xf32>, vector<32x16xf32> -> vector<32x16xf32>
    %cst_101 = arith.constant dense<0.000000e+00> : vector<32x16xf32>
    %204 = tpu.matmul %201, %3, %cst_101 {dimension_numbers = #tpu.dot_dimension_numbers<[1], [1], [0], [0], [0, 0, 1, 0], [], []>} : vector<32x256xf32>, vector<16x256xf32>, vector<32x16xf32> -> vector<32x16xf32>
    %cst_102 = arith.constant dense<0.000000e+00> : vector<32xf32>
    %205 = vector.multi_reduction <add>, %202, %cst_102 [1] : vector<32x16xf32> to vector<32xf32>
    %206 = vector.shape_cast %205 : vector<32xf32> to vector<32x1xf32>
    %cst_103 = arith.constant 6.250000e-02 : f32
    %207 = vector.broadcast %cst_103 : f32 to vector<32x1xf32>
    %208 = arith.mulf %206, %207 : vector<32x1xf32>
    %cst_104 = arith.constant dense<0.000000e+00> : vector<32xf32>
    %209 = vector.multi_reduction <add>, %203, %cst_104 [1] : vector<32x16xf32> to vector<32xf32>
    %210 = vector.shape_cast %209 : vector<32xf32> to vector<32x1xf32>
    %cst_105 = arith.constant 3.906250e-03 : f32
    %211 = vector.broadcast %cst_105 : f32 to vector<32x1xf32>
    %212 = arith.mulf %210, %211 : vector<32x1xf32>
    %cst_106 = arith.constant 6.250000e-02 : f32
    %213 = vector.broadcast %cst_106 : f32 to vector<32x16xf32>
    %214 = arith.mulf %203, %213 : vector<32x16xf32>
    %cst_107 = arith.constant 6.250000e-02 : f32
    %215 = vector.broadcast %cst_107 : f32 to vector<32x16xf32>
    %216 = arith.mulf %204, %215 : vector<32x16xf32>
    %217 = vector.shape_cast %208 : vector<32x1xf32> to vector<32x1xf32>
    %218 = vector.broadcast %217 : vector<32x1xf32> to vector<32x16xf32>
    %219 = vector.shape_cast %212 : vector<32x1xf32> to vector<32x1xf32>
    %220 = vector.broadcast %219 : vector<32x1xf32> to vector<32x16xf32>
    %221 = tpu.concatenate %202, %214, %216, %218, %220 in 0 : vector<32x16xf32>, vector<32x16xf32>, vector<32x16xf32>, vector<32x16xf32>, vector<32x16xf32> -> vector<160x16xf32>
    %c0_108 = arith.constant 0 : index
    %c0_109 = arith.constant 0 : index
    %222 = vector.load %arg10[%c0_108, %c0_109] : memref<32x160xf32, #tpu.memory_space<vmem>>, vector<32x160xf32>
    %cst_110 = arith.constant dense<0.000000e+00> : vector<32x16xf32>
    %223 = tpu.matmul %222, %221, %cst_110 {dimension_numbers = #tpu.dot_dimension_numbers<[1], [0], [0], [1], [0, 0, 1, 1], [], []>} : vector<32x160xf32>, vector<160x16xf32>, vector<32x16xf32> -> vector<32x16xf32>
    %c0_111 = arith.constant 0 : index
    %c0_112 = arith.constant 0 : index
    %224 = vector.load %arg11[%c0_111, %c0_112] : memref<32x1xf32, #tpu.memory_space<vmem>>, vector<32x1xf32>
    %225 = vector.broadcast %224 : vector<32x1xf32> to vector<32x16xf32>
    %226 = arith.addf %223, %225 : vector<32x16xf32>
    %c0_113 = arith.constant 0 : index
    %c0_114 = arith.constant 0 : index
    %c0_115 = arith.constant 0 : index
    %227 = vector.load %arg12[%c0_113, %c0_114, %c0_115] : memref<1x32x16xf32, #tpu.memory_space<vmem>>, vector<1x32x16xf32>
    %228 = vector.shape_cast %227 : vector<1x32x16xf32> to vector<32x16xf32>
    %229 = vector.shape_cast %226 : vector<32x16xf32> to vector<1x32x16xf32>
    tpu.vector_store %arg12[%c0_113, %c0_114, %c0_115], %229 {strides = array<i32>} : memref<1x32x16xf32, #tpu.memory_space<vmem>>, vector<1x32x16xf32>,
    return
  }
  func.func @transform_0(%arg0: i32) -> (i32, i32, i32) {
    %c0_i32 = arith.constant 0 : i32
    %c0_i32_0 = arith.constant 0 : i32
    %c0_i32_1 = arith.constant 0 : i32
    return %arg0, %c0_i32, %c0_i32_0 : i32, i32, i32
  }
  func.func @transform_1(%arg0: i32) -> (i32, i32) {
    %c0_i32 = arith.constant 0 : i32
    %c0_i32_0 = arith.constant 0 : i32
    %c0_i32_1 = arith.constant 0 : i32
    return %c0_i32, %c0_i32_0 : i32, i32
  }
  func.func @transform_2(%arg0: i32) -> (i32, i32) {
    %c0_i32 = arith.constant 0 : i32
    %c0_i32_0 = arith.constant 0 : i32
    %c0_i32_1 = arith.constant 0 : i32
    return %c0_i32, %c0_i32_0 : i32, i32
  }
  func.func @transform_3(%arg0: i32) -> (i32, i32) {
    %c0_i32 = arith.constant 0 : i32
    %c0_i32_0 = arith.constant 0 : i32
    %c0_i32_1 = arith.constant 0 : i32
    return %c0_i32, %c0_i32_0 : i32, i32
  }
  func.func @transform_4(%arg0: i32) -> (i32, i32) {
    %c0_i32 = arith.constant 0 : i32
    %c0_i32_0 = arith.constant 0 : i32
    %c0_i32_1 = arith.constant 0 : i32
    return %c0_i32, %c0_i32_0 : i32, i32
  }
  func.func @transform_5(%arg0: i32) -> (i32, i32) {
    %c0_i32 = arith.constant 0 : i32
    %c0_i32_0 = arith.constant 0 : i32
    %c0_i32_1 = arith.constant 0 : i32
    return %c0_i32, %c0_i32_0 : i32, i32
  }
  func.func @transform_6(%arg0: i32) -> (i32, i32, i32) {
    %c0_i32 = arith.constant 0 : i32
    %c0_i32_0 = arith.constant 0 : i32
    %c0_i32_1 = arith.constant 0 : i32
    %c0_i32_2 = arith.constant 0 : i32
    return %c0_i32, %c0_i32_0, %c0_i32_1 : i32, i32, i32
  }
  func.func @transform_7(%arg0: i32) -> (i32, i32, i32) {
    %c0_i32 = arith.constant 0 : i32
    %c0_i32_0 = arith.constant 0 : i32
    %c0_i32_1 = arith.constant 0 : i32
    %c0_i32_2 = arith.constant 0 : i32
    return %c0_i32, %c0_i32_0, %c0_i32_1 : i32, i32, i32
  }
  func.func @transform_8(%arg0: i32) -> (i32, i32, i32) {
    %c0_i32 = arith.constant 0 : i32
    %c0_i32_0 = arith.constant 0 : i32
    %c0_i32_1 = arith.constant 0 : i32
    %c0_i32_2 = arith.constant 0 : i32
    return %c0_i32, %c0_i32_0, %c0_i32_1 : i32, i32, i32
  }
  func.func @transform_9(%arg0: i32) -> (i32, i32) {
    %c0_i32 = arith.constant 0 : i32
    %c0_i32_0 = arith.constant 0 : i32
    %c0_i32_1 = arith.constant 0 : i32
    return %c0_i32, %c0_i32_0 : i32, i32
  }
  func.func @transform_10(%arg0: i32) -> (i32, i32) {
    %c0_i32 = arith.constant 0 : i32
    %c0_i32_0 = arith.constant 0 : i32
    %c0_i32_1 = arith.constant 0 : i32
    return %c0_i32, %c0_i32_0 : i32, i32
  }
  func.func @transform_11(%arg0: i32) -> (i32, i32, i32) {
    %c0_i32 = arith.constant 0 : i32
    %c0_i32_0 = arith.constant 0 : i32
    %c0_i32_1 = arith.constant 0 : i32
    return %arg0, %c0_i32, %c0_i32_0 : i32, i32, i32
  }
}

</mosaic_0001>

<llo_original>
// kernel: tpu_custom_call.1
$region0: #{tpu_custom_call.1}
  #allocation0 [shape = 'u32[]', space=smem, size = 0x4, offset = 0x4, fixed_abs, tag = 'smem constant byte address 0x4 - core index']
  #allocation1 [shape = 'u32[72,128]{1,0:T(1,128)}', space=vmem, size = 0x9000, scoped, tag = 'internal scratch']
  %s0 = inlined_call_operand.vmem [shape: f32[2,1,256], index: 0, kind: input, shape index: {}]
  %s1 = inlined_call_operand.vmem [shape: f32[48,256], index: 1, kind: input, shape index: {}]
  %s2 = inlined_call_operand.vmem [shape: f32[256,256], index: 2, kind: input, shape index: {}]
  %s3 = inlined_call_operand.vmem [shape: f32[64,1], index: 3, kind: input, shape index: {}]
  %s4 = inlined_call_operand.vmem [shape: f32[96,5], index: 4, kind: input, shape index: {}]
  %s5 = inlined_call_operand.vmem [shape: f32[64,1], index: 5, kind: input, shape index: {}]
  %s6 = inlined_call_operand.vmem [shape: f32[3,64,32], index: 6, kind: input, shape index: {}]
  %s7 = inlined_call_operand.vmem [shape: f32[3,96,160], index: 7, kind: input, shape index: {}]
  %s8 = inlined_call_operand.vmem [shape: f32[3,64,1], index: 8, kind: input, shape index: {}]
  %s9 = inlined_call_operand.vmem [shape: f32[32,160], index: 9, kind: input, shape index: {}]
  %s10 = inlined_call_operand.vmem [shape: f32[32,1], index: 10, kind: input, shape index: {}]
  %s11 = inlined_call_operand.vmem [shape: f32[2,32,16], index: 11, kind: output, shape index: {}]
  %s12 = sld [smem:[#allocation0]]
  $region77: #{tpu_custom_call.1} parent=0
    _
  %s14 = ssub.s32 1, %s12
  %s15 = scalar_select 0, %s14, %s12
  loop: start=0, step=1, limit=4
  $region2: #{tpu_custom_call.1} parent=0 // loop_pre_header
    _
  $region3: #{tpu_custom_call.1} parent=0 // loop_header
    %s17 = sphi 0, %s21
    %p18 = scmp.ge.s32.totalorder %s17, 4
    %s27 = sphi 0, %s29
    %s30 = sphi 0, %s27
    %s31 = sphi 0, %s30
    %s47 = sphi 0, %s31
    %s51 = sphi 0, %s51
    %s53 = sphi 0, %s51
    %s54 = sphi 0, %s53
    %s68 = sphi 0, %s54
    %s72 = sphi 0, %s72
    %s74 = sphi 0, %s72
    %s75 = sphi 0, %s74
    %s89 = sphi 0, %s75
    %s93 = sphi 0, %s93
    %s95 = sphi 0, %s93
    %s96 = sphi 0, %s95
    %s110 = sphi 0, %s96
    %s114 = sphi 0, %s114
    %s116 = sphi 0, %s114
    %s117 = sphi 0, %s116
    %s131 = sphi 0, %s117
    %s135 = sphi 0, %s135
    %s137 = sphi 0, %s135
    %s138 = sphi 0, %s137
    %s152 = sphi 0, %s138
    %s156 = sphi 0, %s156
    %s158 = sphi 0, %s156
    %s159 = sphi 0, %s158
    %s173 = sphi 0, %s159
    %s177 = sphi 0, %s177
    %s179 = sphi 0, %s177
    %s180 = sphi 0, %s179
    %s194 = sphi 0, %s180
    %s198 = sphi 0, %s198
    %s200 = sphi 0, %s198
    %s201 = sphi 0, %s200
    %s215 = sphi 0, %s201
    %s219 = sphi 0, %s219
    %s221 = sphi 0, %s219
    %s222 = sphi 0, %s221
    %s236 = sphi 0, %s222
    %s240 = sphi 0, %s240
    %s242 = sphi 0, %s240
    %s243 = sphi 0, %s242
    %s257 = sphi 0, %s243
    %s263 = sphi 0, %s265
    %s266 = sphi 0, %s263
    %s267 = sphi 0, %s266
    %s283 = sphi 0, %s267
  $region4: #{tpu_custom_call.1} parent=0 // loop_header_branch
    %20 = sbr.rel (%p18) target = $region8
  $region5: #{tpu_custom_call.1} parent=0 // loop_body
    %s22 = ssub.s32 %s17, 1
    %s23 = ssub.s32 %s17, 2
    %s24 = sadd.s32 %s17, 1
    %s25 = ssub.s32 %s17, %s24
    %p26 = scmp.eq.s32.totalorder %s25, 0
    %s28 = sadd.s32 %s27, 1
    %s29 = scalar_select %p26, %s27, %s28
    %p32 = pneg %p26
    %p33 = scmp.eq.s32.totalorder %s17, 1
    %p34 = por %p32, %p33
    %p35 = scmp.ne.s32.totalorder %s27, %s30
    %p36 = scmp.eq.s32.totalorder %s17, 0
    %p37 = por %p35, %p36
    %p38 = scmp.ne.s32.totalorder %s27, %s30
    %p39 = scmp.eq.s32.totalorder %s22, 1
    %p40 = por %p38, %p39
    %p41 = scmp.ne.s32.totalorder %s30, %s31
    %p42 = scmp.eq.s32.totalorder %s22, 0
    %p43 = por %p41, %p42
    %p44 = scmp.ne.s32.totalorder %s30, %s31
    %p45 = scmp.eq.s32.totalorder %s23, 1
    %p46 = por %p44, %p45
    %p48 = scmp.ne.s32.totalorder %s31, %s47
    %p49 = scmp.eq.s32.totalorder %s23, 0
    %p50 = por %p48, %p49
    %s52 = sadd.s32 %s51, 1
    %p55 = scmp.eq.s32.totalorder %s17, 1
    %p56 = scmp.ne.s32.totalorder %s51, %s53
    %p57 = scmp.eq.s32.totalorder %s17, 0
    %p58 = por %p56, %p57
    %p59 = scmp.ne.s32.totalorder %s51, %s53
    %p60 = scmp.eq.s32.totalorder %s22, 1
    %p61 = por %p59, %p60
    %p62 = scmp.ne.s32.totalorder %s53, %s54
    %p63 = scmp.eq.s32.totalorder %s22, 0
    %p64 = por %p62, %p63
    %p65 = scmp.ne.s32.totalorder %s53, %s54
    %p66 = scmp.eq.s32.totalorder %s23, 1
    %p67 = por %p65, %p66
    %p69 = scmp.ne.s32.totalorder %s54, %s68
    %p70 = scmp.eq.s32.totalorder %s23, 0
    %p71 = por %p69, %p70
    %s73 = sadd.s32 %s72, 1
    %p76 = scmp.eq.s32.totalorder %s17, 1
    %p77 = scmp.ne.s32.totalorder %s72, %s74
    %p78 = scmp.eq.s32.totalorder %s17, 0
    %p79 = por %p77, %p78
    %p80 = scmp.ne.s32.totalorder %s72, %s74
    %p81 = scmp.eq.s32.totalorder %s22, 1
    %p82 = por %p80, %p81
    %p83 = scmp.ne.s32.totalorder %s74, %s75
    %p84 = scmp.eq.s32.totalorder %s22, 0
    %p85 = por %p83, %p84
    %p86 = scmp.ne.s32.totalorder %s74, %s75
    %p87 = scmp.eq.s32.totalorder %s23, 1
    %p88 = por %p86, %p87
    %p90 = scmp.ne.s32.totalorder %s75, %s89
    %p91 = scmp.eq.s32.totalorder %s23, 0
    %p92 = por %p90, %p91
    %s94 = sadd.s32 %s93, 1
    %p97 = scmp.eq.s32.totalorder %s17, 1
    %p98 = scmp.ne.s32.totalorder %s93, %s95
    %p99 = scmp.eq.s32.totalorder %s17, 0
    %p100 = por %p98, %p99
    %p101 = scmp.ne.s32.totalorder %s93, %s95
    %p102 = scmp.eq.s32.totalorder %s22, 1
    %p103 = por %p101, %p102
    %p104 = scmp.ne.s32.totalorder %s95, %s96
    %p105 = scmp.eq.s32.totalorder %s22, 0
    %p106 = por %p104, %p105
    %p107 = scmp.ne.s32.totalorder %s95, %s96
    %p108 = scmp.eq.s32.totalorder %s23, 1
    %p109 = por %p107, %p108
    %p111 = scmp.ne.s32.totalorder %s96, %s110
    %p112 = scmp.eq.s32.totalorder %s23, 0
    %p113 = por %p111, %p112
    %s115 = sadd.s32 %s114, 1
    %p118 = scmp.eq.s32.totalorder %s17, 1
    %p119 = scmp.ne.s32.totalorder %s114, %s116
    %p120 = scmp.eq.s32.totalorder %s17, 0
    %p121 = por %p119, %p120
    %p122 = scmp.ne.s32.totalorder %s114, %s116
    %p123 = scmp.eq.s32.totalorder %s22, 1
    %p124 = por %p122, %p123
    %p125 = scmp.ne.s32.totalorder %s116, %s117
    %p126 = scmp.eq.s32.totalorder %s22, 0
    %p127 = por %p125, %p126
    %p128 = scmp.ne.s32.totalorder %s116, %s117
    %p129 = scmp.eq.s32.totalorder %s23, 1
    %p130 = por %p128, %p129
    %p132 = scmp.ne.s32.totalorder %s117, %s131
    %p133 = scmp.eq.s32.totalorder %s23, 0
    %p134 = por %p132, %p133
    %s136 = sadd.s32 %s135, 1
    %p139 = scmp.eq.s32.totalorder %s17, 1
    %p140 = scmp.ne.s32.totalorder %s135, %s137
    %p141 = scmp.eq.s32.totalorder %s17, 0
    %p142 = por %p140, %p141
    %p143 = scmp.ne.s32.totalorder %s135, %s137
    %p144 = scmp.eq.s32.totalorder %s22, 1
    %p145 = por %p143, %p144
    %p146 = scmp.ne.s32.totalorder %s137, %s138
    %p147 = scmp.eq.s32.totalorder %s22, 0
    %p148 = por %p146, %p147
    %p149 = scmp.ne.s32.totalorder %s137, %s138
    %p150 = scmp.eq.s32.totalorder %s23, 1
    %p151 = por %p149, %p150
    %p153 = scmp.ne.s32.totalorder %s138, %s152
    %p154 = scmp.eq.s32.totalorder %s23, 0
    %p155 = por %p153, %p154
    %s157 = sadd.s32 %s156, 1
    %p160 = scmp.eq.s32.totalorder %s17, 1
    %p161 = scmp.ne.s32.totalorder %s156, %s158
    %p162 = scmp.eq.s32.totalorder %s17, 0
    %p163 = por %p161, %p162
    %p164 = scmp.ne.s32.totalorder %s156, %s158
    %p165 = scmp.eq.s32.totalorder %s22, 1
    %p166 = por %p164, %p165
    %p167 = scmp.ne.s32.totalorder %s158, %s159
    %p168 = scmp.eq.s32.totalorder %s22, 0
    %p169 = por %p167, %p168
    %p170 = scmp.ne.s32.totalorder %s158, %s159
    %p171 = scmp.eq.s32.totalorder %s23, 1
    %p172 = por %p170, %p171
    %p174 = scmp.ne.s32.totalorder %s159, %s173
    %p175 = scmp.eq.s32.totalorder %s23, 0
    %p176 = por %p174, %p175
    %s178 = sadd.s32 %s177, 1
    %p181 = scmp.eq.s32.totalorder %s17, 1
    %p182 = scmp.ne.s32.totalorder %s177, %s179
    %p183 = scmp.eq.s32.totalorder %s17, 0
    %p184 = por %p182, %p183
    %p185 = scmp.ne.s32.totalorder %s177, %s179
    %p186 = scmp.eq.s32.totalorder %s22, 1
    %p187 = por %p185, %p186
    %p188 = scmp.ne.s32.totalorder %s179, %s180
    %p189 = scmp.eq.s32.totalorder %s22, 0
    %p190 = por %p188, %p189
    %p191 = scmp.ne.s32.totalorder %s179, %s180
    %p192 = scmp.eq.s32.totalorder %s23, 1
    %p193 = por %p191, %p192
    %p195 = scmp.ne.s32.totalorder %s180, %s194
    %p196 = scmp.eq.s32.totalorder %s23, 0
    %p197 = por %p195, %p196
    %s199 = sadd.s32 %s198, 1
    %p202 = scmp.eq.s32.totalorder %s17, 1
    %p203 = scmp.ne.s32.totalorder %s198, %s200
    %p204 = scmp.eq.s32.totalorder %s17, 0
    %p205 = por %p203, %p204
    %p206 = scmp.ne.s32.totalorder %s198, %s200
    %p207 = scmp.eq.s32.totalorder %s22, 1
    %p208 = por %p206, %p207
    %p209 = scmp.ne.s32.totalorder %s200, %s201
    %p210 = scmp.eq.s32.totalorder %s22, 0
    %p211 = por %p209, %p210
    %p212 = scmp.ne.s32.totalorder %s200, %s201
    %p213 = scmp.eq.s32.totalorder %s23, 1
    %p214 = por %p212, %p213
    %p216 = scmp.ne.s32.totalorder %s201, %s215
    %p217 = scmp.eq.s32.totalorder %s23, 0
    %p218 = por %p216, %p217
    %s220 = sadd.s32 %s219, 1
    %p223 = scmp.eq.s32.totalorder %s17, 1
    %p224 = scmp.ne.s32.totalorder %s219, %s221
    %p225 = scmp.eq.s32.totalorder %s17, 0
    %p226 = por %p224, %p225
    %p227 = scmp.ne.s32.totalorder %s219, %s221
    %p228 = scmp.eq.s32.totalorder %s22, 1
    %p229 = por %p227, %p228
    %p230 = scmp.ne.s32.totalorder %s221, %s222
    %p231 = scmp.eq.s32.totalorder %s22, 0
    %p232 = por %p230, %p231
    %p233 = scmp.ne.s32.totalorder %s221, %s222
    %p234 = scmp.eq.s32.totalorder %s23, 1
    %p235 = por %p233, %p234
    %p237 = scmp.ne.s32.totalorder %s222, %s236
    %p238 = scmp.eq.s32.totalorder %s23, 0
    %p239 = por %p237, %p238
    %s241 = sadd.s32 %s240, 1
    %p244 = scmp.eq.s32.totalorder %s17, 1
    %p245 = scmp.ne.s32.totalorder %s240, %s242
    %p246 = scmp.eq.s32.totalorder %s17, 0
    %p247 = por %p245, %p246
    %p248 = scmp.ne.s32.totalorder %s240, %s242
    %p249 = scmp.eq.s32.totalorder %s22, 1
    %p250 = por %p248, %p249
    %p251 = scmp.ne.s32.totalorder %s242, %s243
    %p252 = scmp.eq.s32.totalorder %s22, 0
    %p253 = por %p251, %p252
    %p254 = scmp.ne.s32.totalorder %s242, %s243
    %p255 = scmp.eq.s32.totalorder %s23, 1
    %p256 = por %p254, %p255
    %p258 = scmp.ne.s32.totalorder %s243, %s257
    %p259 = scmp.eq.s32.totalorder %s23, 0
    %p260 = por %p258, %p259
    %s261 = ssub.s32 %s17, %s24
    %p262 = scmp.eq.s32.totalorder %s261, 0
    %s264 = sadd.s32 %s263, 1
    %s265 = scalar_select %p262, %s263, %s264
    %p268 = pneg %p262
    %p269 = scmp.eq.s32.totalorder %s17, 1
    %p270 = por %p268, %p269
    %p271 = scmp.ne.s32.totalorder %s263, %s266
    %p272 = scmp.eq.s32.totalorder %s17, 0
    %p273 = por %p271, %p272
    %p274 = scmp.ne.s32.totalorder %s263, %s266
    %p275 = scmp.eq.s32.totalorder %s22, 1
    %p276 = por %p274, %p275
    %p277 = scmp.ne.s32.totalorder %s266, %s267
    %p278 = scmp.eq.s32.totalorder %s22, 0
    %p279 = por %p277, %p278
    %p280 = scmp.ne.s32.totalorder %s266, %s267
    %p281 = scmp.eq.s32.totalorder %s23, 1
    %p282 = por %p280, %p281
    %p284 = scmp.ne.s32.totalorder %s267, %s283
    %p285 = scmp.eq.s32.totalorder %s23, 0
    %p286 = por %p284, %p285
    %p287 = scmp.le.s32.totalorder 1, %s17
    %p288 = scmp.lt.s32.totalorder %s17, 3
    %p289 = pnand %p287, %p288
    %p290 = pneg %p289
    // Predicated region
    $region9: #{tpu_custom_call.1} parent=5 // pred_check
      _
    $region10: #{tpu_custom_call.1} parent=5 // pred_check_branch
      %292 = sbr.rel (%p289) target = $region12
    $region11: #{tpu_custom_call.1} parent=5 // pred_region
      %s293 = ssub.s32 %s17, 1
      // Predicated region
      $region13: #{tpu_custom_call.1} parent=11 // pred_check
        %p294 = pneg %p64
      $region14: #{tpu_custom_call.1} parent=11 // pred_check_branch
        %296 = sbr.rel (%p294) target = $region16
      $region15: #{tpu_custom_call.1} parent=11 // pred_region
        _
      $region16: #{tpu_custom_call.1} parent=11 // pred_fallthru
        _
      // Predicated region
      $region17: #{tpu_custom_call.1} parent=11 // pred_check
        %p297 = pneg %p85
      $region18: #{tpu_custom_call.1} parent=11 // pred_check_branch
        %299 = sbr.rel (%p297) target = $region20
      $region19: #{tpu_custom_call.1} parent=11 // pred_region
        _
      $region20: #{tpu_custom_call.1} parent=11 // pred_fallthru
        _
      // Predicated region
      $region21: #{tpu_custom_call.1} parent=11 // pred_check
        %p300 = pneg %p106
      $region22: #{tpu_custom_call.1} parent=11 // pred_check_branch
        %302 = sbr.rel (%p300) target = $region24
      $region23: #{tpu_custom_call.1} parent=11 // pred_region
        _
      $region24: #{tpu_custom_call.1} parent=11 // pred_fallthru
        _
      // Predicated region
      $region25: #{tpu_custom_call.1} parent=11 // pred_check
        %p303 = pneg %p127
      $region26: #{tpu_custom_call.1} parent=11 // pred_check_branch
        %305 = sbr.rel (%p303) target = $region28
      $region27: #{tpu_custom_call.1} parent=11 // pred_region
        _
      $region28: #{tpu_custom_call.1} parent=11 // pred_fallthru
        _
      // Predicated region
      $region29: #{tpu_custom_call.1} parent=11 // pred_check
        %p306 = pneg %p148
      $region30: #{tpu_custom_call.1} parent=11 // pred_check_branch
        %308 = sbr.rel (%p306) target = $region32
      $region31: #{tpu_custom_call.1} parent=11 // pred_region
        _
      $region32: #{tpu_custom_call.1} parent=11 // pred_fallthru
        _
      // Predicated region
      $region33: #{tpu_custom_call.1} parent=11 // pred_check
        %p309 = pneg %p169
      $region34: #{tpu_custom_call.1} parent=11 // pred_check_branch
        %311 = sbr.rel (%p309) target = $region36
      $region35: #{tpu_custom_call.1} parent=11 // pred_region
        _
      $region36: #{tpu_custom_call.1} parent=11 // pred_fallthru
        _
      // Predicated region
      $region37: #{tpu_custom_call.1} parent=11 // pred_check
        %p312 = pneg %p190
      $region38: #{tpu_custom_call.1} parent=11 // pred_check_branch
        %314 = sbr.rel (%p312) target = $region40
      $region39: #{tpu_custom_call.1} parent=11 // pred_region
        _
      $region40: #{tpu_custom_call.1} parent=11 // pred_fallthru
        _
      // Predicated region
      $region41: #{tpu_custom_call.1} parent=11 // pred_check
        %p315 = pneg %p211
      $region42: #{tpu_custom_call.1} parent=11 // pred_check_branch
        %317 = sbr.rel (%p315) target = $region44
      $region43: #{tpu_custom_call.1} parent=11 // pred_region
        _
      $region44: #{tpu_custom_call.1} parent=11 // pred_fallthru
        _
      // Predicated region
      $region45: #{tpu_custom_call.1} parent=11 // pred_check
        %p318 = pneg %p232
      $region46: #{tpu_custom_call.1} parent=11 // pred_check_branch
        %320 = sbr.rel (%p318) target = $region48
      $region47: #{tpu_custom_call.1} parent=11 // pred_region
        _
      $region48: #{tpu_custom_call.1} parent=11 // pred_fallthru
        _
      // Predicated region
      $region49: #{tpu_custom_call.1} parent=11 // pred_check
        %p321 = pneg %p253
      $region50: #{tpu_custom_call.1} parent=11 // pred_check_branch
        %323 = sbr.rel (%p321) target = $region52
      $region51: #{tpu_custom_call.1} parent=11 // pred_region
        _
      $region52: #{tpu_custom_call.1} parent=11 // pred_fallthru
        _
    $region12: #{tpu_custom_call.1} parent=5 // pred_fallthru
      _
    %p324 = scmp.lt.s32.totalorder %s17, 2
    // Predicated region
    $region53: #{tpu_custom_call.1} parent=5 // pred_check
      %p325 = pneg %p324
    $region54: #{tpu_custom_call.1} parent=5 // pred_check_branch
      %327 = sbr.rel (%p325) target = $region56
    $region55: #{tpu_custom_call.1} parent=5 // pred_region
      // Predicated region
      $region57: #{tpu_custom_call.1} parent=55 // pred_check
        %p328 = pneg %p37
      $region58: #{tpu_custom_call.1} parent=55 // pred_check_branch
        %330 = sbr.rel (%p328) target = $region60
      $region59: #{tpu_custom_call.1} parent=55 // pred_region
        %p331 = scmp.lt.s32.totalorder %s17, 1
        %s332 = scalar_select %p331, %s17, 1
        %s333 = smul.addr %s332, 2
        %s334 = scalar_lea.vmem %s0, %s333
      $region60: #{tpu_custom_call.1} parent=55 // pred_fallthru
        _
    $region56: #{tpu_custom_call.1} parent=5 // pred_fallthru
      _
    %p335 = scmp.le.s32.totalorder 1, %s17
    %p336 = scmp.lt.s32.totalorder %s17, 3
    %p337 = pnand %p335, %p336
    %p338 = pneg %p337
    // Predicated region
    $region61: #{tpu_custom_call.1} parent=5 // pred_check
      _
    $region62: #{tpu_custom_call.1} parent=5 // pred_check_branch
      %340 = sbr.rel (%p337) target = $region64
    $region63: #{tpu_custom_call.1} parent=5 // pred_region
      %s341 = ssub.s32 %s17, 1
      %p342 = scmp.lt.s32.totalorder %s22, 1
      %s343 = scalar_select %p342, %s22, 1
      %s344 = smul.addr %s343, 2
      %s345 = scalar_lea.vmem %s0, %s344
      %p346 = pneg %p43
      %p347 = pneg %p40
      %p348 = pneg %p64
      %p349 = pneg %p61
      %p350 = pneg %p85
      %p351 = pneg %p82
      %p352 = pneg %p106
      %p353 = pneg %p103
      %p354 = pneg %p127
      %p355 = pneg %p124
      %p356 = pneg %p148
      %p357 = pneg %p145
      %p358 = pneg %p169
      %p359 = pneg %p166
      %p360 = pneg %p190
      %p361 = pneg %p187
      %p362 = pneg %p211
      %p363 = pneg %p208
      %p364 = pneg %p232
      %p365 = pneg %p229
      %p366 = pneg %p253
      %p367 = pneg %p250
      %p368 = pneg %p279
      %p369 = pneg %p276
      %p370 = scmp.lt.s32.totalorder %s22, 1
      %s371 = scalar_select %p370, %s22, 1
      %s372 = smul.addr %s371, 4
      %s373 = smul.addr %s372, 8
      %s374 = scalar_lea.vmem %s11, %s373
      %p375 = scmp.lt.s32.totalorder %s22, 1
      %s376 = scalar_select %p375, %s22, 1
      %s377 = smul.addr %s376, 2
      %s378 = scalar_lea.vmem %s0, %s377
      %p379 = scmp.lt.s32.totalorder %s22, 1
      %s380 = scalar_select %p379, %s22, 1
      %s381 = smul.addr %s380, 4
      %s382 = smul.addr %s381, 8
      %s383 = scalar_lea.vmem %s11, %s382
      %v384 = vld [vmem:[%s1] sm:$0xff]
      %v385 = vld [vmem:[%s1 + $0x8] sm:$0xff]
      %v386 = vld [vmem:[%s1 + $0x10] sm:$0xff]
      %v387 = vld [vmem:[%s1 + $0x18] sm:$0xff]
      %v388 = vld [vmem:[%s1 + $0x20] sm:$0xff]
      %v389 = vld [vmem:[%s1 + $0x28] sm:$0xff]
      %v390 = vld [vmem:[%s1 + $0x30] sm:$0xff]
      %v391 = vld [vmem:[%s1 + $0x38] sm:$0xff]
      %v392 = vld [vmem:[%s1 + $0x40] sm:$0xff]
      %v393 = vld [vmem:[%s1 + $0x48] sm:$0xff]
      %v394 = vld [vmem:[%s1 + $0x50] sm:$0xff]
      %v395 = vld [vmem:[%s1 + $0x58] sm:$0xff]
      %v396 = vld [vmem:[%s2] sm:$0xff]
      %v397 = vld [vmem:[%s2 + $0x8] sm:$0xff]
      %v398 = vld [vmem:[%s2 + $0x10] sm:$0xff]
      %v399 = vld [vmem:[%s2 + $0x18] sm:$0xff]
      %v400 = vld [vmem:[%s2 + $0x20] sm:$0xff]
      %v401 = vld [vmem:[%s2 + $0x28] sm:$0xff]
      %v402 = vld [vmem:[%s2 + $0x30] sm:$0xff]
      %v403 = vld [vmem:[%s2 + $0x38] sm:$0xff]
      %v404 = vld [vmem:[%s2 + $0x40] sm:$0xff]
      %v405 = vld [vmem:[%s2 + $0x48] sm:$0xff]
      %v406 = vld [vmem:[%s2 + $0x50] sm:$0xff]
      %v407 = vld [vmem:[%s2 + $0x58] sm:$0xff]
      %v408 = vld [vmem:[%s2 + $0x60] sm:$0xff]
      %v409 = vld [vmem:[%s2 + $0x68] sm:$0xff]
      %v410 = vld [vmem:[%s2 + $0x70] sm:$0xff]
      %v411 = vld [vmem:[%s2 + $0x78] sm:$0xff]
      %v412 = vld [vmem:[%s2 + $0x80] sm:$0xff]
      %v413 = vld [vmem:[%s2 + $0x88] sm:$0xff]
      %v414 = vld [vmem:[%s2 + $0x90] sm:$0xff]
      %v415 = vld [vmem:[%s2 + $0x98] sm:$0xff]
      %v416 = vld [vmem:[%s2 + $0xa0] sm:$0xff]
      %v417 = vld [vmem:[%s2 + $0xa8] sm:$0xff]
      %v418 = vld [vmem:[%s2 + $0xb0] sm:$0xff]
      %v419 = vld [vmem:[%s2 + $0xb8] sm:$0xff]
      %v420 = vld [vmem:[%s2 + $0xc0] sm:$0xff]
      %v421 = vld [vmem:[%s2 + $0xc8] sm:$0xff]
      %v422 = vld [vmem:[%s2 + $0xd0] sm:$0xff]
      %v423 = vld [vmem:[%s2 + $0xd8] sm:$0xff]
      %v424 = vld [vmem:[%s2 + $0xe0] sm:$0xff]
      %v425 = vld [vmem:[%s2 + $0xe8] sm:$0xff]
      %v426 = vld [vmem:[%s2 + $0xf0] sm:$0xff]
      %v427 = vld [vmem:[%s2 + $0xf8] sm:$0xff]
      %v428 = vld [vmem:[%s2 + $0x100] sm:$0xff]
      %v429 = vld [vmem:[%s2 + $0x108] sm:$0xff]
      %v430 = vld [vmem:[%s2 + $0x110] sm:$0xff]
      %v431 = vld [vmem:[%s2 + $0x118] sm:$0xff]
      %v432 = vld [vmem:[%s2 + $0x120] sm:$0xff]
      %v433 = vld [vmem:[%s2 + $0x128] sm:$0xff]
      %v434 = vld [vmem:[%s2 + $0x130] sm:$0xff]
      %v435 = vld [vmem:[%s2 + $0x138] sm:$0xff]
      %v436 = vld [vmem:[%s2 + $0x140] sm:$0xff]
      %v437 = vld [vmem:[%s2 + $0x148] sm:$0xff]
      %v438 = vld [vmem:[%s2 + $0x150] sm:$0xff]
      %v439 = vld [vmem:[%s2 + $0x158] sm:$0xff]
      %v440 = vld [vmem:[%s2 + $0x160] sm:$0xff]
      %v441 = vld [vmem:[%s2 + $0x168] sm:$0xff]
      %v442 = vld [vmem:[%s2 + $0x170] sm:$0xff]
      %v443 = vld [vmem:[%s2 + $0x178] sm:$0xff]
      %v444 = vld [vmem:[%s2 + $0x180] sm:$0xff]
      %v445 = vld [vmem:[%s2 + $0x188] sm:$0xff]
      %v446 = vld [vmem:[%s2 + $0x190] sm:$0xff]
      %v447 = vld [vmem:[%s2 + $0x198] sm:$0xff]
      %v448 = vld [vmem:[%s2 + $0x1a0] sm:$0xff]
      %v449 = vld [vmem:[%s2 + $0x1a8] sm:$0xff]
      %v450 = vld [vmem:[%s2 + $0x1b0] sm:$0xff]
      %v451 = vld [vmem:[%s2 + $0x1b8] sm:$0xff]
      %v452 = vld [vmem:[%s2 + $0x1c0] sm:$0xff]
      %v453 = vld [vmem:[%s2 + $0x1c8] sm:$0xff]
      %v454 = vld [vmem:[%s2 + $0x1d0] sm:$0xff]
      %v455 = vld [vmem:[%s2 + $0x1d8] sm:$0xff]
      %v456 = vld [vmem:[%s2 + $0x1e0] sm:$0xff]
      %v457 = vld [vmem:[%s2 + $0x1e8] sm:$0xff]
      %v458 = vld [vmem:[%s2 + $0x1f0] sm:$0xff]
      %v459 = vld [vmem:[%s2 + $0x1f8] sm:$0xff]
      %v460 = vld [vmem:[%s378] sm:$0x3]
      %v461 = vld [vmem:[%s3] sm:$0xff]
      %v462 = vld [vmem:[%s3 + $0x8] sm:$0xff]
      %v463 = vld [vmem:[%s3 + $0x10] sm:$0xff]
      %v464 = vld [vmem:[%s3 + $0x18] sm:$0xff]
      %v465 = vld [vmem:[%s3 + $0x20] sm:$0xff]
      %v466 = vld [vmem:[%s3 + $0x28] sm:$0xff]
      %v467 = vld [vmem:[%s3 + $0x30] sm:$0xff]
      %v468 = vld [vmem:[%s3 + $0x38] sm:$0xff]
      %v469 = vld [vmem:[%s4] sm:$0xff]
      %v470 = vld [vmem:[%s4 + $0x8] sm:$0xff]
      %v471 = vld [vmem:[%s4 + $0x10] sm:$0xff]
      %v472 = vld [vmem:[%s4 + $0x18] sm:$0xff]
      %v473 = vld [vmem:[%s4 + $0x20] sm:$0xff]
      %v474 = vld [vmem:[%s4 + $0x28] sm:$0xff]
      %v475 = vld [vmem:[%s4 + $0x30] sm:$0xff]
      %v476 = vld [vmem:[%s4 + $0x38] sm:$0xff]
      %v477 = vld [vmem:[%s4 + $0x40] sm:$0xff]
      %v478 = vld [vmem:[%s4 + $0x48] sm:$0xff]
      %v479 = vld [vmem:[%s4 + $0x50] sm:$0xff]
      %v480 = vld [vmem:[%s4 + $0x58] sm:$0xff]
      %v481 = vld [vmem:[%s5] sm:$0xff]
      %v482 = vld [vmem:[%s5 + $0x8] sm:$0xff]
      %v483 = vld [vmem:[%s5 + $0x10] sm:$0xff]
      %v484 = vld [vmem:[%s5 + $0x18] sm:$0xff]
      %v485 = vld [vmem:[%s5 + $0x20] sm:$0xff]
      %v486 = vld [vmem:[%s5 + $0x28] sm:$0xff]
      %v487 = vld [vmem:[%s5 + $0x30] sm:$0xff]
      %v488 = vld [vmem:[%s5 + $0x38] sm:$0xff]
      %v490 = vperm.slane %v460, 0
      %v491 = vperm.slane %v460, 1
      %494 = vmatpush.xpose.msra.mxu0 0.0
      %495 = vmatpush.xpose.msra.mxu0 0.0
      %496 = vmatpush.xpose.msra.mxu0 0.0
      %497 = vmatpush.xpose.msra.mxu0 0.0
      %498 = vmatpush.xpose.msra.mxu0 0.0
      %499 = vmatpush.xpose.msra.mxu0 0.0
      %500 = vmatpush.xpose.msra.mxu0 0.0
      %501 = vmatpush.xpose.msra.mxu0 0.0
      %502 = vmatpush.xpose.msra.mxu0 0.0
      %503 = vmatpush.xpose.msra.mxu0 0.0
      %504 = vmatpush.xpose.msra.mxu0 0.0
      %505 = vmatpush.xpose.msra.mxu0 0.0
      %506 = vmatpush.xpose.msra.mxu0 0.0
      %507 = vmatpush.xpose.msra.mxu0 0.0
      %508 = vmatpush.xpose.msra.mxu0 %v386
      %509 = vmatpush.xpose.msra.mxu0 %v384
      %510 = vmatmul.f32.gmra.mxu0 %v490
      %v511 = vpop.f32.mrf.mxu0
      %v512 = vadd.f32 0.0, %v511
      %513 = vdwg.mxu0
      %514 = vmatpush.xpose.msra.mxu0 0.0
      %515 = vmatpush.xpose.msra.mxu0 0.0
      %516 = vmatpush.xpose.msra.mxu0 0.0
      %517 = vmatpush.xpose.msra.mxu0 0.0
      %518 = vmatpush.xpose.msra.mxu0 0.0
      %519 = vmatpush.xpose.msra.mxu0 0.0
      %520 = vmatpush.xpose.msra.mxu0 0.0
      %521 = vmatpush.xpose.msra.mxu0 0.0
      %522 = vmatpush.xpose.msra.mxu0 0.0
      %523 = vmatpush.xpose.msra.mxu0 0.0
      %524 = vmatpush.xpose.msra.mxu0 0.0
      %525 = vmatpush.xpose.msra.mxu0 0.0
      %526 = vmatpush.xpose.msra.mxu0 0.0
      %527 = vmatpush.xpose.msra.mxu0 0.0
      %528 = vmatpush.xpose.msra.mxu0 %v387
      %529 = vmatpush.xpose.msra.mxu0 %v385
      %530 = vmatmul.f32.gmra.mxu0 %v491
      %v531 = vpop.f32.mrf.mxu0
      %v532 = vadd.f32 %v512, %v531
      %533 = vdwg.mxu0
      %534 = vmatpush.xpose.msra.mxu0 0.0
      %535 = vmatpush.xpose.msra.mxu0 0.0
      %536 = vmatpush.xpose.msra.mxu0 0.0
      %537 = vmatpush.xpose.msra.mxu0 0.0
      %538 = vmatpush.xpose.msra.mxu0 0.0
      %539 = vmatpush.xpose.msra.mxu0 0.0
      %540 = vmatpush.xpose.msra.mxu0 0.0
      %541 = vmatpush.xpose.msra.mxu0 0.0
      %542 = vmatpush.xpose.msra.mxu0 0.0
      %543 = vmatpush.xpose.msra.mxu0 0.0
      %544 = vmatpush.xpose.msra.mxu0 0.0
      %545 = vmatpush.xpose.msra.mxu0 0.0
      %546 = vmatpush.xpose.msra.mxu0 0.0
      %547 = vmatpush.xpose.msra.mxu0 0.0
      %548 = vmatpush.xpose.msra.mxu0 %v390
      %549 = vmatpush.xpose.msra.mxu0 %v388
      %550 = vmatmul.f32.gmra.mxu0 %v490
      %v551 = vpop.f32.mrf.mxu0
      %v552 = vadd.f32 0.0, %v551
      %553 = vdwg.mxu0
      %554 = vmatpush.xpose.msra.mxu0 0.0
      %555 = vmatpush.xpose.msra.mxu0 0.0
      %556 = vmatpush.xpose.msra.mxu0 0.0
      %557 = vmatpush.xpose.msra.mxu0 0.0
      %558 = vmatpush.xpose.msra.mxu0 0.0
      %559 = vmatpush.xpose.msra.mxu0 0.0
      %560 = vmatpush.xpose.msra.mxu0 0.0
      %561 = vmatpush.xpose.msra.mxu0 0.0
      %562 = vmatpush.xpose.msra.mxu0 0.0
      %563 = vmatpush.xpose.msra.mxu0 0.0
      %564 = vmatpush.xpose.msra.mxu0 0.0
      %565 = vmatpush.xpose.msra.mxu0 0.0
      %566 = vmatpush.xpose.msra.mxu0 0.0
      %567 = vmatpush.xpose.msra.mxu0 0.0
      %568 = vmatpush.xpose.msra.mxu0 %v391
      %569 = vmatpush.xpose.msra.mxu0 %v389
      %570 = vmatmul.f32.gmra.mxu0 %v491
      %v571 = vpop.f32.mrf.mxu0
      %v572 = vadd.f32 %v552, %v571
      %573 = vdwg.mxu0
      %574 = vmatpush.xpose.msra.mxu0 0.0
      %575 = vmatpush.xpose.msra.mxu0 0.0
      %576 = vmatpush.xpose.msra.mxu0 0.0
      %577 = vmatpush.xpose.msra.mxu0 0.0
      %578 = vmatpush.xpose.msra.mxu0 0.0
      %579 = vmatpush.xpose.msra.mxu0 0.0
      %580 = vmatpush.xpose.msra.mxu0 0.0
      %581 = vmatpush.xpose.msra.mxu0 0.0
      %582 = vmatpush.xpose.msra.mxu0 0.0
      %583 = vmatpush.xpose.msra.mxu0 0.0
      %584 = vmatpush.xpose.msra.mxu0 0.0
      %585 = vmatpush.xpose.msra.mxu0 0.0
      %586 = vmatpush.xpose.msra.mxu0 0.0
      %587 = vmatpush.xpose.msra.mxu0 0.0
      %588 = vmatpush.xpose.msra.mxu0 %v394
      %589 = vmatpush.xpose.msra.mxu0 %v392
      %590 = vmatmul.f32.gmra.mxu0 %v490
      %v591 = vpop.f32.mrf.mxu0
      %v592 = vadd.f32 0.0, %v591
      %593 = vdwg.mxu0
      %594 = vmatpush.xpose.msra.mxu0 0.0
      %595 = vmatpush.xpose.msra.mxu0 0.0
      %596 = vmatpush.xpose.msra.mxu0 0.0
      %597 = vmatpush.xpose.msra.mxu0 0.0
      %598 = vmatpush.xpose.msra.mxu0 0.0
      %599 = vmatpush.xpose.msra.mxu0 0.0
      %600 = vmatpush.xpose.msra.mxu0 0.0
      %601 = vmatpush.xpose.msra.mxu0 0.0
      %602 = vmatpush.xpose.msra.mxu0 0.0
      %603 = vmatpush.xpose.msra.mxu0 0.0
      %604 = vmatpush.xpose.msra.mxu0 0.0
      %605 = vmatpush.xpose.msra.mxu0 0.0
      %606 = vmatpush.xpose.msra.mxu0 0.0
      %607 = vmatpush.xpose.msra.mxu0 0.0
      %608 = vmatpush.xpose.msra.mxu0 %v395
      %609 = vmatpush.xpose.msra.mxu0 %v393
      %610 = vmatmul.f32.gmra.mxu0 %v491
      %v611 = vpop.f32.mrf.mxu0
      %v612 = vadd.f32 %v592, %v611
      %613 = vdwg.mxu0
      %vm614 = vcmask 122880
      %v615 = vsel %vm614, %v532, 0.0
      %616 = vadd.xlane.f32.xlu0 %v615
      %v617 = vpop.xlane.xlu0 %616
      %v618 = vmul.f32 %v617, 0.0625
      %v619 = vsel %vm614, %v572, 0.0
      %620 = vadd.xlane.f32.xlu0 %v619
      %v621 = vpop.xlane.xlu0 %620
      %v622 = vmul.f32 %v621, 0.00390625
      %v623 = vmul.f32 %v572, 0.0625
      %v624 = vmul.f32 %v612, 0.0625
      %v626 = vrot.slane %v623, 7
      %v629 = vrot.slane %v624, 6
      %v632 = vrot.slane %v618, 5
      %v635 = vrot.slane %v622, 4
      %vm637 = vcmask 1040384
      %v638 = vsel %vm637, %v532, %v626
      %vm639 = vcmask 1041408
      %v640 = vsel %vm639, %v638, %v629
      %vm641 = vcmask 1042432
      %v642 = vsel %vm641, %v640, %v632
      %vm643 = vcmask 1043456
      %v644 = vsel %vm643, %v642, %v635
      %646 = vset.pattern.permute.xlu0 0
      %647 = vperm.xlu0 %646, %v461
      %v648 = vpop.permute.xlu0 %647
      %651 = vset.pattern.permute.xlu0 0
      %652 = vperm.xlu0 %651, %v462
      %v653 = vpop.permute.xlu0 %652
      %656 = vset.pattern.permute.xlu0 0
      %657 = vperm.xlu0 %656, %v463
      %v658 = vpop.permute.xlu0 %657
      %661 = vset.pattern.permute.xlu0 0
      %662 = vperm.xlu0 %661, %v464
      %v663 = vpop.permute.xlu0 %662
      %666 = vset.pattern.permute.xlu0 0
      %667 = vperm.xlu0 %666, %v465
      %v668 = vpop.permute.xlu0 %667
      %671 = vset.pattern.permute.xlu0 0
      %672 = vperm.xlu0 %671, %v466
      %v673 = vpop.permute.xlu0 %672
      %676 = vset.pattern.permute.xlu0 0
      %677 = vperm.xlu0 %676, %v467
      %v678 = vpop.permute.xlu0 %677
      %681 = vset.pattern.permute.xlu0 0
      %682 = vperm.xlu0 %681, %v468
      %v683 = vpop.permute.xlu0 %682
      %v685 = vmul.f32 %v648, %v490
      %v686 = vmul.f32 %v648, %v491
      %v687 = vmul.f32 %v653, %v490
      %v688 = vmul.f32 %v653, %v491
      %v689 = vmul.f32 %v658, %v490
      %v690 = vmul.f32 %v658, %v491
      %v691 = vmul.f32 %v663, %v490
      %v692 = vmul.f32 %v663, %v491
      %v693 = vmul.f32 %v668, %v490
      %v694 = vmul.f32 %v668, %v491
      %v695 = vmul.f32 %v673, %v490
      %v696 = vmul.f32 %v673, %v491
      %v697 = vmul.f32 %v678, %v490
      %v698 = vmul.f32 %v678, %v491
      %v699 = vmul.f32 %v683, %v490
      %v700 = vmul.f32 %v683, %v491
      %vm701 = vcmask 39936
      %v703 = vsel %vm701, %v469, 0
      %v706 = vsel %vm701, %v470, 0
      %v709 = vsel %vm701, %v471, 0
      %v712 = vsel %vm701, %v472, 0
      %v715 = vsel %vm701, %v473, 0
      %v718 = vsel %vm701, %v474, 0
      %v721 = vsel %vm701, %v475, 0
      %v724 = vsel %vm701, %v476, 0
      %v727 = vsel %vm701, %v477, 0
      %v730 = vsel %vm701, %v478, 0
      %v733 = vsel %vm701, %v479, 0
      %v736 = vsel %vm701, %v480, 0
      %vm738 = vcmask 1044480
      %v740 = vsel %vm738, %v644, 0
      %742 = vmatpush.msra.mxu0 0.0
      %743 = vmatpush.msra.mxu0 0.0
      %744 = vmatpush.msra.mxu0 0.0
      %745 = vmatpush.msra.mxu0 0.0
      %746 = vmatpush.msra.mxu0 0.0
      %747 = vmatpush.msra.mxu0 0.0
      %748 = vmatpush.msra.mxu0 0.0
      %749 = vmatpush.msra.mxu0 0.0
      %750 = vmatpush.msra.mxu0 0.0
      %751 = vmatpush.msra.mxu0 0.0
      %752 = vmatpush.msra.mxu0 0.0
      %753 = vmatpush.msra.mxu0 0.0
      %754 = vmatpush.msra.mxu0 0.0
      %755 = vmatpush.msra.mxu0 0.0
      %756 = vmatpush.msra.mxu0 0.0
      %757 = vmatpush.msra.mxu0 %v740
      %758 = vmatmul.f32.gmra.mxu0 %v703
      %v759 = vpop.f32.mrf.mxu0
      %v760 = vadd.f32 0.0, %v759
      %761 = vmatmul.f32.gmra.mxu0 %v706
      %v762 = vpop.f32.mrf.mxu0
      %v763 = vadd.f32 0.0, %v762
      %764 = vmatmul.f32.gmra.mxu0 %v709
      %v765 = vpop.f32.mrf.mxu0
      %v766 = vadd.f32 0.0, %v765
      %767 = vmatmul.f32.gmra.mxu0 %v712
      %v768 = vpop.f32.mrf.mxu0
      %v769 = vadd.f32 0.0, %v768
      %770 = vmatmul.f32.gmra.mxu0 %v715
      %v771 = vpop.f32.mrf.mxu0
      %v772 = vadd.f32 0.0, %v771
      %773 = vmatmul.f32.gmra.mxu0 %v718
      %v774 = vpop.f32.mrf.mxu0
      %v775 = vadd.f32 0.0, %v774
      %776 = vmatmul.f32.gmra.mxu0 %v721
      %v777 = vpop.f32.mrf.mxu0
      %v778 = vadd.f32 0.0, %v777
      %779 = vmatmul.f32.gmra.mxu0 %v724
      %v780 = vpop.f32.mrf.mxu0
      %v781 = vadd.f32 0.0, %v780
      %782 = vmatmul.f32.gmra.mxu0 %v727
      %v783 = vpop.f32.mrf.mxu0
      %v784 = vadd.f32 0.0, %v783
      %785 = vmatmul.f32.gmra.mxu0 %v730
      %v786 = vpop.f32.mrf.mxu0
      %v787 = vadd.f32 0.0, %v786
      %788 = vmatmul.f32.gmra.mxu0 %v733
      %v789 = vpop.f32.mrf.mxu0
      %v790 = vadd.f32 0.0, %v789
      %791 = vmatmul.f32.gmra.mxu0 %v736
      %v792 = vpop.f32.mrf.mxu0
      %v793 = vadd.f32 0.0, %v792
      %794 = vdwg.mxu0
      %796 = vset.pattern.permute.xlu0 0
      %797 = vperm.xlu0 %796, %v481
      %v798 = vpop.permute.xlu0 %797
      %801 = vset.pattern.permute.xlu0 0
      %802 = vperm.xlu0 %801, %v482
      %v803 = vpop.permute.xlu0 %802
      %806 = vset.pattern.permute.xlu0 0
      %807 = vperm.xlu0 %806, %v483
      %v808 = vpop.permute.xlu0 %807
      %811 = vset.pattern.permute.xlu0 0
      %812 = vperm.xlu0 %811, %v484
      %v813 = vpop.permute.xlu0 %812
      %v815 = vadd.f32 %v760, %v798
      %v816 = vadd.f32 %v763, %v803
      %v817 = vadd.f32 %v766, %v808
      %v818 = vadd.f32 %v769, %v813
      %820 = vset.pattern.permute.xlu0 0
      %821 = vperm.xlu0 %820, %v485
      %v822 = vpop.permute.xlu0 %821
      %825 = vset.pattern.permute.xlu0 0
      %826 = vperm.xlu0 %825, %v486
      %v827 = vpop.permute.xlu0 %826
      %830 = vset.pattern.permute.xlu0 0
      %831 = vperm.xlu0 %830, %v487
      %v832 = vpop.permute.xlu0 %831
      %835 = vset.pattern.permute.xlu0 0
      %836 = vperm.xlu0 %835, %v488
      %v837 = vpop.permute.xlu0 %836
      %v839 = vadd.f32 %v772, %v822
      %v840 = vadd.f32 %v775, %v827
      %v841 = vadd.f32 %v778, %v832
      %v842 = vadd.f32 %v781, %v837
      %843 = vmatpush.msra.mxu0 %v426
      %844 = vmatpush.msra.mxu0 %v424
      %845 = vmatpush.msra.mxu0 %v422
      %846 = vmatpush.msra.mxu0 %v420
      %847 = vmatpush.msra.mxu0 %v418
      %848 = vmatpush.msra.mxu0 %v416
      %849 = vmatpush.msra.mxu0 %v414
      %850 = vmatpush.msra.mxu0 %v412
      %851 = vmatpush.msra.mxu0 %v410
      %852 = vmatpush.msra.mxu0 %v408
      %853 = vmatpush.msra.mxu0 %v406
      %854 = vmatpush.msra.mxu0 %v404
      %855 = vmatpush.msra.mxu0 %v402
      %856 = vmatpush.msra.mxu0 %v400
      %857 = vmatpush.msra.mxu0 %v398
      %858 = vmatpush.msra.mxu0 %v396
      %859 = vmatmul.f32.gmra.mxu0 %v693
      %v860 = vpop.f32.mrf.mxu0
      %v861 = vadd.f32 0.0, %v860
      %862 = vmatmul.f32.gmra.mxu0 %v695
      %v863 = vpop.f32.mrf.mxu0
      %v864 = vadd.f32 0.0, %v863
      %865 = vmatmul.f32.gmra.mxu0 %v697
      %v866 = vpop.f32.mrf.mxu0
      %v867 = vadd.f32 0.0, %v866
      %868 = vmatmul.f32.gmra.mxu0 %v699
      %v869 = vpop.f32.mrf.mxu0
      %v870 = vadd.f32 0.0, %v869
      %871 = vdwg.mxu0
      %872 = vmatpush.msra.mxu0 %v458
      %873 = vmatpush.msra.mxu0 %v456
      %874 = vmatpush.msra.mxu0 %v454
      %875 = vmatpush.msra.mxu0 %v452
      %876 = vmatpush.msra.mxu0 %v450
      %877 = vmatpush.msra.mxu0 %v448
      %878 = vmatpush.msra.mxu0 %v446
      %879 = vmatpush.msra.mxu0 %v444
      %880 = vmatpush.msra.mxu0 %v442
      %881 = vmatpush.msra.mxu0 %v440
      %882 = vmatpush.msra.mxu0 %v438
      %883 = vmatpush.msra.mxu0 %v436
      %884 = vmatpush.msra.mxu0 %v434
      %885 = vmatpush.msra.mxu0 %v432
      %886 = vmatpush.msra.mxu0 %v430
      %887 = vmatpush.msra.mxu0 %v428
      %888 = vmatmul.f32.gmra.mxu0 %v694
      %v889 = vpop.f32.mrf.mxu0
      %v890 = vadd.f32 %v861, %v889
      %891 = vmatmul.f32.gmra.mxu0 %v696
      %v892 = vpop.f32.mrf.mxu0
      %v893 = vadd.f32 %v864, %v892
      %894 = vmatmul.f32.gmra.mxu0 %v698
      %v895 = vpop.f32.mrf.mxu0
      %v896 = vadd.f32 %v867, %v895
      %897 = vmatmul.f32.gmra.mxu0 %v700
      %v898 = vpop.f32.mrf.mxu0
      %v899 = vadd.f32 %v870, %v898
      %900 = vdwg.mxu0
      %901 = vmatpush.msra.mxu0 %v427
      %902 = vmatpush.msra.mxu0 %v425
      %903 = vmatpush.msra.mxu0 %v423
      %904 = vmatpush.msra.mxu0 %v421
      %905 = vmatpush.msra.mxu0 %v419
      %906 = vmatpush.msra.mxu0 %v417
      %907 = vmatpush.msra.mxu0 %v415
      %908 = vmatpush.msra.mxu0 %v413
      %909 = vmatpush.msra.mxu0 %v411
      %910 = vmatpush.msra.mxu0 %v409
      %911 = vmatpush.msra.mxu0 %v407
      %912 = vmatpush.msra.mxu0 %v405
      %913 = vmatpush.msra.mxu0 %v403
      %914 = vmatpush.msra.mxu0 %v401
      %915 = vmatpush.msra.mxu0 %v399
      %916 = vmatpush.msra.mxu0 %v397
      %917 = vmatmul.f32.gmra.mxu0 %v693
      %v918 = vpop.f32.mrf.mxu0
      %v919 = vadd.f32 0.0, %v918
      %920 = vmatmul.f32.gmra.mxu0 %v695
      %v921 = vpop.f32.mrf.mxu0
      %v922 = vadd.f32 0.0, %v921
      %923 = vmatmul.f32.gmra.mxu0 %v697
      %v924 = vpop.f32.mrf.mxu0
      %v925 = vadd.f32 0.0, %v924
      %926 = vmatmul.f32.gmra.mxu0 %v699
      %v927 = vpop.f32.mrf.mxu0
      %v928 = vadd.f32 0.0, %v927
      %929 = vdwg.mxu0
      %930 = vmatpush.msra.mxu0 %v459
      %931 = vmatpush.msra.mxu0 %v457
      %932 = vmatpush.msra.mxu0 %v455
      %933 = vmatpush.msra.mxu0 %v453
      %934 = vmatpush.msra.mxu0 %v451
      %935 = vmatpush.msra.mxu0 %v449
      %936 = vmatpush.msra.mxu0 %v447
      %937 = vmatpush.msra.mxu0 %v445
      %938 = vmatpush.msra.mxu0 %v443
      %939 = vmatpush.msra.mxu0 %v441
      %940 = vmatpush.msra.mxu0 %v439
      %941 = vmatpush.msra.mxu0 %v437
      %942 = vmatpush.msra.mxu0 %v435
      %943 = vmatpush.msra.mxu0 %v433
      %944 = vmatpush.msra.mxu0 %v431
      %945 = vmatpush.msra.mxu0 %v429
      %946 = vmatmul.f32.gmra.mxu0 %v694
      %v947 = vpop.f32.mrf.mxu0
      %v948 = vadd.f32 %v919, %v947
      %949 = vmatmul.f32.gmra.mxu0 %v696
      %v950 = vpop.f32.mrf.mxu0
      %v951 = vadd.f32 %v922, %v950
      %952 = vmatmul.f32.gmra.mxu0 %v698
      %v953 = vpop.f32.mrf.mxu0
      %v954 = vadd.f32 %v925, %v953
      %955 = vmatmul.f32.gmra.mxu0 %v700
      %v956 = vpop.f32.mrf.mxu0
      %v957 = vadd.f32 %v928, %v956
      %958 = vdwg.mxu0
      %v959 = vadd.f32 %v685, %v890
      %v960 = vadd.f32 %v686, %v948
      %v961 = vadd.f32 %v687, %v893
      %v962 = vadd.f32 %v688, %v951
      %v963 = vadd.f32 %v689, %v896
      %v964 = vadd.f32 %v690, %v954
      %v965 = vadd.f32 %v691, %v899
      %v966 = vadd.f32 %v692, %v957
      %vm967 = vcmask 130048
      %v969 = vsel %vm967, %v815, 0
      %v972 = vsel %vm967, %v816, 0
      %v975 = vsel %vm967, %v817, 0
      %v978 = vsel %vm967, %v818, 0
      %980 = vmatpush.msra.mxu0 0.0
      %981 = vmatpush.msra.mxu0 0.0
      %982 = vmatpush.msra.mxu0 0.0
      %983 = vmatpush.msra.mxu0 0.0
      %984 = vmatpush.msra.mxu0 0.0
      %985 = vmatpush.msra.mxu0 0.0
      %986 = vmatpush.msra.mxu0 0.0
      %987 = vmatpush.msra.mxu0 0.0
      %988 = vmatpush.msra.mxu0 0.0
      %989 = vmatpush.msra.mxu0 0.0
      %990 = vmatpush.msra.mxu0 0.0
      %991 = vmatpush.msra.mxu0 0.0
      %992 = vmatpush.msra.mxu0 0.0
      %993 = vmatpush.msra.mxu0 0.0
      %994 = vmatpush.msra.mxu0 %v386
      %995 = vmatpush.msra.mxu0 %v384
      %996 = vmatmul.f32.gmra.mxu0 %v969
      %v997 = vpop.f32.mrf.mxu0
      %v998 = vadd.f32 0.0, %v997
      %999 = vmatmul.f32.gmra.mxu0 %v972
      %v1000 = vpop.f32.mrf.mxu0
      %v1001 = vadd.f32 0.0, %v1000
      %1002 = vmatmul.f32.gmra.mxu0 %v975
      %v1003 = vpop.f32.mrf.mxu0
      %v1004 = vadd.f32 0.0, %v1003
      %1005 = vmatmul.f32.gmra.mxu0 %v978
      %v1006 = vpop.f32.mrf.mxu0
      %v1007 = vadd.f32 0.0, %v1006
      %1008 = vdwg.mxu0
      %1009 = vmatpush.msra.mxu0 0.0
      %1010 = vmatpush.msra.mxu0 0.0
      %1011 = vmatpush.msra.mxu0 0.0
      %1012 = vmatpush.msra.mxu0 0.0
      %1013 = vmatpush.msra.mxu0 0.0
      %1014 = vmatpush.msra.mxu0 0.0
      %1015 = vmatpush.msra.mxu0 0.0
      %1016 = vmatpush.msra.mxu0 0.0
      %1017 = vmatpush.msra.mxu0 0.0
      %1018 = vmatpush.msra.mxu0 0.0
      %1019 = vmatpush.msra.mxu0 0.0
      %1020 = vmatpush.msra.mxu0 0.0
      %1021 = vmatpush.msra.mxu0 0.0
      %1022 = vmatpush.msra.mxu0 0.0
      %1023 = vmatpush.msra.mxu0 %v387
      %1024 = vmatpush.msra.mxu0 %v385
      %1025 = vmatmul.f32.gmra.mxu0 %v969
      %v1026 = vpop.f32.mrf.mxu0
      %v1027 = vadd.f32 0.0, %v1026
      %1028 = vmatmul.f32.gmra.mxu0 %v972
      %v1029 = vpop.f32.mrf.mxu0
      %v1030 = vadd.f32 0.0, %v1029
      %1031 = vmatmul.f32.gmra.mxu0 %v975
      %v1032 = vpop.f32.mrf.mxu0
      %v1033 = vadd.f32 0.0, %v1032
      %1034 = vmatmul.f32.gmra.mxu0 %v978
      %v1035 = vpop.f32.mrf.mxu0
      %v1036 = vadd.f32 0.0, %v1035
      %1037 = vdwg.mxu0
      %v1038 = vadd.f32 %v959, %v998
      %v1039 = vadd.f32 %v960, %v1027
      %v1040 = vadd.f32 %v961, %v1001
      %v1041 = vadd.f32 %v962, %v1030
      %v1042 = vadd.f32 %v963, %v1004
      %v1043 = vadd.f32 %v964, %v1033
      %v1044 = vadd.f32 %v965, %v1007
      %v1045 = vadd.f32 %v966, %v1036
      %v1047 = vsel %vm967, %v839, 0
      %v1050 = vsel %vm967, %v840, 0
      %v1053 = vsel %vm967, %v841, 0
      %v1056 = vsel %vm967, %v842, 0
      %1058 = vmatpush.msra.mxu0 0.0
      %1059 = vmatpush.msra.mxu0 0.0
      %1060 = vmatpush.msra.mxu0 0.0
      %1061 = vmatpush.msra.mxu0 0.0
      %1062 = vmatpush.msra.mxu0 0.0
      %1063 = vmatpush.msra.mxu0 0.0
      %1064 = vmatpush.msra.mxu0 0.0
      %1065 = vmatpush.msra.mxu0 0.0
      %1066 = vmatpush.msra.mxu0 0.0
      %1067 = vmatpush.msra.mxu0 0.0
      %1068 = vmatpush.msra.mxu0 0.0
      %1069 = vmatpush.msra.mxu0 0.0
      %1070 = vmatpush.msra.mxu0 0.0
      %1071 = vmatpush.msra.mxu0 0.0
      %1072 = vmatpush.msra.mxu0 %v390
      %1073 = vmatpush.msra.mxu0 %v388
      %1074 = vmatmul.f32.gmra.mxu0 %v1047
      %v1075 = vpop.f32.mrf.mxu0
      %v1076 = vadd.f32 0.0, %v1075
      %1077 = vmatmul.f32.gmra.mxu0 %v1050
      %v1078 = vpop.f32.mrf.mxu0
      %v1079 = vadd.f32 0.0, %v1078
      %1080 = vmatmul.f32.gmra.mxu0 %v1053
      %v1081 = vpop.f32.mrf.mxu0
      %v1082 = vadd.f32 0.0, %v1081
      %1083 = vmatmul.f32.gmra.mxu0 %v1056
      %v1084 = vpop.f32.mrf.mxu0
      %v1085 = vadd.f32 0.0, %v1084
      %1086 = vdwg.mxu0
      %1087 = vmatpush.msra.mxu0 0.0
      %1088 = vmatpush.msra.mxu0 0.0
      %1089 = vmatpush.msra.mxu0 0.0
      %1090 = vmatpush.msra.mxu0 0.0
      %1091 = vmatpush.msra.mxu0 0.0
      %1092 = vmatpush.msra.mxu0 0.0
      %1093 = vmatpush.msra.mxu0 0.0
      %1094 = vmatpush.msra.mxu0 0.0
      %1095 = vmatpush.msra.mxu0 0.0
      %1096 = vmatpush.msra.mxu0 0.0
      %1097 = vmatpush.msra.mxu0 0.0
      %1098 = vmatpush.msra.mxu0 0.0
      %1099 = vmatpush.msra.mxu0 0.0
      %1100 = vmatpush.msra.mxu0 0.0
      %1101 = vmatpush.msra.mxu0 %v391
      %1102 = vmatpush.msra.mxu0 %v389
      %1103 = vmatmul.f32.gmra.mxu0 %v1047
      %v1104 = vpop.f32.mrf.mxu0
      %v1105 = vadd.f32 0.0, %v1104
      %1106 = vmatmul.f32.gmra.mxu0 %v1050
      %v1107 = vpop.f32.mrf.mxu0
      %v1108 = vadd.f32 0.0, %v1107
      %1109 = vmatmul.f32.gmra.mxu0 %v1053
      %v1110 = vpop.f32.mrf.mxu0
      %v1111 = vadd.f32 0.0, %v1110
      %1112 = vmatmul.f32.gmra.mxu0 %v1056
      %v1113 = vpop.f32.mrf.mxu0
      %v1114 = vadd.f32 0.0, %v1113
      %1115 = vdwg.mxu0
      %v1116 = vadd.f32 %v1038, %v1076
      %v1117 = vadd.f32 %v1039, %v1105
      %v1118 = vadd.f32 %v1040, %v1079
      %v1119 = vadd.f32 %v1041, %v1108
      %v1120 = vadd.f32 %v1042, %v1082
      %v1121 = vadd.f32 %v1043, %v1111
      %v1122 = vadd.f32 %v1044, %v1085
      %v1123 = vadd.f32 %v1045, %v1114
      %v1125 = vsel %vm967, %v784, 0
      %v1128 = vsel %vm967, %v787, 0
      %v1131 = vsel %vm967, %v790, 0
      %v1134 = vsel %vm967, %v793, 0
      %1136 = vmatpush.msra.mxu0 0.0
      %1137 = vmatpush.msra.mxu0 0.0
      %1138 = vmatpush.msra.mxu0 0.0
      %1139 = vmatpush.msra.mxu0 0.0
      %1140 = vmatpush.msra.mxu0 0.0
      %1141 = vmatpush.msra.mxu0 0.0
      %1142 = vmatpush.msra.mxu0 0.0
      %1143 = vmatpush.msra.mxu0 0.0
      %1144 = vmatpush.msra.mxu0 0.0
      %1145 = vmatpush.msra.mxu0 0.0
      %1146 = vmatpush.msra.mxu0 0.0
      %1147 = vmatpush.msra.mxu0 0.0
      %1148 = vmatpush.msra.mxu0 0.0
      %1149 = vmatpush.msra.mxu0 0.0
      %1150 = vmatpush.msra.mxu0 %v394
      %1151 = vmatpush.msra.mxu0 %v392
      %1152 = vmatmul.f32.gmra.mxu0 %v1125
      %v1153 = vpop.f32.mrf.mxu0
      %v1154 = vadd.f32 0.0, %v1153
      %1155 = vmatmul.f32.gmra.mxu0 %v1128
      %v1156 = vpop.f32.mrf.mxu0
      %v1157 = vadd.f32 0.0, %v1156
      %1158 = vmatmul.f32.gmra.mxu0 %v1131
      %v1159 = vpop.f32.mrf.mxu0
      %v1160 = vadd.f32 0.0, %v1159
      %1161 = vmatmul.f32.gmra.mxu0 %v1134
      %v1162 = vpop.f32.mrf.mxu0
      %v1163 = vadd.f32 0.0, %v1162
      %1164 = vdwg.mxu0
      %1165 = vmatpush.msra.mxu0 0.0
      %1166 = vmatpush.msra.mxu0 0.0
      %1167 = vmatpush.msra.mxu0 0.0
      %1168 = vmatpush.msra.mxu0 0.0
      %1169 = vmatpush.msra.mxu0 0.0
      %1170 = vmatpush.msra.mxu0 0.0
      %1171 = vmatpush.msra.mxu0 0.0
      %1172 = vmatpush.msra.mxu0 0.0
      %1173 = vmatpush.msra.mxu0 0.0
      %1174 = vmatpush.msra.mxu0 0.0
      %1175 = vmatpush.msra.mxu0 0.0
      %1176 = vmatpush.msra.mxu0 0.0
      %1177 = vmatpush.msra.mxu0 0.0
      %1178 = vmatpush.msra.mxu0 0.0
      %1179 = vmatpush.msra.mxu0 %v395
      %1180 = vmatpush.msra.mxu0 %v393
      %1181 = vmatmul.f32.gmra.mxu0 %v1125
      %v1182 = vpop.f32.mrf.mxu0
      %v1183 = vadd.f32 0.0, %v1182
      %1184 = vmatmul.f32.gmra.mxu0 %v1128
      %v1185 = vpop.f32.mrf.mxu0
      %v1186 = vadd.f32 0.0, %v1185
      %1187 = vmatmul.f32.gmra.mxu0 %v1131
      %v1188 = vpop.f32.mrf.mxu0
      %v1189 = vadd.f32 0.0, %v1188
      %1190 = vmatmul.f32.gmra.mxu0 %v1134
      %v1191 = vpop.f32.mrf.mxu0
      %v1192 = vadd.f32 0.0, %v1191
      %1193 = vdwg.mxu0
      %v1194 = vadd.f32 %v1116, %v1154
      %v1195 = vadd.f32 %v1117, %v1183
      %v1196 = vadd.f32 %v1118, %v1157
      %v1197 = vadd.f32 %v1119, %v1186
      %v1198 = vadd.f32 %v1120, %v1160
      %v1199 = vadd.f32 %v1121, %v1189
      %v1200 = vadd.f32 %v1122, %v1163
      %v1201 = vadd.f32 %v1123, %v1192
      %v1202 = vmax.f32 %v1194, 0.0
      %v1203 = vmax.f32 %v1195, 0.0
      %v1204 = vmax.f32 %v1196, 0.0
      %v1205 = vmax.f32 %v1197, 0.0
      %v1206 = vmax.f32 %v1198, 0.0
      %v1207 = vmax.f32 %v1199, 0.0
      %v1208 = vmax.f32 %v1200, 0.0
      %v1209 = vmax.f32 %v1201, 0.0
      %v1210 = vld [vmem:[%s6] sm:$0xff]
      %v1211 = vld [vmem:[%s6 + $0x8] sm:$0xff]
      %v1212 = vld [vmem:[%s6 + $0x10] sm:$0xff]
      %v1213 = vld [vmem:[%s6 + $0x18] sm:$0xff]
      %v1214 = vld [vmem:[%s6 + $0x20] sm:$0xff]
      %v1215 = vld [vmem:[%s6 + $0x28] sm:$0xff]
      %v1216 = vld [vmem:[%s6 + $0x30] sm:$0xff]
      %v1217 = vld [vmem:[%s6 + $0x38] sm:$0xff]
      %v1218 = vld [vmem:[%s7] sm:$0xff]
      %v1219 = vld [vmem:[%s7 + $0x8] sm:$0xff]
      %v1220 = vld [vmem:[%s7 + $0x10] sm:$0xff]
      %v1221 = vld [vmem:[%s7 + $0x18] sm:$0xff]
      %v1222 = vld [vmem:[%s7 + $0x20] sm:$0xff]
      %v1223 = vld [vmem:[%s7 + $0x28] sm:$0xff]
      %v1224 = vld [vmem:[%s7 + $0x30] sm:$0xff]
      %v1225 = vld [vmem:[%s7 + $0x38] sm:$0xff]
      %v1226 = vld [vmem:[%s7 + $0x40] sm:$0xff]
      %v1227 = vld [vmem:[%s7 + $0x48] sm:$0xff]
      %v1228 = vld [vmem:[%s7 + $0x50] sm:$0xff]
      %v1229 = vld [vmem:[%s7 + $0x58] sm:$0xff]
      %v1230 = vld [vmem:[%s7 + $0x60] sm:$0xff]
      %v1231 = vld [vmem:[%s7 + $0x68] sm:$0xff]
      %v1232 = vld [vmem:[%s7 + $0x70] sm:$0xff]
      %v1233 = vld [vmem:[%s7 + $0x78] sm:$0xff]
      %v1234 = vld [vmem:[%s7 + $0x80] sm:$0xff]
      %v1235 = vld [vmem:[%s7 + $0x88] sm:$0xff]
      %v1236 = vld [vmem:[%s7 + $0x90] sm:$0xff]
      %v1237 = vld [vmem:[%s7 + $0x98] sm:$0xff]
      %v1238 = vld [vmem:[%s7 + $0xa0] sm:$0xff]
      %v1239 = vld [vmem:[%s7 + $0xa8] sm:$0xff]
      %v1240 = vld [vmem:[%s7 + $0xb0] sm:$0xff]
      %v1241 = vld [vmem:[%s7 + $0xb8] sm:$0xff]
      %v1242 = vld [vmem:[%s8] sm:$0xff]
      %v1243 = vld [vmem:[%s8 + $0x8] sm:$0xff]
      %v1244 = vld [vmem:[%s8 + $0x10] sm:$0xff]
      %v1245 = vld [vmem:[%s8 + $0x18] sm:$0xff]
      %v1246 = vld [vmem:[%s8 + $0x20] sm:$0xff]
      %v1247 = vld [vmem:[%s8 + $0x28] sm:$0xff]
      %v1248 = vld [vmem:[%s8 + $0x30] sm:$0xff]
      %v1249 = vld [vmem:[%s8 + $0x38] sm:$0xff]
      %1250 = vmatpush.xpose.msra.mxu0 0.0
      %1251 = vmatpush.xpose.msra.mxu0 0.0
      %1252 = vmatpush.xpose.msra.mxu0 0.0
      %1253 = vmatpush.xpose.msra.mxu0 0.0
      %1254 = vmatpush.xpose.msra.mxu0 0.0
      %1255 = vmatpush.xpose.msra.mxu0 0.0
      %1256 = vmatpush.xpose.msra.mxu0 0.0
      %1257 = vmatpush.xpose.msra.mxu0 0.0
      %1258 = vmatpush.xpose.msra.mxu0 0.0
      %1259 = vmatpush.xpose.msra.mxu0 0.0
      %1260 = vmatpush.xpose.msra.mxu0 0.0
      %1261 = vmatpush.xpose.msra.mxu0 0.0
      %1262 = vmatpush.xpose.msra.mxu0 0.0
      %1263 = vmatpush.xpose.msra.mxu0 0.0
      %1264 = vmatpush.xpose.msra.mxu0 %v386
      %1265 = vmatpush.xpose.msra.mxu0 %v384
      %1266 = vmatmul.f32.gmra.mxu0 %v1202
      %v1267 = vpop.f32.mrf.mxu0
      %v1268 = vadd.f32 0.0, %v1267
      %1269 = vmatmul.f32.gmra.mxu0 %v1204
      %v1270 = vpop.f32.mrf.mxu0
      %v1271 = vadd.f32 0.0, %v1270
      %1272 = vmatmul.f32.gmra.mxu0 %v1206
      %v1273 = vpop.f32.mrf.mxu0
      %v1274 = vadd.f32 0.0, %v1273
      %1275 = vmatmul.f32.gmra.mxu0 %v1208
      %v1276 = vpop.f32.mrf.mxu0
      %v1277 = vadd.f32 0.0, %v1276
      %1278 = vdwg.mxu0
      %1279 = vmatpush.xpose.msra.mxu0 0.0
      %1280 = vmatpush.xpose.msra.mxu0 0.0
      %1281 = vmatpush.xpose.msra.mxu0 0.0
      %1282 = vmatpush.xpose.msra.mxu0 0.0
      %1283 = vmatpush.xpose.msra.mxu0 0.0
      %1284 = vmatpush.xpose.msra.mxu0 0.0
      %1285 = vmatpush.xpose.msra.mxu0 0.0
      %1286 = vmatpush.xpose.msra.mxu0 0.0
      %1287 = vmatpush.xpose.msra.mxu0 0.0
      %1288 = vmatpush.xpose.msra.mxu0 0.0
      %1289 = vmatpush.xpose.msra.mxu0 0.0
      %1290 = vmatpush.xpose.msra.mxu0 0.0
      %1291 = vmatpush.xpose.msra.mxu0 0.0
      %1292 = vmatpush.xpose.msra.mxu0 0.0
      %1293 = vmatpush.xpose.msra.mxu0 %v387
      %1294 = vmatpush.xpose.msra.mxu0 %v385
      %1295 = vmatmul.f32.gmra.mxu0 %v1203
      %v1296 = vpop.f32.mrf.mxu0
      %v1297 = vadd.f32 %v1268, %v1296
      %1298 = vmatmul.f32.gmra.mxu0 %v1205
      %v1299 = vpop.f32.mrf.mxu0
      %v1300 = vadd.f32 %v1271, %v1299
      %1301 = vmatmul.f32.gmra.mxu0 %v1207
      %v1302 = vpop.f32.mrf.mxu0
      %v1303 = vadd.f32 %v1274, %v1302
      %1304 = vmatmul.f32.gmra.mxu0 %v1209
      %v1305 = vpop.f32.mrf.mxu0
      %v1306 = vadd.f32 %v1277, %v1305
      %1307 = vdwg.mxu0
      %1308 = vmatpush.xpose.msra.mxu0 0.0
      %1309 = vmatpush.xpose.msra.mxu0 0.0
      %1310 = vmatpush.xpose.msra.mxu0 0.0
      %1311 = vmatpush.xpose.msra.mxu0 0.0
      %1312 = vmatpush.xpose.msra.mxu0 0.0
      %1313 = vmatpush.xpose.msra.mxu0 0.0
      %1314 = vmatpush.xpose.msra.mxu0 0.0
      %1315 = vmatpush.xpose.msra.mxu0 0.0
      %1316 = vmatpush.xpose.msra.mxu0 0.0
      %1317 = vmatpush.xpose.msra.mxu0 0.0
      %1318 = vmatpush.xpose.msra.mxu0 0.0
      %1319 = vmatpush.xpose.msra.mxu0 0.0
      %1320 = vmatpush.xpose.msra.mxu0 0.0
      %1321 = vmatpush.xpose.msra.mxu0 0.0
      %1322 = vmatpush.xpose.msra.mxu0 %v390
      %1323 = vmatpush.xpose.msra.mxu0 %v388
      %1324 = vmatmul.f32.gmra.mxu0 %v1202
      %v1325 = vpop.f32.mrf.mxu0
      %v1326 = vadd.f32 0.0, %v1325
      %1327 = vmatmul.f32.gmra.mxu0 %v1204
      %v1328 = vpop.f32.mrf.mxu0
      %v1329 = vadd.f32 0.0, %v1328
      %1330 = vmatmul.f32.gmra.mxu0 %v1206
      %v1331 = vpop.f32.mrf.mxu0
      %v1332 = vadd.f32 0.0, %v1331
      %1333 = vmatmul.f32.gmra.mxu0 %v1208
      %v1334 = vpop.f32.mrf.mxu0
      %v1335 = vadd.f32 0.0, %v1334
      %1336 = vdwg.mxu0
      %1337 = vmatpush.xpose.msra.mxu0 0.0
      %1338 = vmatpush.xpose.msra.mxu0 0.0
      %1339 = vmatpush.xpose.msra.mxu0 0.0
      %1340 = vmatpush.xpose.msra.mxu0 0.0
      %1341 = vmatpush.xpose.msra.mxu0 0.0
      %1342 = vmatpush.xpose.msra.mxu0 0.0
      %1343 = vmatpush.xpose.msra.mxu0 0.0
      %1344 = vmatpush.xpose.msra.mxu0 0.0
      %1345 = vmatpush.xpose.msra.mxu0 0.0
      %1346 = vmatpush.xpose.msra.mxu0 0.0
      %1347 = vmatpush.xpose.msra.mxu0 0.0
      %1348 = vmatpush.xpose.msra.mxu0 0.0
      %1349 = vmatpush.xpose.msra.mxu0 0.0
      %1350 = vmatpush.xpose.msra.mxu0 0.0
      %1351 = vmatpush.xpose.msra.mxu0 %v391
      %1352 = vmatpush.xpose.msra.mxu0 %v389
      %1353 = vmatmul.f32.gmra.mxu0 %v1203
      %v1354 = vpop.f32.mrf.mxu0
      %v1355 = vadd.f32 %v1326, %v1354
      %1356 = vmatmul.f32.gmra.mxu0 %v1205
      %v1357 = vpop.f32.mrf.mxu0
      %v1358 = vadd.f32 %v1329, %v1357
      %1359 = vmatmul.f32.gmra.mxu0 %v1207
      %v1360 = vpop.f32.mrf.mxu0
      %v1361 = vadd.f32 %v1332, %v1360
      %1362 = vmatmul.f32.gmra.mxu0 %v1209
      %v1363 = vpop.f32.mrf.mxu0
      %v1364 = vadd.f32 %v1335, %v1363
      %1365 = vdwg.mxu0
      %1366 = vmatpush.xpose.msra.mxu0 0.0
      %1367 = vmatpush.xpose.msra.mxu0 0.0
      %1368 = vmatpush.xpose.msra.mxu0 0.0
      %1369 = vmatpush.xpose.msra.mxu0 0.0
      %1370 = vmatpush.xpose.msra.mxu0 0.0
      %1371 = vmatpush.xpose.msra.mxu0 0.0
      %1372 = vmatpush.xpose.msra.mxu0 0.0
      %1373 = vmatpush.xpose.msra.mxu0 0.0
      %1374 = vmatpush.xpose.msra.mxu0 0.0
      %1375 = vmatpush.xpose.msra.mxu0 0.0
      %1376 = vmatpush.xpose.msra.mxu0 0.0
      %1377 = vmatpush.xpose.msra.mxu0 0.0
      %1378 = vmatpush.xpose.msra.mxu0 0.0
      %1379 = vmatpush.xpose.msra.mxu0 0.0
      %1380 = vmatpush.xpose.msra.mxu0 %v394
      %1381 = vmatpush.xpose.msra.mxu0 %v392
      %1382 = vmatmul.f32.gmra.mxu0 %v1202
      %v1383 = vpop.f32.mrf.mxu0
      %v1384 = vadd.f32 0.0, %v1383
      %1385 = vmatmul.f32.gmra.mxu0 %v1204
      %v1386 = vpop.f32.mrf.mxu0
      %v1387 = vadd.f32 0.0, %v1386
      %1388 = vmatmul.f32.gmra.mxu0 %v1206
      %v1389 = vpop.f32.mrf.mxu0
      %v1390 = vadd.f32 0.0, %v1389
      %1391 = vmatmul.f32.gmra.mxu0 %v1208
      %v1392 = vpop.f32.mrf.mxu0
      %v1393 = vadd.f32 0.0, %v1392
      %1394 = vdwg.mxu0
      %1395 = vmatpush.xpose.msra.mxu0 0.0
      %1396 = vmatpush.xpose.msra.mxu0 0.0
      %1397 = vmatpush.xpose.msra.mxu0 0.0
      %1398 = vmatpush.xpose.msra.mxu0 0.0
      %1399 = vmatpush.xpose.msra.mxu0 0.0
      %1400 = vmatpush.xpose.msra.mxu0 0.0
      %1401 = vmatpush.xpose.msra.mxu0 0.0
      %1402 = vmatpush.xpose.msra.mxu0 0.0
      %1403 = vmatpush.xpose.msra.mxu0 0.0
      %1404 = vmatpush.xpose.msra.mxu0 0.0
      %1405 = vmatpush.xpose.msra.mxu0 0.0
      %1406 = vmatpush.xpose.msra.mxu0 0.0
      %1407 = vmatpush.xpose.msra.mxu0 0.0
      %1408 = vmatpush.xpose.msra.mxu0 0.0
      %1409 = vmatpush.xpose.msra.mxu0 %v395
      %1410 = vmatpush.xpose.msra.mxu0 %v393
      %1411 = vmatmul.f32.gmra.mxu0 %v1203
      %v1412 = vpop.f32.mrf.mxu0
      %v1413 = vadd.f32 %v1384, %v1412
      %1414 = vmatmul.f32.gmra.mxu0 %v1205
      %v1415 = vpop.f32.mrf.mxu0
      %v1416 = vadd.f32 %v1387, %v1415
      %1417 = vmatmul.f32.gmra.mxu0 %v1207
      %v1418 = vpop.f32.mrf.mxu0
      %v1419 = vadd.f32 %v1390, %v1418
      %1420 = vmatmul.f32.gmra.mxu0 %v1209
      %v1421 = vpop.f32.mrf.mxu0
      %v1422 = vadd.f32 %v1393, %v1421
      %1423 = vdwg.mxu0
      %v1424 = vsel %vm967, %v1297, 0.0
      %1425 = vadd.xlane.f32.xlu0 %v1424
      %v1426 = vpop.xlane.xlu0 %1425
      %v1427 = vsel %vm967, %v1300, 0.0
      %1428 = vadd.xlane.f32.xlu0 %v1427
      %v1429 = vpop.xlane.xlu0 %1428
      %v1430 = vsel %vm967, %v1303, 0.0
      %1431 = vadd.xlane.f32.xlu0 %v1430
      %v1432 = vpop.xlane.xlu0 %1431
      %v1433 = vsel %vm967, %v1306, 0.0
      %1434 = vadd.xlane.f32.xlu0 %v1433
      %v1435 = vpop.xlane.xlu0 %1434
      %v1436 = vmul.f32 %v1426, 0.0625
      %v1437 = vmul.f32 %v1429, 0.0625
      %v1438 = vmul.f32 %v1432, 0.0625
      %v1439 = vmul.f32 %v1435, 0.0625
      %v1440 = vsel %vm967, %v1355, 0.0
      %1441 = vadd.xlane.f32.xlu0 %v1440
      %v1442 = vpop.xlane.xlu0 %1441
      %v1443 = vsel %vm967, %v1358, 0.0
      %1444 = vadd.xlane.f32.xlu0 %v1443
      %v1445 = vpop.xlane.xlu0 %1444
      %v1446 = vsel %vm967, %v1361, 0.0
      %1447 = vadd.xlane.f32.xlu0 %v1446
      %v1448 = vpop.xlane.xlu0 %1447
      %v1449 = vsel %vm967, %v1364, 0.0
      %1450 = vadd.xlane.f32.xlu0 %v1449
      %v1451 = vpop.xlane.xlu0 %1450
      %v1452 = vmul.f32 %v1442, 0.00390625
      %v1453 = vmul.f32 %v1445, 0.00390625
      %v1454 = vmul.f32 %v1448, 0.00390625
      %v1455 = vmul.f32 %v1451, 0.00390625
      %v1456 = vmul.f32 %v1355, 0.0625
      %v1457 = vmul.f32 %v1358, 0.0625
      %v1458 = vmul.f32 %v1361, 0.0625
      %v1459 = vmul.f32 %v1364, 0.0625
      %v1460 = vmul.f32 %v1413, 0.0625
      %v1461 = vmul.f32 %v1416, 0.0625
      %v1462 = vmul.f32 %v1419, 0.0625
      %v1463 = vmul.f32 %v1422, 0.0625
      %vm1464 = vcmask 261120
      %v1466 = vsel %vm1464, %v1210, 0
      %v1469 = vsel %vm1464, %v1211, 0
      %v1472 = vsel %vm1464, %v1212, 0
      %v1475 = vsel %vm1464, %v1213, 0
      %v1478 = vsel %vm1464, %v1214, 0
      %v1481 = vsel %vm1464, %v1215, 0
      %v1484 = vsel %vm1464, %v1216, 0
      %v1487 = vsel %vm1464, %v1217, 0
      %1489 = vmatpush.msra.mxu0 0.0
      %1490 = vmatpush.msra.mxu0 0.0
      %1491 = vmatpush.msra.mxu0 0.0
      %1492 = vmatpush.msra.mxu0 0.0
      %1493 = vmatpush.msra.mxu0 0.0
      %1494 = vmatpush.msra.mxu0 0.0
      %1495 = vmatpush.msra.mxu0 0.0
      %1496 = vmatpush.msra.mxu0 0.0
      %1497 = vmatpush.msra.mxu0 0.0
      %1498 = vmatpush.msra.mxu0 0.0
      %1499 = vmatpush.msra.mxu0 0.0
      %1500 = vmatpush.msra.mxu0 0.0
      %1501 = vmatpush.msra.mxu0 %v1208
      %1502 = vmatpush.msra.mxu0 %v1206
      %1503 = vmatpush.msra.mxu0 %v1204
      %1504 = vmatpush.msra.mxu0 %v1202
      %1505 = vmatmul.f32.gmra.mxu0 %v1466
      %v1506 = vpop.f32.mrf.mxu0
      %v1507 = vadd.f32 0.0, %v1506
      %1508 = vmatmul.f32.gmra.mxu0 %v1469
      %v1509 = vpop.f32.mrf.mxu0
      %v1510 = vadd.f32 0.0, %v1509
      %1511 = vmatmul.f32.gmra.mxu0 %v1472
      %v1512 = vpop.f32.mrf.mxu0
      %v1513 = vadd.f32 0.0, %v1512
      %1514 = vmatmul.f32.gmra.mxu0 %v1475
      %v1515 = vpop.f32.mrf.mxu0
      %v1516 = vadd.f32 0.0, %v1515
      %1517 = vmatmul.f32.gmra.mxu0 %v1478
      %v1518 = vpop.f32.mrf.mxu0
      %v1519 = vadd.f32 0.0, %v1518
      %1520 = vmatmul.f32.gmra.mxu0 %v1481
      %v1521 = vpop.f32.mrf.mxu0
      %v1522 = vadd.f32 0.0, %v1521
      %1523 = vmatmul.f32.gmra.mxu0 %v1484
      %v1524 = vpop.f32.mrf.mxu0
      %v1525 = vadd.f32 0.0, %v1524
      %1526 = vmatmul.f32.gmra.mxu0 %v1487
      %v1527 = vpop.f32.mrf.mxu0
      %v1528 = vadd.f32 0.0, %v1527
      %1529 = vdwg.mxu0
      %1530 = vmatpush.msra.mxu0 0.0
      %1531 = vmatpush.msra.mxu0 0.0
      %1532 = vmatpush.msra.mxu0 0.0
      %1533 = vmatpush.msra.mxu0 0.0
      %1534 = vmatpush.msra.mxu0 0.0
      %1535 = vmatpush.msra.mxu0 0.0
      %1536 = vmatpush.msra.mxu0 0.0
      %1537 = vmatpush.msra.mxu0 0.0
      %1538 = vmatpush.msra.mxu0 0.0
      %1539 = vmatpush.msra.mxu0 0.0
      %1540 = vmatpush.msra.mxu0 0.0
      %1541 = vmatpush.msra.mxu0 0.0
      %1542 = vmatpush.msra.mxu0 %v1209
      %1543 = vmatpush.msra.mxu0 %v1207
      %1544 = vmatpush.msra.mxu0 %v1205
      %1545 = vmatpush.msra.mxu0 %v1203
      %1546 = vmatmul.f32.gmra.mxu0 %v1466
      %v1547 = vpop.f32.mrf.mxu0
      %v1548 = vadd.f32 0.0, %v1547
      %1549 = vmatmul.f32.gmra.mxu0 %v1469
      %v1550 = vpop.f32.mrf.mxu0
      %v1551 = vadd.f32 0.0, %v1550
      %1552 = vmatmul.f32.gmra.mxu0 %v1472
      %v1553 = vpop.f32.mrf.mxu0
      %v1554 = vadd.f32 0.0, %v1553
      %1555 = vmatmul.f32.gmra.mxu0 %v1475
      %v1556 = vpop.f32.mrf.mxu0
      %v1557 = vadd.f32 0.0, %v1556
      %1558 = vmatmul.f32.gmra.mxu0 %v1478
      %v1559 = vpop.f32.mrf.mxu0
      %v1560 = vadd.f32 0.0, %v1559
      %1561 = vmatmul.f32.gmra.mxu0 %v1481
      %v1562 = vpop.f32.mrf.mxu0
      %v1563 = vadd.f32 0.0, %v1562
      %1564 = vmatmul.f32.gmra.mxu0 %v1484
      %v1565 = vpop.f32.mrf.mxu0
      %v1566 = vadd.f32 0.0, %v1565
      %1567 = vmatmul.f32.gmra.mxu0 %v1487
      %v1568 = vpop.f32.mrf.mxu0
      %v1569 = vadd.f32 0.0, %v1568
      %1570 = vdwg.mxu0
      %v1572 = vsel %vm1464, %v1219, 0
      %v1575 = vsel %vm1464, %v1221, 0
      %v1578 = vsel %vm1464, %v1223, 0
      %v1581 = vsel %vm1464, %v1225, 0
      %v1584 = vsel %vm1464, %v1227, 0
      %v1587 = vsel %vm1464, %v1229, 0
      %v1590 = vsel %vm1464, %v1231, 0
      %v1593 = vsel %vm1464, %v1233, 0
      %v1596 = vsel %vm1464, %v1235, 0
      %v1599 = vsel %vm1464, %v1237, 0
      %v1602 = vsel %vm1464, %v1239, 0
      %v1605 = vsel %vm1464, %v1241, 0
      %1607 = vmatpush.msra.mxu0 %v1439
      %1608 = vmatpush.msra.mxu0 %v1438
      %1609 = vmatpush.msra.mxu0 %v1437
      %1610 = vmatpush.msra.mxu0 %v1436
      %1611 = vmatpush.msra.mxu0 %v1463
      %1612 = vmatpush.msra.mxu0 %v1462
      %1613 = vmatpush.msra.mxu0 %v1461
      %1614 = vmatpush.msra.mxu0 %v1460
      %1615 = vmatpush.msra.mxu0 %v1459
      %1616 = vmatpush.msra.mxu0 %v1458
      %1617 = vmatpush.msra.mxu0 %v1457
      %1618 = vmatpush.msra.mxu0 %v1456
      %1619 = vmatpush.msra.mxu0 %v1306
      %1620 = vmatpush.msra.mxu0 %v1303
      %1621 = vmatpush.msra.mxu0 %v1300
      %1622 = vmatpush.msra.mxu0 %v1297
      %1623 = vmatmul.f32.gmra.mxu0 %v1218
      %v1624 = vpop.f32.mrf.mxu0
      %v1625 = vadd.f32 0.0, %v1624
      %1626 = vmatmul.f32.gmra.mxu0 %v1220
      %v1627 = vpop.f32.mrf.mxu0
      %v1628 = vadd.f32 0.0, %v1627
      %1629 = vmatmul.f32.gmra.mxu0 %v1222
      %v1630 = vpop.f32.mrf.mxu0
      %v1631 = vadd.f32 0.0, %v1630
      %1632 = vmatmul.f32.gmra.mxu0 %v1224
      %v1633 = vpop.f32.mrf.mxu0
      %v1634 = vadd.f32 0.0, %v1633
      %1635 = vmatmul.f32.gmra.mxu0 %v1226
      %v1636 = vpop.f32.mrf.mxu0
      %v1637 = vadd.f32 0.0, %v1636
      %1638 = vmatmul.f32.gmra.mxu0 %v1228
      %v1639 = vpop.f32.mrf.mxu0
      %v1640 = vadd.f32 0.0, %v1639
      %1641 = vmatmul.f32.gmra.mxu0 %v1230
      %v1642 = vpop.f32.mrf.mxu0
      %v1643 = vadd.f32 0.0, %v1642
      %1644 = vmatmul.f32.gmra.mxu0 %v1232
      %v1645 = vpop.f32.mrf.mxu0
      %v1646 = vadd.f32 0.0, %v1645
      %1647 = vmatmul.f32.gmra.mxu0 %v1234
      %v1648 = vpop.f32.mrf.mxu0
      %v1649 = vadd.f32 0.0, %v1648
      %1650 = vmatmul.f32.gmra.mxu0 %v1236
      %v1651 = vpop.f32.mrf.mxu0
      %v1652 = vadd.f32 0.0, %v1651
      %1653 = vmatmul.f32.gmra.mxu0 %v1238
      %v1654 = vpop.f32.mrf.mxu0
      %v1655 = vadd.f32 0.0, %v1654
      %1656 = vmatmul.f32.gmra.mxu0 %v1240
      %v1657 = vpop.f32.mrf.mxu0
      %v1658 = vadd.f32 0.0, %v1657
      %1659 = vdwg.mxu0
      %1660 = vmatpush.msra.mxu0 0.0
      %1661 = vmatpush.msra.mxu0 0.0
      %1662 = vmatpush.msra.mxu0 0.0
      %1663 = vmatpush.msra.mxu0 0.0
      %1664 = vmatpush.msra.mxu0 0.0
      %1665 = vmatpush.msra.mxu0 0.0
      %1666 = vmatpush.msra.mxu0 0.0
      %1667 = vmatpush.msra.mxu0 0.0
      %1668 = vmatpush.msra.mxu0 0.0
      %1669 = vmatpush.msra.mxu0 0.0
      %1670 = vmatpush.msra.mxu0 0.0
      %1671 = vmatpush.msra.mxu0 0.0
      %1672 = vmatpush.msra.mxu0 %v1455
      %1673 = vmatpush.msra.mxu0 %v1454
      %1674 = vmatpush.msra.mxu0 %v1453
      %1675 = vmatpush.msra.mxu0 %v1452
      %1676 = vmatmul.f32.gmra.mxu0 %v1572
      %v1677 = vpop.f32.mrf.mxu0
      %v1678 = vadd.f32 %v1625, %v1677
      %1679 = vmatmul.f32.gmra.mxu0 %v1575
      %v1680 = vpop.f32.mrf.mxu0
      %v1681 = vadd.f32 %v1628, %v1680
      %1682 = vmatmul.f32.gmra.mxu0 %v1578
      %v1683 = vpop.f32.mrf.mxu0
      %v1684 = vadd.f32 %v1631, %v1683
      %1685 = vmatmul.f32.gmra.mxu0 %v1581
      %v1686 = vpop.f32.mrf.mxu0
      %v1687 = vadd.f32 %v1634, %v1686
      %1688 = vmatmul.f32.gmra.mxu0 %v1584
      %v1689 = vpop.f32.mrf.mxu0
      %v1690 = vadd.f32 %v1637, %v1689
      %1691 = vmatmul.f32.gmra.mxu0 %v1587
      %v1692 = vpop.f32.mrf.mxu0
      %v1693 = vadd.f32 %v1640, %v1692
      %1694 = vmatmul.f32.gmra.mxu0 %v1590
      %v1695 = vpop.f32.mrf.mxu0
      %v1696 = vadd.f32 %v1643, %v1695
      %1697 = vmatmul.f32.gmra.mxu0 %v1593
      %v1698 = vpop.f32.mrf.mxu0
      %v1699 = vadd.f32 %v1646, %v1698
      %1700 = vmatmul.f32.gmra.mxu0 %v1596
      %v1701 = vpop.f32.mrf.mxu0
      %v1702 = vadd.f32 %v1649, %v1701
      %1703 = vmatmul.f32.gmra.mxu0 %v1599
      %v1704 = vpop.f32.mrf.mxu0
      %v1705 = vadd.f32 %v1652, %v1704
      %1706 = vmatmul.f32.gmra.mxu0 %v1602
      %v1707 = vpop.f32.mrf.mxu0
      %v1708 = vadd.f32 %v1655, %v1707
      %1709 = vmatmul.f32.gmra.mxu0 %v1605
      %v1710 = vpop.f32.mrf.mxu0
      %v1711 = vadd.f32 %v1658, %v1710
      %1712 = vdwg.mxu0
      %1714 = vset.pattern.permute.xlu0 0
      %1715 = vperm.xlu0 %1714, %v1242
      %v1716 = vpop.permute.xlu0 %1715
      %1719 = vset.pattern.permute.xlu0 0
      %1720 = vperm.xlu0 %1719, %v1243
      %v1721 = vpop.permute.xlu0 %1720
      %1724 = vset.pattern.permute.xlu0 0
      %1725 = vperm.xlu0 %1724, %v1244
      %v1726 = vpop.permute.xlu0 %1725
      %1729 = vset.pattern.permute.xlu0 0
      %1730 = vperm.xlu0 %1729, %v1245
      %v1731 = vpop.permute.xlu0 %1730
      %v1733 = vadd.f32 %v1678, %v1716
      %v1734 = vadd.f32 %v1681, %v1721
      %v1735 = vadd.f32 %v1684, %v1726
      %v1736 = vadd.f32 %v1687, %v1731
      %1738 = vset.pattern.permute.xlu0 0
      %1739 = vperm.xlu0 %1738, %v1246
      %v1740 = vpop.permute.xlu0 %1739
      %1743 = vset.pattern.permute.xlu0 0
      %1744 = vperm.xlu0 %1743, %v1247
      %v1745 = vpop.permute.xlu0 %1744
      %1748 = vset.pattern.permute.xlu0 0
      %1749 = vperm.xlu0 %1748, %v1248
      %v1750 = vpop.permute.xlu0 %1749
      %1753 = vset.pattern.permute.xlu0 0
      %1754 = vperm.xlu0 %1753, %v1249
      %v1755 = vpop.permute.xlu0 %1754
      %v1757 = vadd.f32 %v1690, %v1740
      %v1758 = vadd.f32 %v1693, %v1745
      %v1759 = vadd.f32 %v1696, %v1750
      %v1760 = vadd.f32 %v1699, %v1755
      %1761 = vmatpush.msra.mxu0 %v426
      %1762 = vmatpush.msra.mxu0 %v424
      %1763 = vmatpush.msra.mxu0 %v422
      %1764 = vmatpush.msra.mxu0 %v420
      %1765 = vmatpush.msra.mxu0 %v418
      %1766 = vmatpush.msra.mxu0 %v416
      %1767 = vmatpush.msra.mxu0 %v414
      %1768 = vmatpush.msra.mxu0 %v412
      %1769 = vmatpush.msra.mxu0 %v410
      %1770 = vmatpush.msra.mxu0 %v408
      %1771 = vmatpush.msra.mxu0 %v406
      %1772 = vmatpush.msra.mxu0 %v404
      %1773 = vmatpush.msra.mxu0 %v402
      %1774 = vmatpush.msra.mxu0 %v400
      %1775 = vmatpush.msra.mxu0 %v398
      %1776 = vmatpush.msra.mxu0 %v396
      %1777 = vmatmul.f32.gmra.mxu0 %v1519
      %v1778 = vpop.f32.mrf.mxu0
      %v1779 = vadd.f32 0.0, %v1778
      %1780 = vmatmul.f32.gmra.mxu0 %v1522
      %v1781 = vpop.f32.mrf.mxu0
      %v1782 = vadd.f32 0.0, %v1781
      %1783 = vmatmul.f32.gmra.mxu0 %v1525
      %v1784 = vpop.f32.mrf.mxu0
      %v1785 = vadd.f32 0.0, %v1784
      %1786 = vmatmul.f32.gmra.mxu0 %v1528
      %v1787 = vpop.f32.mrf.mxu0
      %v1788 = vadd.f32 0.0, %v1787
      %1789 = vdwg.mxu0
      %1790 = vmatpush.msra.mxu0 %v458
      %1791 = vmatpush.msra.mxu0 %v456
      %1792 = vmatpush.msra.mxu0 %v454
      %1793 = vmatpush.msra.mxu0 %v452
      %1794 = vmatpush.msra.mxu0 %v450
      %1795 = vmatpush.msra.mxu0 %v448
      %1796 = vmatpush.msra.mxu0 %v446
      %1797 = vmatpush.msra.mxu0 %v444
      %1798 = vmatpush.msra.mxu0 %v442
      %1799 = vmatpush.msra.mxu0 %v440
      %1800 = vmatpush.msra.mxu0 %v438
      %1801 = vmatpush.msra.mxu0 %v436
      %1802 = vmatpush.msra.mxu0 %v434
      %1803 = vmatpush.msra.mxu0 %v432
      %1804 = vmatpush.msra.mxu0 %v430
      %1805 = vmatpush.msra.mxu0 %v428
      %1806 = vmatmul.f32.gmra.mxu0 %v1560
      %v1807 = vpop.f32.mrf.mxu0
      %v1808 = vadd.f32 %v1779, %v1807
      %1809 = vmatmul.f32.gmra.mxu0 %v1563
      %v1810 = vpop.f32.mrf.mxu0
      %v1811 = vadd.f32 %v1782, %v1810
      %1812 = vmatmul.f32.gmra.mxu0 %v1566
      %v1813 = vpop.f32.mrf.mxu0
      %v1814 = vadd.f32 %v1785, %v1813
      %1815 = vmatmul.f32.gmra.mxu0 %v1569
      %v1816 = vpop.f32.mrf.mxu0
      %v1817 = vadd.f32 %v1788, %v1816
      %1818 = vdwg.mxu0
      %1819 = vmatpush.msra.mxu0 %v427
      %1820 = vmatpush.msra.mxu0 %v425
      %1821 = vmatpush.msra.mxu0 %v423
      %1822 = vmatpush.msra.mxu0 %v421
      %1823 = vmatpush.msra.mxu0 %v419
      %1824 = vmatpush.msra.mxu0 %v417
      %1825 = vmatpush.msra.mxu0 %v415
      %1826 = vmatpush.msra.mxu0 %v413
      %1827 = vmatpush.msra.mxu0 %v411
      %1828 = vmatpush.msra.mxu0 %v409
      %1829 = vmatpush.msra.mxu0 %v407
      %1830 = vmatpush.msra.mxu0 %v405
      %1831 = vmatpush.msra.mxu0 %v403
      %1832 = vmatpush.msra.mxu0 %v401
      %1833 = vmatpush.msra.mxu0 %v399
      %1834 = vmatpush.msra.mxu0 %v397
      %1835 = vmatmul.f32.gmra.mxu0 %v1519
      %v1836 = vpop.f32.mrf.mxu0
      %v1837 = vadd.f32 0.0, %v1836
      %1838 = vmatmul.f32.gmra.mxu0 %v1522
      %v1839 = vpop.f32.mrf.mxu0
      %v1840 = vadd.f32 0.0, %v1839
      %1841 = vmatmul.f32.gmra.mxu0 %v1525
      %v1842 = vpop.f32.mrf.mxu0
      %v1843 = vadd.f32 0.0, %v1842
      %1844 = vmatmul.f32.gmra.mxu0 %v1528
      %v1845 = vpop.f32.mrf.mxu0
      %v1846 = vadd.f32 0.0, %v1845
      %1847 = vdwg.mxu0
      %1848 = vmatpush.msra.mxu0 %v459
      %1849 = vmatpush.msra.mxu0 %v457
      %1850 = vmatpush.msra.mxu0 %v455
      %1851 = vmatpush.msra.mxu0 %v453
      %1852 = vmatpush.msra.mxu0 %v451
      %1853 = vmatpush.msra.mxu0 %v449
      %1854 = vmatpush.msra.mxu0 %v447
      %1855 = vmatpush.msra.mxu0 %v445
      %1856 = vmatpush.msra.mxu0 %v443
      %1857 = vmatpush.msra.mxu0 %v441
      %1858 = vmatpush.msra.mxu0 %v439
      %1859 = vmatpush.msra.mxu0 %v437
      %1860 = vmatpush.msra.mxu0 %v435
      %1861 = vmatpush.msra.mxu0 %v433
      %1862 = vmatpush.msra.mxu0 %v431
      %1863 = vmatpush.msra.mxu0 %v429
      %1864 = vmatmul.f32.gmra.mxu0 %v1560
      %v1865 = vpop.f32.mrf.mxu0
      %v1866 = vadd.f32 %v1837, %v1865
      %1867 = vmatmul.f32.gmra.mxu0 %v1563
      %v1868 = vpop.f32.mrf.mxu0
      %v1869 = vadd.f32 %v1840, %v1868
      %1870 = vmatmul.f32.gmra.mxu0 %v1566
      %v1871 = vpop.f32.mrf.mxu0
      %v1872 = vadd.f32 %v1843, %v1871
      %1873 = vmatmul.f32.gmra.mxu0 %v1569
      %v1874 = vpop.f32.mrf.mxu0
      %v1875 = vadd.f32 %v1846, %v1874
      %1876 = vdwg.mxu0
      %v1877 = vadd.f32 %v1507, %v1808
      %v1878 = vadd.f32 %v1548, %v1866
      %v1879 = vadd.f32 %v1510, %v1811
      %v1880 = vadd.f32 %v1551, %v1869
      %v1881 = vadd.f32 %v1513, %v1814
      %v1882 = vadd.f32 %v1554, %v1872
      %v1883 = vadd.f32 %v1516, %v1817
      %v1884 = vadd.f32 %v1557, %v1875
      %v1886 = vsel %vm967, %v1733, 0
      %v1889 = vsel %vm967, %v1734, 0
      %v1892 = vsel %vm967, %v1735, 0
      %v1895 = vsel %vm967, %v1736, 0
      %1897 = vmatpush.msra.mxu0 0.0
      %1898 = vmatpush.msra.mxu0 0.0
      %1899 = vmatpush.msra.mxu0 0.0
      %1900 = vmatpush.msra.mxu0 0.0
      %1901 = vmatpush.msra.mxu0 0.0
      %1902 = vmatpush.msra.mxu0 0.0
      %1903 = vmatpush.msra.mxu0 0.0
      %1904 = vmatpush.msra.mxu0 0.0
      %1905 = vmatpush.msra.mxu0 0.0
      %1906 = vmatpush.msra.mxu0 0.0
      %1907 = vmatpush.msra.mxu0 0.0
      %1908 = vmatpush.msra.mxu0 0.0
      %1909 = vmatpush.msra.mxu0 0.0
      %1910 = vmatpush.msra.mxu0 0.0
      %1911 = vmatpush.msra.mxu0 %v386
      %1912 = vmatpush.msra.mxu0 %v384
      %1913 = vmatmul.f32.gmra.mxu0 %v1886
      %v1914 = vpop.f32.mrf.mxu0
      %v1915 = vadd.f32 0.0, %v1914
      %1916 = vmatmul.f32.gmra.mxu0 %v1889
      %v1917 = vpop.f32.mrf.mxu0
      %v1918 = vadd.f32 0.0, %v1917
      %1919 = vmatmul.f32.gmra.mxu0 %v1892
      %v1920 = vpop.f32.mrf.mxu0
      %v1921 = vadd.f32 0.0, %v1920
      %1922 = vmatmul.f32.gmra.mxu0 %v1895
      %v1923 = vpop.f32.mrf.mxu0
      %v1924 = vadd.f32 0.0, %v1923
      %1925 = vdwg.mxu0
      %1926 = vmatpush.msra.mxu0 0.0
      %1927 = vmatpush.msra.mxu0 0.0
      %1928 = vmatpush.msra.mxu0 0.0
      %1929 = vmatpush.msra.mxu0 0.0
      %1930 = vmatpush.msra.mxu0 0.0
      %1931 = vmatpush.msra.mxu0 0.0
      %1932 = vmatpush.msra.mxu0 0.0
      %1933 = vmatpush.msra.mxu0 0.0
      %1934 = vmatpush.msra.mxu0 0.0
      %1935 = vmatpush.msra.mxu0 0.0
      %1936 = vmatpush.msra.mxu0 0.0
      %1937 = vmatpush.msra.mxu0 0.0
      %1938 = vmatpush.msra.mxu0 0.0
      %1939 = vmatpush.msra.mxu0 0.0
      %1940 = vmatpush.msra.mxu0 %v387
      %1941 = vmatpush.msra.mxu0 %v385
      %1942 = vmatmul.f32.gmra.mxu0 %v1886
      %v1943 = vpop.f32.mrf.mxu0
      %v1944 = vadd.f32 0.0, %v1943
      %1945 = vmatmul.f32.gmra.mxu0 %v1889
      %v1946 = vpop.f32.mrf.mxu0
      %v1947 = vadd.f32 0.0, %v1946
      %1948 = vmatmul.f32.gmra.mxu0 %v1892
      %v1949 = vpop.f32.mrf.mxu0
      %v1950 = vadd.f32 0.0, %v1949
      %1951 = vmatmul.f32.gmra.mxu0 %v1895
      %v1952 = vpop.f32.mrf.mxu0
      %v1953 = vadd.f32 0.0, %v1952
      %1954 = vdwg.mxu0
      %v1955 = vadd.f32 %v1877, %v1915
      %v1956 = vadd.f32 %v1878, %v1944
      %v1957 = vadd.f32 %v1879, %v1918
      %v1958 = vadd.f32 %v1880, %v1947
      %v1959 = vadd.f32 %v1881, %v1921
      %v1960 = vadd.f32 %v1882, %v1950
      %v1961 = vadd.f32 %v1883, %v1924
      %v1962 = vadd.f32 %v1884, %v1953
      %v1964 = vsel %vm967, %v1757, 0
      %v1967 = vsel %vm967, %v1758, 0
      %v1970 = vsel %vm967, %v1759, 0
      %v1973 = vsel %vm967, %v1760, 0
      %1975 = vmatpush.msra.mxu0 0.0
      %1976 = vmatpush.msra.mxu0 0.0
      %1977 = vmatpush.msra.mxu0 0.0
      %1978 = vmatpush.msra.mxu0 0.0
      %1979 = vmatpush.msra.mxu0 0.0
      %1980 = vmatpush.msra.mxu0 0.0
      %1981 = vmatpush.msra.mxu0 0.0
      %1982 = vmatpush.msra.mxu0 0.0
      %1983 = vmatpush.msra.mxu0 0.0
      %1984 = vmatpush.msra.mxu0 0.0
      %1985 = vmatpush.msra.mxu0 0.0
      %1986 = vmatpush.msra.mxu0 0.0
      %1987 = vmatpush.msra.mxu0 0.0
      %1988 = vmatpush.msra.mxu0 0.0
      %1989 = vmatpush.msra.mxu0 %v390
      %1990 = vmatpush.msra.mxu0 %v388
      %1991 = vmatmul.f32.gmra.mxu0 %v1964
      %v1992 = vpop.f32.mrf.mxu0
      %v1993 = vadd.f32 0.0, %v1992
      %1994 = vmatmul.f32.gmra.mxu0 %v1967
      %v1995 = vpop.f32.mrf.mxu0
      %v1996 = vadd.f32 0.0, %v1995
      %1997 = vmatmul.f32.gmra.mxu0 %v1970
      %v1998 = vpop.f32.mrf.mxu0
      %v1999 = vadd.f32 0.0, %v1998
      %2000 = vmatmul.f32.gmra.mxu0 %v1973
      %v2001 = vpop.f32.mrf.mxu0
      %v2002 = vadd.f32 0.0, %v2001
      %2003 = vdwg.mxu0
      %2004 = vmatpush.msra.mxu0 0.0
      %2005 = vmatpush.msra.mxu0 0.0
      %2006 = vmatpush.msra.mxu0 0.0
      %2007 = vmatpush.msra.mxu0 0.0
      %2008 = vmatpush.msra.mxu0 0.0
      %2009 = vmatpush.msra.mxu0 0.0
      %2010 = vmatpush.msra.mxu0 0.0
      %2011 = vmatpush.msra.mxu0 0.0
      %2012 = vmatpush.msra.mxu0 0.0
      %2013 = vmatpush.msra.mxu0 0.0
      %2014 = vmatpush.msra.mxu0 0.0
      %2015 = vmatpush.msra.mxu0 0.0
      %2016 = vmatpush.msra.mxu0 0.0
      %2017 = vmatpush.msra.mxu0 0.0
      %2018 = vmatpush.msra.mxu0 %v391
      %2019 = vmatpush.msra.mxu0 %v389
      %2020 = vmatmul.f32.gmra.mxu0 %v1964
      %v2021 = vpop.f32.mrf.mxu0
      %v2022 = vadd.f32 0.0, %v2021
      %2023 = vmatmul.f32.gmra.mxu0 %v1967
      %v2024 = vpop.f32.mrf.mxu0
      %v2025 = vadd.f32 0.0, %v2024
      %2026 = vmatmul.f32.gmra.mxu0 %v1970
      %v2027 = vpop.f32.mrf.mxu0
      %v2028 = vadd.f32 0.0, %v2027
      %2029 = vmatmul.f32.gmra.mxu0 %v1973
      %v2030 = vpop.f32.mrf.mxu0
      %v2031 = vadd.f32 0.0, %v2030
      %2032 = vdwg.mxu0
      %v2033 = vadd.f32 %v1955, %v1993
      %v2034 = vadd.f32 %v1956, %v2022
      %v2035 = vadd.f32 %v1957, %v1996
      %v2036 = vadd.f32 %v1958, %v2025
      %v2037 = vadd.f32 %v1959, %v1999
      %v2038 = vadd.f32 %v1960, %v2028
      %v2039 = vadd.f32 %v1961, %v2002
      %v2040 = vadd.f32 %v1962, %v2031
      %v2042 = vsel %vm967, %v1702, 0
      %v2045 = vsel %vm967, %v1705, 0
      %v2048 = vsel %vm967, %v1708, 0
      %v2051 = vsel %vm967, %v1711, 0
      %2053 = vmatpush.msra.mxu0 0.0
      %2054 = vmatpush.msra.mxu0 0.0
      %2055 = vmatpush.msra.mxu0 0.0
      %2056 = vmatpush.msra.mxu0 0.0
      %2057 = vmatpush.msra.mxu0 0.0
      %2058 = vmatpush.msra.mxu0 0.0
      %2059 = vmatpush.msra.mxu0 0.0
      %2060 = vmatpush.msra.mxu0 0.0
      %2061 = vmatpush.msra.mxu0 0.0
      %2062 = vmatpush.msra.mxu0 0.0
      %2063 = vmatpush.msra.mxu0 0.0
      %2064 = vmatpush.msra.mxu0 0.0
      %2065 = vmatpush.msra.mxu0 0.0
      %2066 = vmatpush.msra.mxu0 0.0
      %2067 = vmatpush.msra.mxu0 %v394
      %2068 = vmatpush.msra.mxu0 %v392
      %2069 = vmatmul.f32.gmra.mxu0 %v2042
      %v2070 = vpop.f32.mrf.mxu0
      %v2071 = vadd.f32 0.0, %v2070
      %2072 = vmatmul.f32.gmra.mxu0 %v2045
      %v2073 = vpop.f32.mrf.mxu0
      %v2074 = vadd.f32 0.0, %v2073
      %2075 = vmatmul.f32.gmra.mxu0 %v2048
      %v2076 = vpop.f32.mrf.mxu0
      %v2077 = vadd.f32 0.0, %v2076
      %2078 = vmatmul.f32.gmra.mxu0 %v2051
      %v2079 = vpop.f32.mrf.mxu0
      %v2080 = vadd.f32 0.0, %v2079
      %2081 = vdwg.mxu0
      %2082 = vmatpush.msra.mxu0 0.0
      %2083 = vmatpush.msra.mxu0 0.0
      %2084 = vmatpush.msra.mxu0 0.0
      %2085 = vmatpush.msra.mxu0 0.0
      %2086 = vmatpush.msra.mxu0 0.0
      %2087 = vmatpush.msra.mxu0 0.0
      %2088 = vmatpush.msra.mxu0 0.0
      %2089 = vmatpush.msra.mxu0 0.0
      %2090 = vmatpush.msra.mxu0 0.0
      %2091 = vmatpush.msra.mxu0 0.0
      %2092 = vmatpush.msra.mxu0 0.0
      %2093 = vmatpush.msra.mxu0 0.0
      %2094 = vmatpush.msra.mxu0 0.0
      %2095 = vmatpush.msra.mxu0 0.0
      %2096 = vmatpush.msra.mxu0 %v395
      %2097 = vmatpush.msra.mxu0 %v393
      %2098 = vmatmul.f32.gmra.mxu0 %v2042
      %v2099 = vpop.f32.mrf.mxu0
      %v2100 = vadd.f32 0.0, %v2099
      %2101 = vmatmul.f32.gmra.mxu0 %v2045
      %v2102 = vpop.f32.mrf.mxu0
      %v2103 = vadd.f32 0.0, %v2102
      %2104 = vmatmul.f32.gmra.mxu0 %v2048
      %v2105 = vpop.f32.mrf.mxu0
      %v2106 = vadd.f32 0.0, %v2105
      %2107 = vmatmul.f32.gmra.mxu0 %v2051
      %v2108 = vpop.f32.mrf.mxu0
      %v2109 = vadd.f32 0.0, %v2108
      %2110 = vdwg.mxu0
      %v2111 = vadd.f32 %v2033, %v2071
      %v2112 = vadd.f32 %v2034, %v2100
      %v2113 = vadd.f32 %v2035, %v2074
      %v2114 = vadd.f32 %v2036, %v2103
      %v2115 = vadd.f32 %v2037, %v2077
      %v2116 = vadd.f32 %v2038, %v2106
      %v2117 = vadd.f32 %v2039, %v2080
      %v2118 = vadd.f32 %v2040, %v2109
      %v2119 = vmax.f32 %v2111, 0.0
      %v2120 = vmax.f32 %v2112, 0.0
      %v2121 = vmax.f32 %v2113, 0.0
      %v2122 = vmax.f32 %v2114, 0.0
      %v2123 = vmax.f32 %v2115, 0.0
      %v2124 = vmax.f32 %v2116, 0.0
      %v2125 = vmax.f32 %v2117, 0.0
      %v2126 = vmax.f32 %v2118, 0.0
      %s2127 = scalar_lea.vmem %s6, 64
      %v2128 = vld [vmem:[%s2127] sm:$0xff]
      %v2129 = vld [vmem:[%s2127 + $0x8] sm:$0xff]
      %v2130 = vld [vmem:[%s2127 + $0x10] sm:$0xff]
      %v2131 = vld [vmem:[%s2127 + $0x18] sm:$0xff]
      %v2132 = vld [vmem:[%s2127 + $0x20] sm:$0xff]
      %v2133 = vld [vmem:[%s2127 + $0x28] sm:$0xff]
      %v2134 = vld [vmem:[%s2127 + $0x30] sm:$0xff]
      %v2135 = vld [vmem:[%s2127 + $0x38] sm:$0xff]
      %s2136 = scalar_lea.vmem %s7, 192
      %v2137 = vld [vmem:[%s2136] sm:$0xff]
      %v2138 = vld [vmem:[%s2136 + $0x8] sm:$0xff]
      %v2139 = vld [vmem:[%s2136 + $0x10] sm:$0xff]
      %v2140 = vld [vmem:[%s2136 + $0x18] sm:$0xff]
      %v2141 = vld [vmem:[%s2136 + $0x20] sm:$0xff]
      %v2142 = vld [vmem:[%s2136 + $0x28] sm:$0xff]
      %v2143 = vld [vmem:[%s2136 + $0x30] sm:$0xff]
      %v2144 = vld [vmem:[%s2136 + $0x38] sm:$0xff]
      %v2145 = vld [vmem:[%s2136 + $0x40] sm:$0xff]
      %v2146 = vld [vmem:[%s2136 + $0x48] sm:$0xff]
      %v2147 = vld [vmem:[%s2136 + $0x50] sm:$0xff]
      %v2148 = vld [vmem:[%s2136 + $0x58] sm:$0xff]
      %v2149 = vld [vmem:[%s2136 + $0x60] sm:$0xff]
      %v2150 = vld [vmem:[%s2136 + $0x68] sm:$0xff]
      %v2151 = vld [vmem:[%s2136 + $0x70] sm:$0xff]
      %v2152 = vld [vmem:[%s2136 + $0x78] sm:$0xff]
      %v2153 = vld [vmem:[%s2136 + $0x80] sm:$0xff]
      %v2154 = vld [vmem:[%s2136 + $0x88] sm:$0xff]
      %v2155 = vld [vmem:[%s2136 + $0x90] sm:$0xff]
      %v2156 = vld [vmem:[%s2136 + $0x98] sm:$0xff]
      %v2157 = vld [vmem:[%s2136 + $0xa0] sm:$0xff]
      %v2158 = vld [vmem:[%s2136 + $0xa8] sm:$0xff]
      %v2159 = vld [vmem:[%s2136 + $0xb0] sm:$0xff]
      %v2160 = vld [vmem:[%s2136 + $0xb8] sm:$0xff]
      %s2161 = scalar_lea.vmem %s8, 64
      %v2162 = vld [vmem:[%s2161] sm:$0xff]
      %v2163 = vld [vmem:[%s2161 + $0x8] sm:$0xff]
      %v2164 = vld [vmem:[%s2161 + $0x10] sm:$0xff]
      %v2165 = vld [vmem:[%s2161 + $0x18] sm:$0xff]
      %v2166 = vld [vmem:[%s2161 + $0x20] sm:$0xff]
      %v2167 = vld [vmem:[%s2161 + $0x28] sm:$0xff]
      %v2168 = vld [vmem:[%s2161 + $0x30] sm:$0xff]
      %v2169 = vld [vmem:[%s2161 + $0x38] sm:$0xff]
      %2170 = vmatpush.xpose.msra.mxu0 0.0
      %2171 = vmatpush.xpose.msra.mxu0 0.0
      %2172 = vmatpush.xpose.msra.mxu0 0.0
      %2173 = vmatpush.xpose.msra.mxu0 0.0
      %2174 = vmatpush.xpose.msra.mxu0 0.0
      %2175 = vmatpush.xpose.msra.mxu0 0.0
      %2176 = vmatpush.xpose.msra.mxu0 0.0
      %2177 = vmatpush.xpose.msra.mxu0 0.0
      %2178 = vmatpush.xpose.msra.mxu0 0.0
      %2179 = vmatpush.xpose.msra.mxu0 0.0
      %2180 = vmatpush.xpose.msra.mxu0 0.0
      %2181 = vmatpush.xpose.msra.mxu0 0.0
      %2182 = vmatpush.xpose.msra.mxu0 0.0
      %2183 = vmatpush.xpose.msra.mxu0 0.0
      %2184 = vmatpush.xpose.msra.mxu0 %v386
      %2185 = vmatpush.xpose.msra.mxu0 %v384
      %2186 = vmatmul.f32.gmra.mxu0 %v2119
      %v2187 = vpop.f32.mrf.mxu0
      %v2188 = vadd.f32 0.0, %v2187
      %2189 = vmatmul.f32.gmra.mxu0 %v2121
      %v2190 = vpop.f32.mrf.mxu0
      %v2191 = vadd.f32 0.0, %v2190
      %2192 = vmatmul.f32.gmra.mxu0 %v2123
      %v2193 = vpop.f32.mrf.mxu0
      %v2194 = vadd.f32 0.0, %v2193
      %2195 = vmatmul.f32.gmra.mxu0 %v2125
      %v2196 = vpop.f32.mrf.mxu0
      %v2197 = vadd.f32 0.0, %v2196
      %2198 = vdwg.mxu0
      %2199 = vmatpush.xpose.msra.mxu0 0.0
      %2200 = vmatpush.xpose.msra.mxu0 0.0
      %2201 = vmatpush.xpose.msra.mxu0 0.0
      %2202 = vmatpush.xpose.msra.mxu0 0.0
      %2203 = vmatpush.xpose.msra.mxu0 0.0
      %2204 = vmatpush.xpose.msra.mxu0 0.0
      %2205 = vmatpush.xpose.msra.mxu0 0.0
      %2206 = vmatpush.xpose.msra.mxu0 0.0
      %2207 = vmatpush.xpose.msra.mxu0 0.0
      %2208 = vmatpush.xpose.msra.mxu0 0.0
      %2209 = vmatpush.xpose.msra.mxu0 0.0
      %2210 = vmatpush.xpose.msra.mxu0 0.0
      %2211 = vmatpush.xpose.msra.mxu0 0.0
      %2212 = vmatpush.xpose.msra.mxu0 0.0
      %2213 = vmatpush.xpose.msra.mxu0 %v387
      %2214 = vmatpush.xpose.msra.mxu0 %v385
      %2215 = vmatmul.f32.gmra.mxu0 %v2120
      %v2216 = vpop.f32.mrf.mxu0
      %v2217 = vadd.f32 %v2188, %v2216
      %2218 = vmatmul.f32.gmra.mxu0 %v2122
      %v2219 = vpop.f32.mrf.mxu0
      %v2220 = vadd.f32 %v2191, %v2219
      %2221 = vmatmul.f32.gmra.mxu0 %v2124
      %v2222 = vpop.f32.mrf.mxu0
      %v2223 = vadd.f32 %v2194, %v2222
      %2224 = vmatmul.f32.gmra.mxu0 %v2126
      %v2225 = vpop.f32.mrf.mxu0
      %v2226 = vadd.f32 %v2197, %v2225
      %2227 = vdwg.mxu0
      %2228 = vmatpush.xpose.msra.mxu0 0.0
      %2229 = vmatpush.xpose.msra.mxu0 0.0
      %2230 = vmatpush.xpose.msra.mxu0 0.0
      %2231 = vmatpush.xpose.msra.mxu0 0.0
      %2232 = vmatpush.xpose.msra.mxu0 0.0
      %2233 = vmatpush.xpose.msra.mxu0 0.0
      %2234 = vmatpush.xpose.msra.mxu0 0.0
      %2235 = vmatpush.xpose.msra.mxu0 0.0
      %2236 = vmatpush.xpose.msra.mxu0 0.0
      %2237 = vmatpush.xpose.msra.mxu0 0.0
      %2238 = vmatpush.xpose.msra.mxu0 0.0
      %2239 = vmatpush.xpose.msra.mxu0 0.0
      %2240 = vmatpush.xpose.msra.mxu0 0.0
      %2241 = vmatpush.xpose.msra.mxu0 0.0
      %2242 = vmatpush.xpose.msra.mxu0 %v390
      %2243 = vmatpush.xpose.msra.mxu0 %v388
      %2244 = vmatmul.f32.gmra.mxu0 %v2119
      %v2245 = vpop.f32.mrf.mxu0
      %v2246 = vadd.f32 0.0, %v2245
      %2247 = vmatmul.f32.gmra.mxu0 %v2121
      %v2248 = vpop.f32.mrf.mxu0
      %v2249 = vadd.f32 0.0, %v2248
      %2250 = vmatmul.f32.gmra.mxu0 %v2123
      %v2251 = vpop.f32.mrf.mxu0
      %v2252 = vadd.f32 0.0, %v2251
      %2253 = vmatmul.f32.gmra.mxu0 %v2125
      %v2254 = vpop.f32.mrf.mxu0
      %v2255 = vadd.f32 0.0, %v2254
      %2256 = vdwg.mxu0
      %2257 = vmatpush.xpose.msra.mxu0 0.0
      %2258 = vmatpush.xpose.msra.mxu0 0.0
      %2259 = vmatpush.xpose.msra.mxu0 0.0
      %2260 = vmatpush.xpose.msra.mxu0 0.0
      %2261 = vmatpush.xpose.msra.mxu0 0.0
      %2262 = vmatpush.xpose.msra.mxu0 0.0
      %2263 = vmatpush.xpose.msra.mxu0 0.0
      %2264 = vmatpush.xpose.msra.mxu0 0.0
      %2265 = vmatpush.xpose.msra.mxu0 0.0
      %2266 = vmatpush.xpose.msra.mxu0 0.0
      %2267 = vmatpush.xpose.msra.mxu0 0.0
      %2268 = vmatpush.xpose.msra.mxu0 0.0
      %2269 = vmatpush.xpose.msra.mxu0 0.0
      %2270 = vmatpush.xpose.msra.mxu0 0.0
      %2271 = vmatpush.xpose.msra.mxu0 %v391
      %2272 = vmatpush.xpose.msra.mxu0 %v389
      %2273 = vmatmul.f32.gmra.mxu0 %v2120
      %v2274 = vpop.f32.mrf.mxu0
      %v2275 = vadd.f32 %v2246, %v2274
      %2276 = vmatmul.f32.gmra.mxu0 %v2122
      %v2277 = vpop.f32.mrf.mxu0
      %v2278 = vadd.f32 %v2249, %v2277
      %2279 = vmatmul.f32.gmra.mxu0 %v2124
      %v2280 = vpop.f32.mrf.mxu0
      %v2281 = vadd.f32 %v2252, %v2280
      %2282 = vmatmul.f32.gmra.mxu0 %v2126
      %v2283 = vpop.f32.mrf.mxu0
      %v2284 = vadd.f32 %v2255, %v2283
      %2285 = vdwg.mxu0
      %2286 = vmatpush.xpose.msra.mxu0 0.0
      %2287 = vmatpush.xpose.msra.mxu0 0.0
      %2288 = vmatpush.xpose.msra.mxu0 0.0
      %2289 = vmatpush.xpose.msra.mxu0 0.0
      %2290 = vmatpush.xpose.msra.mxu0 0.0
      %2291 = vmatpush.xpose.msra.mxu0 0.0
      %2292 = vmatpush.xpose.msra.mxu0 0.0
      %2293 = vmatpush.xpose.msra.mxu0 0.0
      %2294 = vmatpush.xpose.msra.mxu0 0.0
      %2295 = vmatpush.xpose.msra.mxu0 0.0
      %2296 = vmatpush.xpose.msra.mxu0 0.0
      %2297 = vmatpush.xpose.msra.mxu0 0.0
      %2298 = vmatpush.xpose.msra.mxu0 0.0
      %2299 = vmatpush.xpose.msra.mxu0 0.0
      %2300 = vmatpush.xpose.msra.mxu0 %v394
      %2301 = vmatpush.xpose.msra.mxu0 %v392
      %2302 = vmatmul.f32.gmra.mxu0 %v2119
      %v2303 = vpop.f32.mrf.mxu0
      %v2304 = vadd.f32 0.0, %v2303
      %2305 = vmatmul.f32.gmra.mxu0 %v2121
      %v2306 = vpop.f32.mrf.mxu0
      %v2307 = vadd.f32 0.0, %v2306
      %2308 = vmatmul.f32.gmra.mxu0 %v2123
      %v2309 = vpop.f32.mrf.mxu0
      %v2310 = vadd.f32 0.0, %v2309
      %2311 = vmatmul.f32.gmra.mxu0 %v2125
      %v2312 = vpop.f32.mrf.mxu0
      %v2313 = vadd.f32 0.0, %v2312
      %2314 = vdwg.mxu0
      %2315 = vmatpush.xpose.msra.mxu0 0.0
      %2316 = vmatpush.xpose.msra.mxu0 0.0
      %2317 = vmatpush.xpose.msra.mxu0 0.0
      %2318 = vmatpush.xpose.msra.mxu0 0.0
      %2319 = vmatpush.xpose.msra.mxu0 0.0
      %2320 = vmatpush.xpose.msra.mxu0 0.0
      %2321 = vmatpush.xpose.msra.mxu0 0.0
      %2322 = vmatpush.xpose.msra.mxu0 0.0
      %2323 = vmatpush.xpose.msra.mxu0 0.0
      %2324 = vmatpush.xpose.msra.mxu0 0.0
      %2325 = vmatpush.xpose.msra.mxu0 0.0
      %2326 = vmatpush.xpose.msra.mxu0 0.0
      %2327 = vmatpush.xpose.msra.mxu0 0.0
      %2328 = vmatpush.xpose.msra.mxu0 0.0
      %2329 = vmatpush.xpose.msra.mxu0 %v395
      %2330 = vmatpush.xpose.msra.mxu0 %v393
      %2331 = vmatmul.f32.gmra.mxu0 %v2120
      %v2332 = vpop.f32.mrf.mxu0
      %v2333 = vadd.f32 %v2304, %v2332
      %2334 = vmatmul.f32.gmra.mxu0 %v2122
      %v2335 = vpop.f32.mrf.mxu0
      %v2336 = vadd.f32 %v2307, %v2335
      %2337 = vmatmul.f32.gmra.mxu0 %v2124
      %v2338 = vpop.f32.mrf.mxu0
      %v2339 = vadd.f32 %v2310, %v2338
      %2340 = vmatmul.f32.gmra.mxu0 %v2126
      %v2341 = vpop.f32.mrf.mxu0
      %v2342 = vadd.f32 %v2313, %v2341
      %2343 = vdwg.mxu0
      %v2344 = vsel %vm967, %v2217, 0.0
      %2345 = vadd.xlane.f32.xlu0 %v2344
      %v2346 = vpop.xlane.xlu0 %2345
      %v2347 = vsel %vm967, %v2220, 0.0
      %2348 = vadd.xlane.f32.xlu0 %v2347
      %v2349 = vpop.xlane.xlu0 %2348
      %v2350 = vsel %vm967, %v2223, 0.0
      %2351 = vadd.xlane.f32.xlu0 %v2350
      %v2352 = vpop.xlane.xlu0 %2351
      %v2353 = vsel %vm967, %v2226, 0.0
      %2354 = vadd.xlane.f32.xlu0 %v2353
      %v2355 = vpop.xlane.xlu0 %2354
      %v2356 = vmul.f32 %v2346, 0.0625
      %v2357 = vmul.f32 %v2349, 0.0625
      %v2358 = vmul.f32 %v2352, 0.0625
      %v2359 = vmul.f32 %v2355, 0.0625
      %v2360 = vsel %vm967, %v2275, 0.0
      %2361 = vadd.xlane.f32.xlu0 %v2360
      %v2362 = vpop.xlane.xlu0 %2361
      %v2363 = vsel %vm967, %v2278, 0.0
      %2364 = vadd.xlane.f32.xlu0 %v2363
      %v2365 = vpop.xlane.xlu0 %2364
      %v2366 = vsel %vm967, %v2281, 0.0
      %2367 = vadd.xlane.f32.xlu0 %v2366
      %v2368 = vpop.xlane.xlu0 %2367
      %v2369 = vsel %vm967, %v2284, 0.0
      %2370 = vadd.xlane.f32.xlu0 %v2369
      %v2371 = vpop.xlane.xlu0 %2370
      %v2372 = vmul.f32 %v2362, 0.00390625
      %v2373 = vmul.f32 %v2365, 0.00390625
      %v2374 = vmul.f32 %v2368, 0.00390625
      %v2375 = vmul.f32 %v2371, 0.00390625
      %v2376 = vmul.f32 %v2275, 0.0625
      %v2377 = vmul.f32 %v2278, 0.0625
      %v2378 = vmul.f32 %v2281, 0.0625
      %v2379 = vmul.f32 %v2284, 0.0625
      %v2380 = vmul.f32 %v2333, 0.0625
      %v2381 = vmul.f32 %v2336, 0.0625
      %v2382 = vmul.f32 %v2339, 0.0625
      %v2383 = vmul.f32 %v2342, 0.0625
      %v2385 = vsel %vm1464, %v2128, 0
      %v2388 = vsel %vm1464, %v2129, 0
      %v2391 = vsel %vm1464, %v2130, 0
      %v2394 = vsel %vm1464, %v2131, 0
      %v2397 = vsel %vm1464, %v2132, 0
      %v2400 = vsel %vm1464, %v2133, 0
      %v2403 = vsel %vm1464, %v2134, 0
      %v2406 = vsel %vm1464, %v2135, 0
      %2408 = vmatpush.msra.mxu0 0.0
      %2409 = vmatpush.msra.mxu0 0.0
      %2410 = vmatpush.msra.mxu0 0.0
      %2411 = vmatpush.msra.mxu0 0.0
      %2412 = vmatpush.msra.mxu0 0.0
      %2413 = vmatpush.msra.mxu0 0.0
      %2414 = vmatpush.msra.mxu0 0.0
      %2415 = vmatpush.msra.mxu0 0.0
      %2416 = vmatpush.msra.mxu0 0.0
      %2417 = vmatpush.msra.mxu0 0.0
      %2418 = vmatpush.msra.mxu0 0.0
      %2419 = vmatpush.msra.mxu0 0.0
      %2420 = vmatpush.msra.mxu0 %v2125
      %2421 = vmatpush.msra.mxu0 %v2123
      %2422 = vmatpush.msra.mxu0 %v2121
      %2423 = vmatpush.msra.mxu0 %v2119
      %2424 = vmatmul.f32.gmra.mxu0 %v2385
      %v2425 = vpop.f32.mrf.mxu0
      %v2426 = vadd.f32 0.0, %v2425
      %2427 = vmatmul.f32.gmra.mxu0 %v2388
      %v2428 = vpop.f32.mrf.mxu0
      %v2429 = vadd.f32 0.0, %v2428
      %2430 = vmatmul.f32.gmra.mxu0 %v2391
      %v2431 = vpop.f32.mrf.mxu0
      %v2432 = vadd.f32 0.0, %v2431
      %2433 = vmatmul.f32.gmra.mxu0 %v2394
      %v2434 = vpop.f32.mrf.mxu0
      %v2435 = vadd.f32 0.0, %v2434
      %2436 = vmatmul.f32.gmra.mxu0 %v2397
      %v2437 = vpop.f32.mrf.mxu0
      %v2438 = vadd.f32 0.0, %v2437
      %2439 = vmatmul.f32.gmra.mxu0 %v2400
      %v2440 = vpop.f32.mrf.mxu0
      %v2441 = vadd.f32 0.0, %v2440
      %2442 = vmatmul.f32.gmra.mxu0 %v2403
      %v2443 = vpop.f32.mrf.mxu0
      %v2444 = vadd.f32 0.0, %v2443
      %2445 = vmatmul.f32.gmra.mxu0 %v2406
      %v2446 = vpop.f32.mrf.mxu0
      %v2447 = vadd.f32 0.0, %v2446
      %2448 = vdwg.mxu0
      %2449 = vmatpush.msra.mxu0 0.0
      %2450 = vmatpush.msra.mxu0 0.0
      %2451 = vmatpush.msra.mxu0 0.0
      %2452 = vmatpush.msra.mxu0 0.0
      %2453 = vmatpush.msra.mxu0 0.0
      %2454 = vmatpush.msra.mxu0 0.0
      %2455 = vmatpush.msra.mxu0 0.0
      %2456 = vmatpush.msra.mxu0 0.0
      %2457 = vmatpush.msra.mxu0 0.0
      %2458 = vmatpush.msra.mxu0 0.0
      %2459 = vmatpush.msra.mxu0 0.0
      %2460 = vmatpush.msra.mxu0 0.0
      %2461 = vmatpush.msra.mxu0 %v2126
      %2462 = vmatpush.msra.mxu0 %v2124
      %2463 = vmatpush.msra.mxu0 %v2122
      %2464 = vmatpush.msra.mxu0 %v2120
      %2465 = vmatmul.f32.gmra.mxu0 %v2385
      %v2466 = vpop.f32.mrf.mxu0
      %v2467 = vadd.f32 0.0, %v2466
      %2468 = vmatmul.f32.gmra.mxu0 %v2388
      %v2469 = vpop.f32.mrf.mxu0
      %v2470 = vadd.f32 0.0, %v2469
      %2471 = vmatmul.f32.gmra.mxu0 %v2391
      %v2472 = vpop.f32.mrf.mxu0
      %v2473 = vadd.f32 0.0, %v2472
      %2474 = vmatmul.f32.gmra.mxu0 %v2394
      %v2475 = vpop.f32.mrf.mxu0
      %v2476 = vadd.f32 0.0, %v2475
      %2477 = vmatmul.f32.gmra.mxu0 %v2397
      %v2478 = vpop.f32.mrf.mxu0
      %v2479 = vadd.f32 0.0, %v2478
      %2480 = vmatmul.f32.gmra.mxu0 %v2400
      %v2481 = vpop.f32.mrf.mxu0
      %v2482 = vadd.f32 0.0, %v2481
      %2483 = vmatmul.f32.gmra.mxu0 %v2403
      %v2484 = vpop.f32.mrf.mxu0
      %v2485 = vadd.f32 0.0, %v2484
      %2486 = vmatmul.f32.gmra.mxu0 %v2406
      %v2487 = vpop.f32.mrf.mxu0
      %v2488 = vadd.f32 0.0, %v2487
      %2489 = vdwg.mxu0
      %v2491 = vsel %vm1464, %v2138, 0
      %v2494 = vsel %vm1464, %v2140, 0
      %v2497 = vsel %vm1464, %v2142, 0
      %v2500 = vsel %vm1464, %v2144, 0
      %v2503 = vsel %vm1464, %v2146, 0
      %v2506 = vsel %vm1464, %v2148, 0
      %v2509 = vsel %vm1464, %v2150, 0
      %v2512 = vsel %vm1464, %v2152, 0
      %v2515 = vsel %vm1464, %v2154, 0
      %v2518 = vsel %vm1464, %v2156, 0
      %v2521 = vsel %vm1464, %v2158, 0
      %v2524 = vsel %vm1464, %v2160, 0
      %2526 = vmatpush.msra.mxu0 %v2359
      %2527 = vmatpush.msra.mxu0 %v2358
      %2528 = vmatpush.msra.mxu0 %v2357
      %2529 = vmatpush.msra.mxu0 %v2356
      %2530 = vmatpush.msra.mxu0 %v2383
      %2531 = vmatpush.msra.mxu0 %v2382
      %2532 = vmatpush.msra.mxu0 %v2381
      %2533 = vmatpush.msra.mxu0 %v2380
      %2534 = vmatpush.msra.mxu0 %v2379
      %2535 = vmatpush.msra.mxu0 %v2378
      %2536 = vmatpush.msra.mxu0 %v2377
      %2537 = vmatpush.msra.mxu0 %v2376
      %2538 = vmatpush.msra.mxu0 %v2226
      %2539 = vmatpush.msra.mxu0 %v2223
      %2540 = vmatpush.msra.mxu0 %v2220
      %2541 = vmatpush.msra.mxu0 %v2217
      %2542 = vmatmul.f32.gmra.mxu0 %v2137
      %v2543 = vpop.f32.mrf.mxu0
      %v2544 = vadd.f32 0.0, %v2543
      %2545 = vmatmul.f32.gmra.mxu0 %v2139
      %v2546 = vpop.f32.mrf.mxu0
      %v2547 = vadd.f32 0.0, %v2546
      %2548 = vmatmul.f32.gmra.mxu0 %v2141
      %v2549 = vpop.f32.mrf.mxu0
      %v2550 = vadd.f32 0.0, %v2549
      %2551 = vmatmul.f32.gmra.mxu0 %v2143
      %v2552 = vpop.f32.mrf.mxu0
      %v2553 = vadd.f32 0.0, %v2552
      %2554 = vmatmul.f32.gmra.mxu0 %v2145
      %v2555 = vpop.f32.mrf.mxu0
      %v2556 = vadd.f32 0.0, %v2555
      %2557 = vmatmul.f32.gmra.mxu0 %v2147
      %v2558 = vpop.f32.mrf.mxu0
      %v2559 = vadd.f32 0.0, %v2558
      %2560 = vmatmul.f32.gmra.mxu0 %v2149
      %v2561 = vpop.f32.mrf.mxu0
      %v2562 = vadd.f32 0.0, %v2561
      %2563 = vmatmul.f32.gmra.mxu0 %v2151
      %v2564 = vpop.f32.mrf.mxu0
      %v2565 = vadd.f32 0.0, %v2564
      %2566 = vmatmul.f32.gmra.mxu0 %v2153
      %v2567 = vpop.f32.mrf.mxu0
      %v2568 = vadd.f32 0.0, %v2567
      %2569 = vmatmul.f32.gmra.mxu0 %v2155
      %v2570 = vpop.f32.mrf.mxu0
      %v2571 = vadd.f32 0.0, %v2570
      %2572 = vmatmul.f32.gmra.mxu0 %v2157
      %v2573 = vpop.f32.mrf.mxu0
      %v2574 = vadd.f32 0.0, %v2573
      %2575 = vmatmul.f32.gmra.mxu0 %v2159
      %v2576 = vpop.f32.mrf.mxu0
      %v2577 = vadd.f32 0.0, %v2576
      %2578 = vdwg.mxu0
      %2579 = vmatpush.msra.mxu0 0.0
      %2580 = vmatpush.msra.mxu0 0.0
      %2581 = vmatpush.msra.mxu0 0.0
      %2582 = vmatpush.msra.mxu0 0.0
      %2583 = vmatpush.msra.mxu0 0.0
      %2584 = vmatpush.msra.mxu0 0.0
      %2585 = vmatpush.msra.mxu0 0.0
      %2586 = vmatpush.msra.mxu0 0.0
      %2587 = vmatpush.msra.mxu0 0.0
      %2588 = vmatpush.msra.mxu0 0.0
      %2589 = vmatpush.msra.mxu0 0.0
      %2590 = vmatpush.msra.mxu0 0.0
      %2591 = vmatpush.msra.mxu0 %v2375
      %2592 = vmatpush.msra.mxu0 %v2374
      %2593 = vmatpush.msra.mxu0 %v2373
      %2594 = vmatpush.msra.mxu0 %v2372
      %2595 = vmatmul.f32.gmra.mxu0 %v2491
      %v2596 = vpop.f32.mrf.mxu0
      %v2597 = vadd.f32 %v2544, %v2596
      %2598 = vmatmul.f32.gmra.mxu0 %v2494
      %v2599 = vpop.f32.mrf.mxu0
      %v2600 = vadd.f32 %v2547, %v2599
      %2601 = vmatmul.f32.gmra.mxu0 %v2497
      %v2602 = vpop.f32.mrf.mxu0
      %v2603 = vadd.f32 %v2550, %v2602
      %2604 = vmatmul.f32.gmra.mxu0 %v2500
      %v2605 = vpop.f32.mrf.mxu0
      %v2606 = vadd.f32 %v2553, %v2605
      %2607 = vmatmul.f32.gmra.mxu0 %v2503
      %v2608 = vpop.f32.mrf.mxu0
      %v2609 = vadd.f32 %v2556, %v2608
      %2610 = vmatmul.f32.gmra.mxu0 %v2506
      %v2611 = vpop.f32.mrf.mxu0
      %v2612 = vadd.f32 %v2559, %v2611
      %2613 = vmatmul.f32.gmra.mxu0 %v2509
      %v2614 = vpop.f32.mrf.mxu0
      %v2615 = vadd.f32 %v2562, %v2614
      %2616 = vmatmul.f32.gmra.mxu0 %v2512
      %v2617 = vpop.f32.mrf.mxu0
      %v2618 = vadd.f32 %v2565, %v2617
      %2619 = vmatmul.f32.gmra.mxu0 %v2515
      %v2620 = vpop.f32.mrf.mxu0
      %v2621 = vadd.f32 %v2568, %v2620
      %2622 = vmatmul.f32.gmra.mxu0 %v2518
      %v2623 = vpop.f32.mrf.mxu0
      %v2624 = vadd.f32 %v2571, %v2623
      %2625 = vmatmul.f32.gmra.mxu0 %v2521
      %v2626 = vpop.f32.mrf.mxu0
      %v2627 = vadd.f32 %v2574, %v2626
      %2628 = vmatmul.f32.gmra.mxu0 %v2524
      %v2629 = vpop.f32.mrf.mxu0
      %v2630 = vadd.f32 %v2577, %v2629
      %2631 = vdwg.mxu0
      %2633 = vset.pattern.permute.xlu0 0
      %2634 = vperm.xlu0 %2633, %v2162
      %v2635 = vpop.permute.xlu0 %2634
      %2638 = vset.pattern.permute.xlu0 0
      %2639 = vperm.xlu0 %2638, %v2163
      %v2640 = vpop.permute.xlu0 %2639
      %2643 = vset.pattern.permute.xlu0 0
      %2644 = vperm.xlu0 %2643, %v2164
      %v2645 = vpop.permute.xlu0 %2644
      %2648 = vset.pattern.permute.xlu0 0
      %2649 = vperm.xlu0 %2648, %v2165
      %v2650 = vpop.permute.xlu0 %2649
      %v2652 = vadd.f32 %v2597, %v2635
      %v2653 = vadd.f32 %v2600, %v2640
      %v2654 = vadd.f32 %v2603, %v2645
      %v2655 = vadd.f32 %v2606, %v2650
      %2657 = vset.pattern.permute.xlu0 0
      %2658 = vperm.xlu0 %2657, %v2166
      %v2659 = vpop.permute.xlu0 %2658
      %2662 = vset.pattern.permute.xlu0 0
      %2663 = vperm.xlu0 %2662, %v2167
      %v2664 = vpop.permute.xlu0 %2663
      %2667 = vset.pattern.permute.xlu0 0
      %2668 = vperm.xlu0 %2667, %v2168
      %v2669 = vpop.permute.xlu0 %2668
      %2672 = vset.pattern.permute.xlu0 0
      %2673 = vperm.xlu0 %2672, %v2169
      %v2674 = vpop.permute.xlu0 %2673
      %v2676 = vadd.f32 %v2609, %v2659
      %v2677 = vadd.f32 %v2612, %v2664
      %v2678 = vadd.f32 %v2615, %v2669
      %v2679 = vadd.f32 %v2618, %v2674
      %2680 = vmatpush.msra.mxu0 %v426
      %2681 = vmatpush.msra.mxu0 %v424
      %2682 = vmatpush.msra.mxu0 %v422
      %2683 = vmatpush.msra.mxu0 %v420
      %2684 = vmatpush.msra.mxu0 %v418
      %2685 = vmatpush.msra.mxu0 %v416
      %2686 = vmatpush.msra.mxu0 %v414
      %2687 = vmatpush.msra.mxu0 %v412
      %2688 = vmatpush.msra.mxu0 %v410
      %2689 = vmatpush.msra.mxu0 %v408
      %2690 = vmatpush.msra.mxu0 %v406
      %2691 = vmatpush.msra.mxu0 %v404
      %2692 = vmatpush.msra.mxu0 %v402
      %2693 = vmatpush.msra.mxu0 %v400
      %2694 = vmatpush.msra.mxu0 %v398
      %2695 = vmatpush.msra.mxu0 %v396
      %2696 = vmatmul.f32.gmra.mxu0 %v2438
      %v2697 = vpop.f32.mrf.mxu0
      %v2698 = vadd.f32 0.0, %v2697
      %2699 = vmatmul.f32.gmra.mxu0 %v2441
      %v2700 = vpop.f32.mrf.mxu0
      %v2701 = vadd.f32 0.0, %v2700
      %2702 = vmatmul.f32.gmra.mxu0 %v2444
      %v2703 = vpop.f32.mrf.mxu0
      %v2704 = vadd.f32 0.0, %v2703
      %2705 = vmatmul.f32.gmra.mxu0 %v2447
      %v2706 = vpop.f32.mrf.mxu0
      %v2707 = vadd.f32 0.0, %v2706
      %2708 = vdwg.mxu0
      %2709 = vmatpush.msra.mxu0 %v458
      %2710 = vmatpush.msra.mxu0 %v456
      %2711 = vmatpush.msra.mxu0 %v454
      %2712 = vmatpush.msra.mxu0 %v452
      %2713 = vmatpush.msra.mxu0 %v450
      %2714 = vmatpush.msra.mxu0 %v448
      %2715 = vmatpush.msra.mxu0 %v446
      %2716 = vmatpush.msra.mxu0 %v444
      %2717 = vmatpush.msra.mxu0 %v442
      %2718 = vmatpush.msra.mxu0 %v440
      %2719 = vmatpush.msra.mxu0 %v438
      %2720 = vmatpush.msra.mxu0 %v436
      %2721 = vmatpush.msra.mxu0 %v434
      %2722 = vmatpush.msra.mxu0 %v432
      %2723 = vmatpush.msra.mxu0 %v430
      %2724 = vmatpush.msra.mxu0 %v428
      %2725 = vmatmul.f32.gmra.mxu0 %v2479
      %v2726 = vpop.f32.mrf.mxu0
      %v2727 = vadd.f32 %v2698, %v2726
      %2728 = vmatmul.f32.gmra.mxu0 %v2482
      %v2729 = vpop.f32.mrf.mxu0
      %v2730 = vadd.f32 %v2701, %v2729
      %2731 = vmatmul.f32.gmra.mxu0 %v2485
      %v2732 = vpop.f32.mrf.mxu0
      %v2733 = vadd.f32 %v2704, %v2732
      %2734 = vmatmul.f32.gmra.mxu0 %v2488
      %v2735 = vpop.f32.mrf.mxu0
      %v2736 = vadd.f32 %v2707, %v2735
      %2737 = vdwg.mxu0
      %2738 = vmatpush.msra.mxu0 %v427
      %2739 = vmatpush.msra.mxu0 %v425
      %2740 = vmatpush.msra.mxu0 %v423
      %2741 = vmatpush.msra.mxu0 %v421
      %2742 = vmatpush.msra.mxu0 %v419
      %2743 = vmatpush.msra.mxu0 %v417
      %2744 = vmatpush.msra.mxu0 %v415
      %2745 = vmatpush.msra.mxu0 %v413
      %2746 = vmatpush.msra.mxu0 %v411
      %2747 = vmatpush.msra.mxu0 %v409
      %2748 = vmatpush.msra.mxu0 %v407
      %2749 = vmatpush.msra.mxu0 %v405
      %2750 = vmatpush.msra.mxu0 %v403
      %2751 = vmatpush.msra.mxu0 %v401
      %2752 = vmatpush.msra.mxu0 %v399
      %2753 = vmatpush.msra.mxu0 %v397
      %2754 = vmatmul.f32.gmra.mxu0 %v2438
      %v2755 = vpop.f32.mrf.mxu0
      %v2756 = vadd.f32 0.0, %v2755
      %2757 = vmatmul.f32.gmra.mxu0 %v2441
      %v2758 = vpop.f32.mrf.mxu0
      %v2759 = vadd.f32 0.0, %v2758
      %2760 = vmatmul.f32.gmra.mxu0 %v2444
      %v2761 = vpop.f32.mrf.mxu0
      %v2762 = vadd.f32 0.0, %v2761
      %2763 = vmatmul.f32.gmra.mxu0 %v2447
      %v2764 = vpop.f32.mrf.mxu0
      %v2765 = vadd.f32 0.0, %v2764
      %2766 = vdwg.mxu0
      %2767 = vmatpush.msra.mxu0 %v459
      %2768 = vmatpush.msra.mxu0 %v457
      %2769 = vmatpush.msra.mxu0 %v455
      %2770 = vmatpush.msra.mxu0 %v453
      %2771 = vmatpush.msra.mxu0 %v451
      %2772 = vmatpush.msra.mxu0 %v449
      %2773 = vmatpush.msra.mxu0 %v447
      %2774 = vmatpush.msra.mxu0 %v445
      %2775 = vmatpush.msra.mxu0 %v443
      %2776 = vmatpush.msra.mxu0 %v441
      %2777 = vmatpush.msra.mxu0 %v439
      %2778 = vmatpush.msra.mxu0 %v437
      %2779 = vmatpush.msra.mxu0 %v435
      %2780 = vmatpush.msra.mxu0 %v433
      %2781 = vmatpush.msra.mxu0 %v431
      %2782 = vmatpush.msra.mxu0 %v429
      %2783 = vmatmul.f32.gmra.mxu0 %v2479
      %v2784 = vpop.f32.mrf.mxu0
      %v2785 = vadd.f32 %v2756, %v2784
      %2786 = vmatmul.f32.gmra.mxu0 %v2482
      %v2787 = vpop.f32.mrf.mxu0
      %v2788 = vadd.f32 %v2759, %v2787
      %2789 = vmatmul.f32.gmra.mxu0 %v2485
      %v2790 = vpop.f32.mrf.mxu0
      %v2791 = vadd.f32 %v2762, %v2790
      %2792 = vmatmul.f32.gmra.mxu0 %v2488
      %v2793 = vpop.f32.mrf.mxu0
      %v2794 = vadd.f32 %v2765, %v2793
      %2795 = vdwg.mxu0
      %v2796 = vadd.f32 %v2426, %v2727
      %v2797 = vadd.f32 %v2467, %v2785
      %v2798 = vadd.f32 %v2429, %v2730
      %v2799 = vadd.f32 %v2470, %v2788
      %v2800 = vadd.f32 %v2432, %v2733
      %v2801 = vadd.f32 %v2473, %v2791
      %v2802 = vadd.f32 %v2435, %v2736
      %v2803 = vadd.f32 %v2476, %v2794
      %v2805 = vsel %vm967, %v2652, 0
      %v2808 = vsel %vm967, %v2653, 0
      %v2811 = vsel %vm967, %v2654, 0
      %v2814 = vsel %vm967, %v2655, 0
      %2816 = vmatpush.msra.mxu0 0.0
      %2817 = vmatpush.msra.mxu0 0.0
      %2818 = vmatpush.msra.mxu0 0.0
      %2819 = vmatpush.msra.mxu0 0.0
      %2820 = vmatpush.msra.mxu0 0.0
      %2821 = vmatpush.msra.mxu0 0.0
      %2822 = vmatpush.msra.mxu0 0.0
      %2823 = vmatpush.msra.mxu0 0.0
      %2824 = vmatpush.msra.mxu0 0.0
      %2825 = vmatpush.msra.mxu0 0.0
      %2826 = vmatpush.msra.mxu0 0.0
      %2827 = vmatpush.msra.mxu0 0.0
      %2828 = vmatpush.msra.mxu0 0.0
      %2829 = vmatpush.msra.mxu0 0.0
      %2830 = vmatpush.msra.mxu0 %v386
      %2831 = vmatpush.msra.mxu0 %v384
      %2832 = vmatmul.f32.gmra.mxu0 %v2805
      %v2833 = vpop.f32.mrf.mxu0
      %v2834 = vadd.f32 0.0, %v2833
      %2835 = vmatmul.f32.gmra.mxu0 %v2808
      %v2836 = vpop.f32.mrf.mxu0
      %v2837 = vadd.f32 0.0, %v2836
      %2838 = vmatmul.f32.gmra.mxu0 %v2811
      %v2839 = vpop.f32.mrf.mxu0
      %v2840 = vadd.f32 0.0, %v2839
      %2841 = vmatmul.f32.gmra.mxu0 %v2814
      %v2842 = vpop.f32.mrf.mxu0
      %v2843 = vadd.f32 0.0, %v2842
      %2844 = vdwg.mxu0
      %2845 = vmatpush.msra.mxu0 0.0
      %2846 = vmatpush.msra.mxu0 0.0
      %2847 = vmatpush.msra.mxu0 0.0
      %2848 = vmatpush.msra.mxu0 0.0
      %2849 = vmatpush.msra.mxu0 0.0
      %2850 = vmatpush.msra.mxu0 0.0
      %2851 = vmatpush.msra.mxu0 0.0
      %2852 = vmatpush.msra.mxu0 0.0
      %2853 = vmatpush.msra.mxu0 0.0
      %2854 = vmatpush.msra.mxu0 0.0
      %2855 = vmatpush.msra.mxu0 0.0
      %2856 = vmatpush.msra.mxu0 0.0
      %2857 = vmatpush.msra.mxu0 0.0
      %2858 = vmatpush.msra.mxu0 0.0
      %2859 = vmatpush.msra.mxu0 %v387
      %2860 = vmatpush.msra.mxu0 %v385
      %2861 = vmatmul.f32.gmra.mxu0 %v2805
      %v2862 = vpop.f32.mrf.mxu0
      %v2863 = vadd.f32 0.0, %v2862
      %2864 = vmatmul.f32.gmra.mxu0 %v2808
      %v2865 = vpop.f32.mrf.mxu0
      %v2866 = vadd.f32 0.0, %v2865
      %2867 = vmatmul.f32.gmra.mxu0 %v2811
      %v2868 = vpop.f32.mrf.mxu0
      %v2869 = vadd.f32 0.0, %v2868
      %2870 = vmatmul.f32.gmra.mxu0 %v2814
      %v2871 = vpop.f32.mrf.mxu0
      %v2872 = vadd.f32 0.0, %v2871
      %2873 = vdwg.mxu0
      %v2874 = vadd.f32 %v2796, %v2834
      %v2875 = vadd.f32 %v2797, %v2863
      %v2876 = vadd.f32 %v2798, %v2837
      %v2877 = vadd.f32 %v2799, %v2866
      %v2878 = vadd.f32 %v2800, %v2840
      %v2879 = vadd.f32 %v2801, %v2869
      %v2880 = vadd.f32 %v2802, %v2843
      %v2881 = vadd.f32 %v2803, %v2872
      %v2883 = vsel %vm967, %v2676, 0
      %v2886 = vsel %vm967, %v2677, 0
      %v2889 = vsel %vm967, %v2678, 0
      %v2892 = vsel %vm967, %v2679, 0
      %2894 = vmatpush.msra.mxu0 0.0
      %2895 = vmatpush.msra.mxu0 0.0
      %2896 = vmatpush.msra.mxu0 0.0
      %2897 = vmatpush.msra.mxu0 0.0
      %2898 = vmatpush.msra.mxu0 0.0
      %2899 = vmatpush.msra.mxu0 0.0
      %2900 = vmatpush.msra.mxu0 0.0
      %2901 = vmatpush.msra.mxu0 0.0
      %2902 = vmatpush.msra.mxu0 0.0
      %2903 = vmatpush.msra.mxu0 0.0
      %2904 = vmatpush.msra.mxu0 0.0
      %2905 = vmatpush.msra.mxu0 0.0
      %2906 = vmatpush.msra.mxu0 0.0
      %2907 = vmatpush.msra.mxu0 0.0
      %2908 = vmatpush.msra.mxu0 %v390
      %2909 = vmatpush.msra.mxu0 %v388
      %2910 = vmatmul.f32.gmra.mxu0 %v2883
      %v2911 = vpop.f32.mrf.mxu0
      %v2912 = vadd.f32 0.0, %v2911
      %2913 = vmatmul.f32.gmra.mxu0 %v2886
      %v2914 = vpop.f32.mrf.mxu0
      %v2915 = vadd.f32 0.0, %v2914
      %2916 = vmatmul.f32.gmra.mxu0 %v2889
      %v2917 = vpop.f32.mrf.mxu0
      %v2918 = vadd.f32 0.0, %v2917
      %2919 = vmatmul.f32.gmra.mxu0 %v2892
      %v2920 = vpop.f32.mrf.mxu0
      %v2921 = vadd.f32 0.0, %v2920
      %2922 = vdwg.mxu0
      %2923 = vmatpush.msra.mxu0 0.0
      %2924 = vmatpush.msra.mxu0 0.0
      %2925 = vmatpush.msra.mxu0 0.0
      %2926 = vmatpush.msra.mxu0 0.0
      %2927 = vmatpush.msra.mxu0 0.0
      %2928 = vmatpush.msra.mxu0 0.0
      %2929 = vmatpush.msra.mxu0 0.0
      %2930 = vmatpush.msra.mxu0 0.0
      %2931 = vmatpush.msra.mxu0 0.0
      %2932 = vmatpush.msra.mxu0 0.0
      %2933 = vmatpush.msra.mxu0 0.0
      %2934 = vmatpush.msra.mxu0 0.0
      %2935 = vmatpush.msra.mxu0 0.0
      %2936 = vmatpush.msra.mxu0 0.0
      %2937 = vmatpush.msra.mxu0 %v391
      %2938 = vmatpush.msra.mxu0 %v389
      %2939 = vmatmul.f32.gmra.mxu0 %v2883
      %v2940 = vpop.f32.mrf.mxu0
      %v2941 = vadd.f32 0.0, %v2940
      %2942 = vmatmul.f32.gmra.mxu0 %v2886
      %v2943 = vpop.f32.mrf.mxu0
      %v2944 = vadd.f32 0.0, %v2943
      %2945 = vmatmul.f32.gmra.mxu0 %v2889
      %v2946 = vpop.f32.mrf.mxu0
      %v2947 = vadd.f32 0.0, %v2946
      %2948 = vmatmul.f32.gmra.mxu0 %v2892
      %v2949 = vpop.f32.mrf.mxu0
      %v2950 = vadd.f32 0.0, %v2949
      %2951 = vdwg.mxu0
      %v2952 = vadd.f32 %v2874, %v2912
      %v2953 = vadd.f32 %v2875, %v2941
      %v2954 = vadd.f32 %v2876, %v2915
      %v2955 = vadd.f32 %v2877, %v2944
      %v2956 = vadd.f32 %v2878, %v2918
      %v2957 = vadd.f32 %v2879, %v2947
      %v2958 = vadd.f32 %v2880, %v2921
      %v2959 = vadd.f32 %v2881, %v2950
      %v2961 = vsel %vm967, %v2621, 0
      %v2964 = vsel %vm967, %v2624, 0
      %v2967 = vsel %vm967, %v2627, 0
      %v2970 = vsel %vm967, %v2630, 0
      %2972 = vmatpush.msra.mxu0 0.0
      %2973 = vmatpush.msra.mxu0 0.0
      %2974 = vmatpush.msra.mxu0 0.0
      %2975 = vmatpush.msra.mxu0 0.0
      %2976 = vmatpush.msra.mxu0 0.0
      %2977 = vmatpush.msra.mxu0 0.0
      %2978 = vmatpush.msra.mxu0 0.0
      %2979 = vmatpush.msra.mxu0 0.0
      %2980 = vmatpush.msra.mxu0 0.0
      %2981 = vmatpush.msra.mxu0 0.0
      %2982 = vmatpush.msra.mxu0 0.0
      %2983 = vmatpush.msra.mxu0 0.0
      %2984 = vmatpush.msra.mxu0 0.0
      %2985 = vmatpush.msra.mxu0 0.0
      %2986 = vmatpush.msra.mxu0 %v394
      %2987 = vmatpush.msra.mxu0 %v392
      %2988 = vmatmul.f32.gmra.mxu0 %v2961
      %v2989 = vpop.f32.mrf.mxu0
      %v2990 = vadd.f32 0.0, %v2989
      %2991 = vmatmul.f32.gmra.mxu0 %v2964
      %v2992 = vpop.f32.mrf.mxu0
      %v2993 = vadd.f32 0.0, %v2992
      %2994 = vmatmul.f32.gmra.mxu0 %v2967
      %v2995 = vpop.f32.mrf.mxu0
      %v2996 = vadd.f32 0.0, %v2995
      %2997 = vmatmul.f32.gmra.mxu0 %v2970
      %v2998 = vpop.f32.mrf.mxu0
      %v2999 = vadd.f32 0.0, %v2998
      %3000 = vdwg.mxu0
      %3001 = vmatpush.msra.mxu0 0.0
      %3002 = vmatpush.msra.mxu0 0.0
      %3003 = vmatpush.msra.mxu0 0.0
      %3004 = vmatpush.msra.mxu0 0.0
      %3005 = vmatpush.msra.mxu0 0.0
      %3006 = vmatpush.msra.mxu0 0.0
      %3007 = vmatpush.msra.mxu0 0.0
      %3008 = vmatpush.msra.mxu0 0.0
      %3009 = vmatpush.msra.mxu0 0.0
      %3010 = vmatpush.msra.mxu0 0.0
      %3011 = vmatpush.msra.mxu0 0.0
      %3012 = vmatpush.msra.mxu0 0.0
      %3013 = vmatpush.msra.mxu0 0.0
      %3014 = vmatpush.msra.mxu0 0.0
      %3015 = vmatpush.msra.mxu0 %v395
      %3016 = vmatpush.msra.mxu0 %v393
      %3017 = vmatmul.f32.gmra.mxu0 %v2961
      %v3018 = vpop.f32.mrf.mxu0
      %v3019 = vadd.f32 0.0, %v3018
      %3020 = vmatmul.f32.gmra.mxu0 %v2964
      %v3021 = vpop.f32.mrf.mxu0
      %v3022 = vadd.f32 0.0, %v3021
      %3023 = vmatmul.f32.gmra.mxu0 %v2967
      %v3024 = vpop.f32.mrf.mxu0
      %v3025 = vadd.f32 0.0, %v3024
      %3026 = vmatmul.f32.gmra.mxu0 %v2970
      %v3027 = vpop.f32.mrf.mxu0
      %v3028 = vadd.f32 0.0, %v3027
      %3029 = vdwg.mxu0
      %v3030 = vadd.f32 %v2952, %v2990
      %v3031 = vadd.f32 %v2953, %v3019
      %v3032 = vadd.f32 %v2954, %v2993
      %v3033 = vadd.f32 %v2955, %v3022
      %v3034 = vadd.f32 %v2956, %v2996
      %v3035 = vadd.f32 %v2957, %v3025
      %v3036 = vadd.f32 %v2958, %v2999
      %v3037 = vadd.f32 %v2959, %v3028
      %v3038 = vmax.f32 %v3030, 0.0
      %v3039 = vmax.f32 %v3031, 0.0
      %v3040 = vmax.f32 %v3032, 0.0
      %v3041 = vmax.f32 %v3033, 0.0
      %v3042 = vmax.f32 %v3034, 0.0
      %v3043 = vmax.f32 %v3035, 0.0
      %v3044 = vmax.f32 %v3036, 0.0
      %v3045 = vmax.f32 %v3037, 0.0
      %s3046 = scalar_lea.vmem %s6, 128
      %v3047 = vld [vmem:[%s3046] sm:$0xff]
      %v3048 = vld [vmem:[%s3046 + $0x8] sm:$0xff]
      %v3049 = vld [vmem:[%s3046 + $0x10] sm:$0xff]
      %v3050 = vld [vmem:[%s3046 + $0x18] sm:$0xff]
      %v3051 = vld [vmem:[%s3046 + $0x20] sm:$0xff]
      %v3052 = vld [vmem:[%s3046 + $0x28] sm:$0xff]
      %v3053 = vld [vmem:[%s3046 + $0x30] sm:$0xff]
      %v3054 = vld [vmem:[%s3046 + $0x38] sm:$0xff]
      %s3055 = scalar_lea.vmem %s7, 384
      %v3056 = vld [vmem:[%s3055] sm:$0xff]
      %v3057 = vld [vmem:[%s3055 + $0x8] sm:$0xff]
      %v3058 = vld [vmem:[%s3055 + $0x10] sm:$0xff]
      %v3059 = vld [vmem:[%s3055 + $0x18] sm:$0xff]
      %v3060 = vld [vmem:[%s3055 + $0x20] sm:$0xff]
      %v3061 = vld [vmem:[%s3055 + $0x28] sm:$0xff]
      %v3062 = vld [vmem:[%s3055 + $0x30] sm:$0xff]
      %v3063 = vld [vmem:[%s3055 + $0x38] sm:$0xff]
      %v3064 = vld [vmem:[%s3055 + $0x40] sm:$0xff]
      %v3065 = vld [vmem:[%s3055 + $0x48] sm:$0xff]
      %v3066 = vld [vmem:[%s3055 + $0x50] sm:$0xff]
      %v3067 = vld [vmem:[%s3055 + $0x58] sm:$0xff]
      %v3068 = vld [vmem:[%s3055 + $0x60] sm:$0xff]
      %v3069 = vld [vmem:[%s3055 + $0x68] sm:$0xff]
      %v3070 = vld [vmem:[%s3055 + $0x70] sm:$0xff]
      %v3071 = vld [vmem:[%s3055 + $0x78] sm:$0xff]
      %v3072 = vld [vmem:[%s3055 + $0x80] sm:$0xff]
      %v3073 = vld [vmem:[%s3055 + $0x88] sm:$0xff]
      %v3074 = vld [vmem:[%s3055 + $0x90] sm:$0xff]
      %v3075 = vld [vmem:[%s3055 + $0x98] sm:$0xff]
      %v3076 = vld [vmem:[%s3055 + $0xa0] sm:$0xff]
      %v3077 = vld [vmem:[%s3055 + $0xa8] sm:$0xff]
      %v3078 = vld [vmem:[%s3055 + $0xb0] sm:$0xff]
      %v3079 = vld [vmem:[%s3055 + $0xb8] sm:$0xff]
      %s3080 = scalar_lea.vmem %s8, 128
      %v3081 = vld [vmem:[%s3080] sm:$0xff]
      %v3082 = vld [vmem:[%s3080 + $0x8] sm:$0xff]
      %v3083 = vld [vmem:[%s3080 + $0x10] sm:$0xff]
      %v3084 = vld [vmem:[%s3080 + $0x18] sm:$0xff]
      %v3085 = vld [vmem:[%s3080 + $0x20] sm:$0xff]
      %v3086 = vld [vmem:[%s3080 + $0x28] sm:$0xff]
      %v3087 = vld [vmem:[%s3080 + $0x30] sm:$0xff]
      %v3088 = vld [vmem:[%s3080 + $0x38] sm:$0xff]
      %3089 = vmatpush.xpose.msra.mxu0 0.0
      %3090 = vmatpush.xpose.msra.mxu0 0.0
      %3091 = vmatpush.xpose.msra.mxu0 0.0
      %3092 = vmatpush.xpose.msra.mxu0 0.0
      %3093 = vmatpush.xpose.msra.mxu0 0.0
      %3094 = vmatpush.xpose.msra.mxu0 0.0
      %3095 = vmatpush.xpose.msra.mxu0 0.0
      %3096 = vmatpush.xpose.msra.mxu0 0.0
      %3097 = vmatpush.xpose.msra.mxu0 0.0
      %3098 = vmatpush.xpose.msra.mxu0 0.0
      %3099 = vmatpush.xpose.msra.mxu0 0.0
      %3100 = vmatpush.xpose.msra.mxu0 0.0
      %3101 = vmatpush.xpose.msra.mxu0 0.0
      %3102 = vmatpush.xpose.msra.mxu0 0.0
      %3103 = vmatpush.xpose.msra.mxu0 %v386
      %3104 = vmatpush.xpose.msra.mxu0 %v384
      %3105 = vmatmul.f32.gmra.mxu0 %v3038
      %v3106 = vpop.f32.mrf.mxu0
      %v3107 = vadd.f32 0.0, %v3106
      %3108 = vmatmul.f32.gmra.mxu0 %v3040
      %v3109 = vpop.f32.mrf.mxu0
      %v3110 = vadd.f32 0.0, %v3109
      %3111 = vmatmul.f32.gmra.mxu0 %v3042
      %v3112 = vpop.f32.mrf.mxu0
      %v3113 = vadd.f32 0.0, %v3112
      %3114 = vmatmul.f32.gmra.mxu0 %v3044
      %v3115 = vpop.f32.mrf.mxu0
      %v3116 = vadd.f32 0.0, %v3115
      %3117 = vdwg.mxu0
      %3118 = vmatpush.xpose.msra.mxu0 0.0
      %3119 = vmatpush.xpose.msra.mxu0 0.0
      %3120 = vmatpush.xpose.msra.mxu0 0.0
      %3121 = vmatpush.xpose.msra.mxu0 0.0
      %3122 = vmatpush.xpose.msra.mxu0 0.0
      %3123 = vmatpush.xpose.msra.mxu0 0.0
      %3124 = vmatpush.xpose.msra.mxu0 0.0
      %3125 = vmatpush.xpose.msra.mxu0 0.0
      %3126 = vmatpush.xpose.msra.mxu0 0.0
      %3127 = vmatpush.xpose.msra.mxu0 0.0
      %3128 = vmatpush.xpose.msra.mxu0 0.0
      %3129 = vmatpush.xpose.msra.mxu0 0.0
      %3130 = vmatpush.xpose.msra.mxu0 0.0
      %3131 = vmatpush.xpose.msra.mxu0 0.0
      %3132 = vmatpush.xpose.msra.mxu0 %v387
      %3133 = vmatpush.xpose.msra.mxu0 %v385
      %3134 = vmatmul.f32.gmra.mxu0 %v3039
      %v3135 = vpop.f32.mrf.mxu0
      %v3136 = vadd.f32 %v3107, %v3135
      %3137 = vmatmul.f32.gmra.mxu0 %v3041
      %v3138 = vpop.f32.mrf.mxu0
      %v3139 = vadd.f32 %v3110, %v3138
      %3140 = vmatmul.f32.gmra.mxu0 %v3043
      %v3141 = vpop.f32.mrf.mxu0
      %v3142 = vadd.f32 %v3113, %v3141
      %3143 = vmatmul.f32.gmra.mxu0 %v3045
      %v3144 = vpop.f32.mrf.mxu0
      %v3145 = vadd.f32 %v3116, %v3144
      %3146 = vdwg.mxu0
      %3147 = vmatpush.xpose.msra.mxu0 0.0
      %3148 = vmatpush.xpose.msra.mxu0 0.0
      %3149 = vmatpush.xpose.msra.mxu0 0.0
      %3150 = vmatpush.xpose.msra.mxu0 0.0
      %3151 = vmatpush.xpose.msra.mxu0 0.0
      %3152 = vmatpush.xpose.msra.mxu0 0.0
      %3153 = vmatpush.xpose.msra.mxu0 0.0
      %3154 = vmatpush.xpose.msra.mxu0 0.0
      %3155 = vmatpush.xpose.msra.mxu0 0.0
      %3156 = vmatpush.xpose.msra.mxu0 0.0
      %3157 = vmatpush.xpose.msra.mxu0 0.0
      %3158 = vmatpush.xpose.msra.mxu0 0.0
      %3159 = vmatpush.xpose.msra.mxu0 0.0
      %3160 = vmatpush.xpose.msra.mxu0 0.0
      %3161 = vmatpush.xpose.msra.mxu0 %v390
      %3162 = vmatpush.xpose.msra.mxu0 %v388
      %3163 = vmatmul.f32.gmra.mxu0 %v3038
      %v3164 = vpop.f32.mrf.mxu0
      %v3165 = vadd.f32 0.0, %v3164
      %3166 = vmatmul.f32.gmra.mxu0 %v3040
      %v3167 = vpop.f32.mrf.mxu0
      %v3168 = vadd.f32 0.0, %v3167
      %3169 = vmatmul.f32.gmra.mxu0 %v3042
      %v3170 = vpop.f32.mrf.mxu0
      %v3171 = vadd.f32 0.0, %v3170
      %3172 = vmatmul.f32.gmra.mxu0 %v3044
      %v3173 = vpop.f32.mrf.mxu0
      %v3174 = vadd.f32 0.0, %v3173
      %3175 = vdwg.mxu0
      %3176 = vmatpush.xpose.msra.mxu0 0.0
      %3177 = vmatpush.xpose.msra.mxu0 0.0
      %3178 = vmatpush.xpose.msra.mxu0 0.0
      %3179 = vmatpush.xpose.msra.mxu0 0.0
      %3180 = vmatpush.xpose.msra.mxu0 0.0
      %3181 = vmatpush.xpose.msra.mxu0 0.0
      %3182 = vmatpush.xpose.msra.mxu0 0.0
      %3183 = vmatpush.xpose.msra.mxu0 0.0
      %3184 = vmatpush.xpose.msra.mxu0 0.0
      %3185 = vmatpush.xpose.msra.mxu0 0.0
      %3186 = vmatpush.xpose.msra.mxu0 0.0
      %3187 = vmatpush.xpose.msra.mxu0 0.0
      %3188 = vmatpush.xpose.msra.mxu0 0.0
      %3189 = vmatpush.xpose.msra.mxu0 0.0
      %3190 = vmatpush.xpose.msra.mxu0 %v391
      %3191 = vmatpush.xpose.msra.mxu0 %v389
      %3192 = vmatmul.f32.gmra.mxu0 %v3039
      %v3193 = vpop.f32.mrf.mxu0
      %v3194 = vadd.f32 %v3165, %v3193
      %3195 = vmatmul.f32.gmra.mxu0 %v3041
      %v3196 = vpop.f32.mrf.mxu0
      %v3197 = vadd.f32 %v3168, %v3196
      %3198 = vmatmul.f32.gmra.mxu0 %v3043
      %v3199 = vpop.f32.mrf.mxu0
      %v3200 = vadd.f32 %v3171, %v3199
      %3201 = vmatmul.f32.gmra.mxu0 %v3045
      %v3202 = vpop.f32.mrf.mxu0
      %v3203 = vadd.f32 %v3174, %v3202
      %3204 = vdwg.mxu0
      %3205 = vmatpush.xpose.msra.mxu0 0.0
      %3206 = vmatpush.xpose.msra.mxu0 0.0
      %3207 = vmatpush.xpose.msra.mxu0 0.0
      %3208 = vmatpush.xpose.msra.mxu0 0.0
      %3209 = vmatpush.xpose.msra.mxu0 0.0
      %3210 = vmatpush.xpose.msra.mxu0 0.0
      %3211 = vmatpush.xpose.msra.mxu0 0.0
      %3212 = vmatpush.xpose.msra.mxu0 0.0
      %3213 = vmatpush.xpose.msra.mxu0 0.0
      %3214 = vmatpush.xpose.msra.mxu0 0.0
      %3215 = vmatpush.xpose.msra.mxu0 0.0
      %3216 = vmatpush.xpose.msra.mxu0 0.0
      %3217 = vmatpush.xpose.msra.mxu0 0.0
      %3218 = vmatpush.xpose.msra.mxu0 0.0
      %3219 = vmatpush.xpose.msra.mxu0 %v394
      %3220 = vmatpush.xpose.msra.mxu0 %v392
      %3221 = vmatmul.f32.gmra.mxu0 %v3038
      %v3222 = vpop.f32.mrf.mxu0
      %v3223 = vadd.f32 0.0, %v3222
      %3224 = vmatmul.f32.gmra.mxu0 %v3040
      %v3225 = vpop.f32.mrf.mxu0
      %v3226 = vadd.f32 0.0, %v3225
      %3227 = vmatmul.f32.gmra.mxu0 %v3042
      %v3228 = vpop.f32.mrf.mxu0
      %v3229 = vadd.f32 0.0, %v3228
      %3230 = vmatmul.f32.gmra.mxu0 %v3044
      %v3231 = vpop.f32.mrf.mxu0
      %v3232 = vadd.f32 0.0, %v3231
      %3233 = vdwg.mxu0
      %3234 = vmatpush.xpose.msra.mxu0 0.0
      %3235 = vmatpush.xpose.msra.mxu0 0.0
      %3236 = vmatpush.xpose.msra.mxu0 0.0
      %3237 = vmatpush.xpose.msra.mxu0 0.0
      %3238 = vmatpush.xpose.msra.mxu0 0.0
      %3239 = vmatpush.xpose.msra.mxu0 0.0
      %3240 = vmatpush.xpose.msra.mxu0 0.0
      %3241 = vmatpush.xpose.msra.mxu0 0.0
      %3242 = vmatpush.xpose.msra.mxu0 0.0
      %3243 = vmatpush.xpose.msra.mxu0 0.0
      %3244 = vmatpush.xpose.msra.mxu0 0.0
      %3245 = vmatpush.xpose.msra.mxu0 0.0
      %3246 = vmatpush.xpose.msra.mxu0 0.0
      %3247 = vmatpush.xpose.msra.mxu0 0.0
      %3248 = vmatpush.xpose.msra.mxu0 %v395
      %3249 = vmatpush.xpose.msra.mxu0 %v393
      %3250 = vmatmul.f32.gmra.mxu0 %v3039
      %v3251 = vpop.f32.mrf.mxu0
      %v3252 = vadd.f32 %v3223, %v3251
      %3253 = vmatmul.f32.gmra.mxu0 %v3041
      %v3254 = vpop.f32.mrf.mxu0
      %v3255 = vadd.f32 %v3226, %v3254
      %3256 = vmatmul.f32.gmra.mxu0 %v3043
      %v3257 = vpop.f32.mrf.mxu0
      %v3258 = vadd.f32 %v3229, %v3257
      %3259 = vmatmul.f32.gmra.mxu0 %v3045
      %v3260 = vpop.f32.mrf.mxu0
      %v3261 = vadd.f32 %v3232, %v3260
      %3262 = vdwg.mxu0
      %v3263 = vsel %vm967, %v3136, 0.0
      %3264 = vadd.xlane.f32.xlu0 %v3263
      %v3265 = vpop.xlane.xlu0 %3264
      %v3266 = vsel %vm967, %v3139, 0.0
      %3267 = vadd.xlane.f32.xlu0 %v3266
      %v3268 = vpop.xlane.xlu0 %3267
      %v3269 = vsel %vm967, %v3142, 0.0
      %3270 = vadd.xlane.f32.xlu0 %v3269
      %v3271 = vpop.xlane.xlu0 %3270
      %v3272 = vsel %vm967, %v3145, 0.0
      %3273 = vadd.xlane.f32.xlu0 %v3272
      %v3274 = vpop.xlane.xlu0 %3273
      %v3275 = vmul.f32 %v3265, 0.0625
      %v3276 = vmul.f32 %v3268, 0.0625
      %v3277 = vmul.f32 %v3271, 0.0625
      %v3278 = vmul.f32 %v3274, 0.0625
      %v3279 = vsel %vm967, %v3194, 0.0
      %3280 = vadd.xlane.f32.xlu0 %v3279
      %v3281 = vpop.xlane.xlu0 %3280
      %v3282 = vsel %vm967, %v3197, 0.0
      %3283 = vadd.xlane.f32.xlu0 %v3282
      %v3284 = vpop.xlane.xlu0 %3283
      %v3285 = vsel %vm967, %v3200, 0.0
      %3286 = vadd.xlane.f32.xlu0 %v3285
      %v3287 = vpop.xlane.xlu0 %3286
      %v3288 = vsel %vm967, %v3203, 0.0
      %3289 = vadd.xlane.f32.xlu0 %v3288
      %v3290 = vpop.xlane.xlu0 %3289
      %v3291 = vmul.f32 %v3281, 0.00390625
      %v3292 = vmul.f32 %v3284, 0.00390625
      %v3293 = vmul.f32 %v3287, 0.00390625
      %v3294 = vmul.f32 %v3290, 0.00390625
      %v3295 = vmul.f32 %v3194, 0.0625
      %v3296 = vmul.f32 %v3197, 0.0625
      %v3297 = vmul.f32 %v3200, 0.0625
      %v3298 = vmul.f32 %v3203, 0.0625
      %v3299 = vmul.f32 %v3252, 0.0625
      %v3300 = vmul.f32 %v3255, 0.0625
      %v3301 = vmul.f32 %v3258, 0.0625
      %v3302 = vmul.f32 %v3261, 0.0625
      %v3304 = vsel %vm1464, %v3047, 0
      %v3307 = vsel %vm1464, %v3048, 0
      %v3310 = vsel %vm1464, %v3049, 0
      %v3313 = vsel %vm1464, %v3050, 0
      %v3316 = vsel %vm1464, %v3051, 0
      %v3319 = vsel %vm1464, %v3052, 0
      %v3322 = vsel %vm1464, %v3053, 0
      %v3325 = vsel %vm1464, %v3054, 0
      %3327 = vmatpush.msra.mxu0 0.0
      %3328 = vmatpush.msra.mxu0 0.0
      %3329 = vmatpush.msra.mxu0 0.0
      %3330 = vmatpush.msra.mxu0 0.0
      %3331 = vmatpush.msra.mxu0 0.0
      %3332 = vmatpush.msra.mxu0 0.0
      %3333 = vmatpush.msra.mxu0 0.0
      %3334 = vmatpush.msra.mxu0 0.0
      %3335 = vmatpush.msra.mxu0 0.0
      %3336 = vmatpush.msra.mxu0 0.0
      %3337 = vmatpush.msra.mxu0 0.0
      %3338 = vmatpush.msra.mxu0 0.0
      %3339 = vmatpush.msra.mxu0 %v3044
      %3340 = vmatpush.msra.mxu0 %v3042
      %3341 = vmatpush.msra.mxu0 %v3040
      %3342 = vmatpush.msra.mxu0 %v3038
      %3343 = vmatmul.f32.gmra.mxu0 %v3304
      %v3344 = vpop.f32.mrf.mxu0
      %v3345 = vadd.f32 0.0, %v3344
      %3346 = vmatmul.f32.gmra.mxu0 %v3307
      %v3347 = vpop.f32.mrf.mxu0
      %v3348 = vadd.f32 0.0, %v3347
      %3349 = vmatmul.f32.gmra.mxu0 %v3310
      %v3350 = vpop.f32.mrf.mxu0
      %v3351 = vadd.f32 0.0, %v3350
      %3352 = vmatmul.f32.gmra.mxu0 %v3313
      %v3353 = vpop.f32.mrf.mxu0
      %v3354 = vadd.f32 0.0, %v3353
      %3355 = vmatmul.f32.gmra.mxu0 %v3316
      %v3356 = vpop.f32.mrf.mxu0
      %v3357 = vadd.f32 0.0, %v3356
      %3358 = vmatmul.f32.gmra.mxu0 %v3319
      %v3359 = vpop.f32.mrf.mxu0
      %v3360 = vadd.f32 0.0, %v3359
      %3361 = vmatmul.f32.gmra.mxu0 %v3322
      %v3362 = vpop.f32.mrf.mxu0
      %v3363 = vadd.f32 0.0, %v3362
      %3364 = vmatmul.f32.gmra.mxu0 %v3325
      %v3365 = vpop.f32.mrf.mxu0
      %v3366 = vadd.f32 0.0, %v3365
      %3367 = vdwg.mxu0
      %3368 = vmatpush.msra.mxu0 0.0
      %3369 = vmatpush.msra.mxu0 0.0
      %3370 = vmatpush.msra.mxu0 0.0
      %3371 = vmatpush.msra.mxu0 0.0
      %3372 = vmatpush.msra.mxu0 0.0
      %3373 = vmatpush.msra.mxu0 0.0
      %3374 = vmatpush.msra.mxu0 0.0
      %3375 = vmatpush.msra.mxu0 0.0
      %3376 = vmatpush.msra.mxu0 0.0
      %3377 = vmatpush.msra.mxu0 0.0
      %3378 = vmatpush.msra.mxu0 0.0
      %3379 = vmatpush.msra.mxu0 0.0
      %3380 = vmatpush.msra.mxu0 %v3045
      %3381 = vmatpush.msra.mxu0 %v3043
      %3382 = vmatpush.msra.mxu0 %v3041
      %3383 = vmatpush.msra.mxu0 %v3039
      %3384 = vmatmul.f32.gmra.mxu0 %v3304
      %v3385 = vpop.f32.mrf.mxu0
      %v3386 = vadd.f32 0.0, %v3385
      %3387 = vmatmul.f32.gmra.mxu0 %v3307
      %v3388 = vpop.f32.mrf.mxu0
      %v3389 = vadd.f32 0.0, %v3388
      %3390 = vmatmul.f32.gmra.mxu0 %v3310
      %v3391 = vpop.f32.mrf.mxu0
      %v3392 = vadd.f32 0.0, %v3391
      %3393 = vmatmul.f32.gmra.mxu0 %v3313
      %v3394 = vpop.f32.mrf.mxu0
      %v3395 = vadd.f32 0.0, %v3394
      %3396 = vmatmul.f32.gmra.mxu0 %v3316
      %v3397 = vpop.f32.mrf.mxu0
      %v3398 = vadd.f32 0.0, %v3397
      %3399 = vmatmul.f32.gmra.mxu0 %v3319
      %v3400 = vpop.f32.mrf.mxu0
      %v3401 = vadd.f32 0.0, %v3400
      %3402 = vmatmul.f32.gmra.mxu0 %v3322
      %v3403 = vpop.f32.mrf.mxu0
      %v3404 = vadd.f32 0.0, %v3403
      %3405 = vmatmul.f32.gmra.mxu0 %v3325
      %v3406 = vpop.f32.mrf.mxu0
      %v3407 = vadd.f32 0.0, %v3406
      %3408 = vdwg.mxu0
      %v3410 = vsel %vm1464, %v3057, 0
      %v3413 = vsel %vm1464, %v3059, 0
      %v3416 = vsel %vm1464, %v3061, 0
      %v3419 = vsel %vm1464, %v3063, 0
      %v3422 = vsel %vm1464, %v3065, 0
      %v3425 = vsel %vm1464, %v3067, 0
      %v3428 = vsel %vm1464, %v3069, 0
      %v3431 = vsel %vm1464, %v3071, 0
      %v3434 = vsel %vm1464, %v3073, 0
      %v3437 = vsel %vm1464, %v3075, 0
      %v3440 = vsel %vm1464, %v3077, 0
      %v3443 = vsel %vm1464, %v3079, 0
      %3445 = vmatpush.msra.mxu0 %v3278
      %3446 = vmatpush.msra.mxu0 %v3277
      %3447 = vmatpush.msra.mxu0 %v3276
      %3448 = vmatpush.msra.mxu0 %v3275
      %3449 = vmatpush.msra.mxu0 %v3302
      %3450 = vmatpush.msra.mxu0 %v3301
      %3451 = vmatpush.msra.mxu0 %v3300
      %3452 = vmatpush.msra.mxu0 %v3299
      %3453 = vmatpush.msra.mxu0 %v3298
      %3454 = vmatpush.msra.mxu0 %v3297
      %3455 = vmatpush.msra.mxu0 %v3296
      %3456 = vmatpush.msra.mxu0 %v3295
      %3457 = vmatpush.msra.mxu0 %v3145
      %3458 = vmatpush.msra.mxu0 %v3142
      %3459 = vmatpush.msra.mxu0 %v3139
      %3460 = vmatpush.msra.mxu0 %v3136
      %3461 = vmatmul.f32.gmra.mxu0 %v3056
      %v3462 = vpop.f32.mrf.mxu0
      %v3463 = vadd.f32 0.0, %v3462
      %3464 = vmatmul.f32.gmra.mxu0 %v3058
      %v3465 = vpop.f32.mrf.mxu0
      %v3466 = vadd.f32 0.0, %v3465
      %3467 = vmatmul.f32.gmra.mxu0 %v3060
      %v3468 = vpop.f32.mrf.mxu0
      %v3469 = vadd.f32 0.0, %v3468
      %3470 = vmatmul.f32.gmra.mxu0 %v3062
      %v3471 = vpop.f32.mrf.mxu0
      %v3472 = vadd.f32 0.0, %v3471
      %3473 = vmatmul.f32.gmra.mxu0 %v3064
      %v3474 = vpop.f32.mrf.mxu0
      %v3475 = vadd.f32 0.0, %v3474
      %3476 = vmatmul.f32.gmra.mxu0 %v3066
      %v3477 = vpop.f32.mrf.mxu0
      %v3478 = vadd.f32 0.0, %v3477
      %3479 = vmatmul.f32.gmra.mxu0 %v3068
      %v3480 = vpop.f32.mrf.mxu0
      %v3481 = vadd.f32 0.0, %v3480
      %3482 = vmatmul.f32.gmra.mxu0 %v3070
      %v3483 = vpop.f32.mrf.mxu0
      %v3484 = vadd.f32 0.0, %v3483
      %3485 = vmatmul.f32.gmra.mxu0 %v3072
      %v3486 = vpop.f32.mrf.mxu0
      %v3487 = vadd.f32 0.0, %v3486
      %3488 = vmatmul.f32.gmra.mxu0 %v3074
      %v3489 = vpop.f32.mrf.mxu0
      %v3490 = vadd.f32 0.0, %v3489
      %3491 = vmatmul.f32.gmra.mxu0 %v3076
      %v3492 = vpop.f32.mrf.mxu0
      %v3493 = vadd.f32 0.0, %v3492
      %3494 = vmatmul.f32.gmra.mxu0 %v3078
      %v3495 = vpop.f32.mrf.mxu0
      %v3496 = vadd.f32 0.0, %v3495
      %3497 = vdwg.mxu0
      %3498 = vmatpush.msra.mxu0 0.0
      %3499 = vmatpush.msra.mxu0 0.0
      %3500 = vmatpush.msra.mxu0 0.0
      %3501 = vmatpush.msra.mxu0 0.0
      %3502 = vmatpush.msra.mxu0 0.0
      %3503 = vmatpush.msra.mxu0 0.0
      %3504 = vmatpush.msra.mxu0 0.0
      %3505 = vmatpush.msra.mxu0 0.0
      %3506 = vmatpush.msra.mxu0 0.0
      %3507 = vmatpush.msra.mxu0 0.0
      %3508 = vmatpush.msra.mxu0 0.0
      %3509 = vmatpush.msra.mxu0 0.0
      %3510 = vmatpush.msra.mxu0 %v3294
      %3511 = vmatpush.msra.mxu0 %v3293
      %3512 = vmatpush.msra.mxu0 %v3292
      %3513 = vmatpush.msra.mxu0 %v3291
      %3514 = vmatmul.f32.gmra.mxu0 %v3410
      %v3515 = vpop.f32.mrf.mxu0
      %v3516 = vadd.f32 %v3463, %v3515
      %3517 = vmatmul.f32.gmra.mxu0 %v3413
      %v3518 = vpop.f32.mrf.mxu0
      %v3519 = vadd.f32 %v3466, %v3518
      %3520 = vmatmul.f32.gmra.mxu0 %v3416
      %v3521 = vpop.f32.mrf.mxu0
      %v3522 = vadd.f32 %v3469, %v3521
      %3523 = vmatmul.f32.gmra.mxu0 %v3419
      %v3524 = vpop.f32.mrf.mxu0
      %v3525 = vadd.f32 %v3472, %v3524
      %3526 = vmatmul.f32.gmra.mxu0 %v3422
      %v3527 = vpop.f32.mrf.mxu0
      %v3528 = vadd.f32 %v3475, %v3527
      %3529 = vmatmul.f32.gmra.mxu0 %v3425
      %v3530 = vpop.f32.mrf.mxu0
      %v3531 = vadd.f32 %v3478, %v3530
      %3532 = vmatmul.f32.gmra.mxu0 %v3428
      %v3533 = vpop.f32.mrf.mxu0
      %v3534 = vadd.f32 %v3481, %v3533
      %3535 = vmatmul.f32.gmra.mxu0 %v3431
      %v3536 = vpop.f32.mrf.mxu0
      %v3537 = vadd.f32 %v3484, %v3536
      %3538 = vmatmul.f32.gmra.mxu0 %v3434
      %v3539 = vpop.f32.mrf.mxu0
      %v3540 = vadd.f32 %v3487, %v3539
      %3541 = vmatmul.f32.gmra.mxu0 %v3437
      %v3542 = vpop.f32.mrf.mxu0
      %v3543 = vadd.f32 %v3490, %v3542
      %3544 = vmatmul.f32.gmra.mxu0 %v3440
      %v3545 = vpop.f32.mrf.mxu0
      %v3546 = vadd.f32 %v3493, %v3545
      %3547 = vmatmul.f32.gmra.mxu0 %v3443
      %v3548 = vpop.f32.mrf.mxu0
      %v3549 = vadd.f32 %v3496, %v3548
      %3550 = vdwg.mxu0
      %3552 = vset.pattern.permute.xlu0 0
      %3553 = vperm.xlu0 %3552, %v3081
      %v3554 = vpop.permute.xlu0 %3553
      %3557 = vset.pattern.permute.xlu0 0
      %3558 = vperm.xlu0 %3557, %v3082
      %v3559 = vpop.permute.xlu0 %3558
      %3562 = vset.pattern.permute.xlu0 0
      %3563 = vperm.xlu0 %3562, %v3083
      %v3564 = vpop.permute.xlu0 %3563
      %3567 = vset.pattern.permute.xlu0 0
      %3568 = vperm.xlu0 %3567, %v3084
      %v3569 = vpop.permute.xlu0 %3568
      %v3571 = vadd.f32 %v3516, %v3554
      %v3572 = vadd.f32 %v3519, %v3559
      %v3573 = vadd.f32 %v3522, %v3564
      %v3574 = vadd.f32 %v3525, %v3569
      %3576 = vset.pattern.permute.xlu0 0
      %3577 = vperm.xlu0 %3576, %v3085
      %v3578 = vpop.permute.xlu0 %3577
      %3581 = vset.pattern.permute.xlu0 0
      %3582 = vperm.xlu0 %3581, %v3086
      %v3583 = vpop.permute.xlu0 %3582
      %3586 = vset.pattern.permute.xlu0 0
      %3587 = vperm.xlu0 %3586, %v3087
      %v3588 = vpop.permute.xlu0 %3587
      %3591 = vset.pattern.permute.xlu0 0
      %3592 = vperm.xlu0 %3591, %v3088
      %v3593 = vpop.permute.xlu0 %3592
      %v3595 = vadd.f32 %v3528, %v3578
      %v3596 = vadd.f32 %v3531, %v3583
      %v3597 = vadd.f32 %v3534, %v3588
      %v3598 = vadd.f32 %v3537, %v3593
      %3599 = vmatpush.msra.mxu0 %v426
      %3600 = vmatpush.msra.mxu0 %v424
      %3601 = vmatpush.msra.mxu0 %v422
      %3602 = vmatpush.msra.mxu0 %v420
      %3603 = vmatpush.msra.mxu0 %v418
      %3604 = vmatpush.msra.mxu0 %v416
      %3605 = vmatpush.msra.mxu0 %v414
      %3606 = vmatpush.msra.mxu0 %v412
      %3607 = vmatpush.msra.mxu0 %v410
      %3608 = vmatpush.msra.mxu0 %v408
      %3609 = vmatpush.msra.mxu0 %v406
      %3610 = vmatpush.msra.mxu0 %v404
      %3611 = vmatpush.msra.mxu0 %v402
      %3612 = vmatpush.msra.mxu0 %v400
      %3613 = vmatpush.msra.mxu0 %v398
      %3614 = vmatpush.msra.mxu0 %v396
      %3615 = vmatmul.f32.gmra.mxu0 %v3357
      %v3616 = vpop.f32.mrf.mxu0
      %v3617 = vadd.f32 0.0, %v3616
      %3618 = vmatmul.f32.gmra.mxu0 %v3360
      %v3619 = vpop.f32.mrf.mxu0
      %v3620 = vadd.f32 0.0, %v3619
      %3621 = vmatmul.f32.gmra.mxu0 %v3363
      %v3622 = vpop.f32.mrf.mxu0
      %v3623 = vadd.f32 0.0, %v3622
      %3624 = vmatmul.f32.gmra.mxu0 %v3366
      %v3625 = vpop.f32.mrf.mxu0
      %v3626 = vadd.f32 0.0, %v3625
      %3627 = vdwg.mxu0
      %3628 = vmatpush.msra.mxu0 %v458
      %3629 = vmatpush.msra.mxu0 %v456
      %3630 = vmatpush.msra.mxu0 %v454
      %3631 = vmatpush.msra.mxu0 %v452
      %3632 = vmatpush.msra.mxu0 %v450
      %3633 = vmatpush.msra.mxu0 %v448
      %3634 = vmatpush.msra.mxu0 %v446
      %3635 = vmatpush.msra.mxu0 %v444
      %3636 = vmatpush.msra.mxu0 %v442
      %3637 = vmatpush.msra.mxu0 %v440
      %3638 = vmatpush.msra.mxu0 %v438
      %3639 = vmatpush.msra.mxu0 %v436
      %3640 = vmatpush.msra.mxu0 %v434
      %3641 = vmatpush.msra.mxu0 %v432
      %3642 = vmatpush.msra.mxu0 %v430
      %3643 = vmatpush.msra.mxu0 %v428
      %3644 = vmatmul.f32.gmra.mxu0 %v3398
      %v3645 = vpop.f32.mrf.mxu0
      %v3646 = vadd.f32 %v3617, %v3645
      %3647 = vmatmul.f32.gmra.mxu0 %v3401
      %v3648 = vpop.f32.mrf.mxu0
      %v3649 = vadd.f32 %v3620, %v3648
      %3650 = vmatmul.f32.gmra.mxu0 %v3404
      %v3651 = vpop.f32.mrf.mxu0
      %v3652 = vadd.f32 %v3623, %v3651
      %3653 = vmatmul.f32.gmra.mxu0 %v3407
      %v3654 = vpop.f32.mrf.mxu0
      %v3655 = vadd.f32 %v3626, %v3654
      %3656 = vdwg.mxu0
      %3657 = vmatpush.msra.mxu0 %v427
      %3658 = vmatpush.msra.mxu0 %v425
      %3659 = vmatpush.msra.mxu0 %v423
      %3660 = vmatpush.msra.mxu0 %v421
      %3661 = vmatpush.msra.mxu0 %v419
      %3662 = vmatpush.msra.mxu0 %v417
      %3663 = vmatpush.msra.mxu0 %v415
      %3664 = vmatpush.msra.mxu0 %v413
      %3665 = vmatpush.msra.mxu0 %v411
      %3666 = vmatpush.msra.mxu0 %v409
      %3667 = vmatpush.msra.mxu0 %v407
      %3668 = vmatpush.msra.mxu0 %v405
      %3669 = vmatpush.msra.mxu0 %v403
      %3670 = vmatpush.msra.mxu0 %v401
      %3671 = vmatpush.msra.mxu0 %v399
      %3672 = vmatpush.msra.mxu0 %v397
      %3673 = vmatmul.f32.gmra.mxu0 %v3357
      %v3674 = vpop.f32.mrf.mxu0
      %v3675 = vadd.f32 0.0, %v3674
      %3676 = vmatmul.f32.gmra.mxu0 %v3360
      %v3677 = vpop.f32.mrf.mxu0
      %v3678 = vadd.f32 0.0, %v3677
      %3679 = vmatmul.f32.gmra.mxu0 %v3363
      %v3680 = vpop.f32.mrf.mxu0
      %v3681 = vadd.f32 0.0, %v3680
      %3682 = vmatmul.f32.gmra.mxu0 %v3366
      %v3683 = vpop.f32.mrf.mxu0
      %v3684 = vadd.f32 0.0, %v3683
      %3685 = vdwg.mxu0
      %3686 = vmatpush.msra.mxu0 %v459
      %3687 = vmatpush.msra.mxu0 %v457
      %3688 = vmatpush.msra.mxu0 %v455
      %3689 = vmatpush.msra.mxu0 %v453
      %3690 = vmatpush.msra.mxu0 %v451
      %3691 = vmatpush.msra.mxu0 %v449
      %3692 = vmatpush.msra.mxu0 %v447
      %3693 = vmatpush.msra.mxu0 %v445
      %3694 = vmatpush.msra.mxu0 %v443
      %3695 = vmatpush.msra.mxu0 %v441
      %3696 = vmatpush.msra.mxu0 %v439
      %3697 = vmatpush.msra.mxu0 %v437
      %3698 = vmatpush.msra.mxu0 %v435
      %3699 = vmatpush.msra.mxu0 %v433
      %3700 = vmatpush.msra.mxu0 %v431
      %3701 = vmatpush.msra.mxu0 %v429
      %3702 = vmatmul.f32.gmra.mxu0 %v3398
      %v3703 = vpop.f32.mrf.mxu0
      %v3704 = vadd.f32 %v3675, %v3703
      %3705 = vmatmul.f32.gmra.mxu0 %v3401
      %v3706 = vpop.f32.mrf.mxu0
      %v3707 = vadd.f32 %v3678, %v3706
      %3708 = vmatmul.f32.gmra.mxu0 %v3404
      %v3709 = vpop.f32.mrf.mxu0
      %v3710 = vadd.f32 %v3681, %v3709
      %3711 = vmatmul.f32.gmra.mxu0 %v3407
      %v3712 = vpop.f32.mrf.mxu0
      %v3713 = vadd.f32 %v3684, %v3712
      %3714 = vdwg.mxu0
      %v3715 = vadd.f32 %v3345, %v3646
      %v3716 = vadd.f32 %v3386, %v3704
      %v3717 = vadd.f32 %v3348, %v3649
      %v3718 = vadd.f32 %v3389, %v3707
      %v3719 = vadd.f32 %v3351, %v3652
      %v3720 = vadd.f32 %v3392, %v3710
      %v3721 = vadd.f32 %v3354, %v3655
      %v3722 = vadd.f32 %v3395, %v3713
      %v3724 = vsel %vm967, %v3571, 0
      %v3727 = vsel %vm967, %v3572, 0
      %v3730 = vsel %vm967, %v3573, 0
      %v3733 = vsel %vm967, %v3574, 0
      %3735 = vmatpush.msra.mxu0 0.0
      %3736 = vmatpush.msra.mxu0 0.0
      %3737 = vmatpush.msra.mxu0 0.0
      %3738 = vmatpush.msra.mxu0 0.0
      %3739 = vmatpush.msra.mxu0 0.0
      %3740 = vmatpush.msra.mxu0 0.0
      %3741 = vmatpush.msra.mxu0 0.0
      %3742 = vmatpush.msra.mxu0 0.0
      %3743 = vmatpush.msra.mxu0 0.0
      %3744 = vmatpush.msra.mxu0 0.0
      %3745 = vmatpush.msra.mxu0 0.0
      %3746 = vmatpush.msra.mxu0 0.0
      %3747 = vmatpush.msra.mxu0 0.0
      %3748 = vmatpush.msra.mxu0 0.0
      %3749 = vmatpush.msra.mxu0 %v386
      %3750 = vmatpush.msra.mxu0 %v384
      %3751 = vmatmul.f32.gmra.mxu0 %v3724
      %v3752 = vpop.f32.mrf.mxu0
      %v3753 = vadd.f32 0.0, %v3752
      %3754 = vmatmul.f32.gmra.mxu0 %v3727
      %v3755 = vpop.f32.mrf.mxu0
      %v3756 = vadd.f32 0.0, %v3755
      %3757 = vmatmul.f32.gmra.mxu0 %v3730
      %v3758 = vpop.f32.mrf.mxu0
      %v3759 = vadd.f32 0.0, %v3758
      %3760 = vmatmul.f32.gmra.mxu0 %v3733
      %v3761 = vpop.f32.mrf.mxu0
      %v3762 = vadd.f32 0.0, %v3761
      %3763 = vdwg.mxu0
      %3764 = vmatpush.msra.mxu0 0.0
      %3765 = vmatpush.msra.mxu0 0.0
      %3766 = vmatpush.msra.mxu0 0.0
      %3767 = vmatpush.msra.mxu0 0.0
      %3768 = vmatpush.msra.mxu0 0.0
      %3769 = vmatpush.msra.mxu0 0.0
      %3770 = vmatpush.msra.mxu0 0.0
      %3771 = vmatpush.msra.mxu0 0.0
      %3772 = vmatpush.msra.mxu0 0.0
      %3773 = vmatpush.msra.mxu0 0.0
      %3774 = vmatpush.msra.mxu0 0.0
      %3775 = vmatpush.msra.mxu0 0.0
      %3776 = vmatpush.msra.mxu0 0.0
      %3777 = vmatpush.msra.mxu0 0.0
      %3778 = vmatpush.msra.mxu0 %v387
      %3779 = vmatpush.msra.mxu0 %v385
      %3780 = vmatmul.f32.gmra.mxu0 %v3724
      %v3781 = vpop.f32.mrf.mxu0
      %v3782 = vadd.f32 0.0, %v3781
      %3783 = vmatmul.f32.gmra.mxu0 %v3727
      %v3784 = vpop.f32.mrf.mxu0
      %v3785 = vadd.f32 0.0, %v3784
      %3786 = vmatmul.f32.gmra.mxu0 %v3730
      %v3787 = vpop.f32.mrf.mxu0
      %v3788 = vadd.f32 0.0, %v3787
      %3789 = vmatmul.f32.gmra.mxu0 %v3733
      %v3790 = vpop.f32.mrf.mxu0
      %v3791 = vadd.f32 0.0, %v3790
      %3792 = vdwg.mxu0
      %v3793 = vadd.f32 %v3715, %v3753
      %v3794 = vadd.f32 %v3716, %v3782
      %v3795 = vadd.f32 %v3717, %v3756
      %v3796 = vadd.f32 %v3718, %v3785
      %v3797 = vadd.f32 %v3719, %v3759
      %v3798 = vadd.f32 %v3720, %v3788
      %v3799 = vadd.f32 %v3721, %v3762
      %v3800 = vadd.f32 %v3722, %v3791
      %v3802 = vsel %vm967, %v3595, 0
      %v3805 = vsel %vm967, %v3596, 0
      %v3808 = vsel %vm967, %v3597, 0
      %v3811 = vsel %vm967, %v3598, 0
      %3813 = vmatpush.msra.mxu0 0.0
      %3814 = vmatpush.msra.mxu0 0.0
      %3815 = vmatpush.msra.mxu0 0.0
      %3816 = vmatpush.msra.mxu0 0.0
      %3817 = vmatpush.msra.mxu0 0.0
      %3818 = vmatpush.msra.mxu0 0.0
      %3819 = vmatpush.msra.mxu0 0.0
      %3820 = vmatpush.msra.mxu0 0.0
      %3821 = vmatpush.msra.mxu0 0.0
      %3822 = vmatpush.msra.mxu0 0.0
      %3823 = vmatpush.msra.mxu0 0.0
      %3824 = vmatpush.msra.mxu0 0.0
      %3825 = vmatpush.msra.mxu0 0.0
      %3826 = vmatpush.msra.mxu0 0.0
      %3827 = vmatpush.msra.mxu0 %v390
      %3828 = vmatpush.msra.mxu0 %v388
      %3829 = vmatmul.f32.gmra.mxu0 %v3802
      %v3830 = vpop.f32.mrf.mxu0
      %v3831 = vadd.f32 0.0, %v3830
      %3832 = vmatmul.f32.gmra.mxu0 %v3805
      %v3833 = vpop.f32.mrf.mxu0
      %v3834 = vadd.f32 0.0, %v3833
      %3835 = vmatmul.f32.gmra.mxu0 %v3808
      %v3836 = vpop.f32.mrf.mxu0
      %v3837 = vadd.f32 0.0, %v3836
      %3838 = vmatmul.f32.gmra.mxu0 %v3811
      %v3839 = vpop.f32.mrf.mxu0
      %v3840 = vadd.f32 0.0, %v3839
      %3841 = vdwg.mxu0
      %3842 = vmatpush.msra.mxu0 0.0
      %3843 = vmatpush.msra.mxu0 0.0
      %3844 = vmatpush.msra.mxu0 0.0
      %3845 = vmatpush.msra.mxu0 0.0
      %3846 = vmatpush.msra.mxu0 0.0
      %3847 = vmatpush.msra.mxu0 0.0
      %3848 = vmatpush.msra.mxu0 0.0
      %3849 = vmatpush.msra.mxu0 0.0
      %3850 = vmatpush.msra.mxu0 0.0
      %3851 = vmatpush.msra.mxu0 0.0
      %3852 = vmatpush.msra.mxu0 0.0
      %3853 = vmatpush.msra.mxu0 0.0
      %3854 = vmatpush.msra.mxu0 0.0
      %3855 = vmatpush.msra.mxu0 0.0
      %3856 = vmatpush.msra.mxu0 %v391
      %3857 = vmatpush.msra.mxu0 %v389
      %3858 = vmatmul.f32.gmra.mxu0 %v3802
      %v3859 = vpop.f32.mrf.mxu0
      %v3860 = vadd.f32 0.0, %v3859
      %3861 = vmatmul.f32.gmra.mxu0 %v3805
      %v3862 = vpop.f32.mrf.mxu0
      %v3863 = vadd.f32 0.0, %v3862
      %3864 = vmatmul.f32.gmra.mxu0 %v3808
      %v3865 = vpop.f32.mrf.mxu0
      %v3866 = vadd.f32 0.0, %v3865
      %3867 = vmatmul.f32.gmra.mxu0 %v3811
      %v3868 = vpop.f32.mrf.mxu0
      %v3869 = vadd.f32 0.0, %v3868
      %3870 = vdwg.mxu0
      %v3871 = vadd.f32 %v3793, %v3831
      %v3872 = vadd.f32 %v3794, %v3860
      %v3873 = vadd.f32 %v3795, %v3834
      %v3874 = vadd.f32 %v3796, %v3863
      %v3875 = vadd.f32 %v3797, %v3837
      %v3876 = vadd.f32 %v3798, %v3866
      %v3877 = vadd.f32 %v3799, %v3840
      %v3878 = vadd.f32 %v3800, %v3869
      %v3880 = vsel %vm967, %v3540, 0
      %v3883 = vsel %vm967, %v3543, 0
      %v3886 = vsel %vm967, %v3546, 0
      %v3889 = vsel %vm967, %v3549, 0
      %3891 = vmatpush.msra.mxu0 0.0
      %3892 = vmatpush.msra.mxu0 0.0
      %3893 = vmatpush.msra.mxu0 0.0
      %3894 = vmatpush.msra.mxu0 0.0
      %3895 = vmatpush.msra.mxu0 0.0
      %3896 = vmatpush.msra.mxu0 0.0
      %3897 = vmatpush.msra.mxu0 0.0
      %3898 = vmatpush.msra.mxu0 0.0
      %3899 = vmatpush.msra.mxu0 0.0
      %3900 = vmatpush.msra.mxu0 0.0
      %3901 = vmatpush.msra.mxu0 0.0
      %3902 = vmatpush.msra.mxu0 0.0
      %3903 = vmatpush.msra.mxu0 0.0
      %3904 = vmatpush.msra.mxu0 0.0
      %3905 = vmatpush.msra.mxu0 %v394
      %3906 = vmatpush.msra.mxu0 %v392
      %3907 = vmatmul.f32.gmra.mxu0 %v3880
      %v3908 = vpop.f32.mrf.mxu0
      %v3909 = vadd.f32 0.0, %v3908
      %3910 = vmatmul.f32.gmra.mxu0 %v3883
      %v3911 = vpop.f32.mrf.mxu0
      %v3912 = vadd.f32 0.0, %v3911
      %3913 = vmatmul.f32.gmra.mxu0 %v3886
      %v3914 = vpop.f32.mrf.mxu0
      %v3915 = vadd.f32 0.0, %v3914
      %3916 = vmatmul.f32.gmra.mxu0 %v3889
      %v3917 = vpop.f32.mrf.mxu0
      %v3918 = vadd.f32 0.0, %v3917
      %3919 = vdwg.mxu0
      %3920 = vmatpush.msra.mxu0 0.0
      %3921 = vmatpush.msra.mxu0 0.0
      %3922 = vmatpush.msra.mxu0 0.0
      %3923 = vmatpush.msra.mxu0 0.0
      %3924 = vmatpush.msra.mxu0 0.0
      %3925 = vmatpush.msra.mxu0 0.0
      %3926 = vmatpush.msra.mxu0 0.0
      %3927 = vmatpush.msra.mxu0 0.0
      %3928 = vmatpush.msra.mxu0 0.0
      %3929 = vmatpush.msra.mxu0 0.0
      %3930 = vmatpush.msra.mxu0 0.0
      %3931 = vmatpush.msra.mxu0 0.0
      %3932 = vmatpush.msra.mxu0 0.0
      %3933 = vmatpush.msra.mxu0 0.0
      %3934 = vmatpush.msra.mxu0 %v395
      %3935 = vmatpush.msra.mxu0 %v393
      %3936 = vmatmul.f32.gmra.mxu0 %v3880
      %v3937 = vpop.f32.mrf.mxu0
      %v3938 = vadd.f32 0.0, %v3937
      %3939 = vmatmul.f32.gmra.mxu0 %v3883
      %v3940 = vpop.f32.mrf.mxu0
      %v3941 = vadd.f32 0.0, %v3940
      %3942 = vmatmul.f32.gmra.mxu0 %v3886
      %v3943 = vpop.f32.mrf.mxu0
      %v3944 = vadd.f32 0.0, %v3943
      %3945 = vmatmul.f32.gmra.mxu0 %v3889
      %v3946 = vpop.f32.mrf.mxu0
      %v3947 = vadd.f32 0.0, %v3946
      %3948 = vdwg.mxu0
      %v3949 = vadd.f32 %v3871, %v3909
      %v3950 = vadd.f32 %v3872, %v3938
      %v3951 = vadd.f32 %v3873, %v3912
      %v3952 = vadd.f32 %v3874, %v3941
      %v3953 = vadd.f32 %v3875, %v3915
      %v3954 = vadd.f32 %v3876, %v3944
      %v3955 = vadd.f32 %v3877, %v3918
      %v3956 = vadd.f32 %v3878, %v3947
      %v3957 = vmax.f32 %v3949, 0.0
      %v3958 = vmax.f32 %v3950, 0.0
      %v3959 = vmax.f32 %v3951, 0.0
      %v3960 = vmax.f32 %v3952, 0.0
      %v3961 = vmax.f32 %v3953, 0.0
      %v3962 = vmax.f32 %v3954, 0.0
      %v3963 = vmax.f32 %v3955, 0.0
      %v3964 = vmax.f32 %v3956, 0.0
      %3965 = vmatpush.xpose.msra.mxu0 0.0
      %3966 = vmatpush.xpose.msra.mxu0 0.0
      %3967 = vmatpush.xpose.msra.mxu0 0.0
      %3968 = vmatpush.xpose.msra.mxu0 0.0
      %3969 = vmatpush.xpose.msra.mxu0 0.0
      %3970 = vmatpush.xpose.msra.mxu0 0.0
      %3971 = vmatpush.xpose.msra.mxu0 0.0
      %3972 = vmatpush.xpose.msra.mxu0 0.0
      %3973 = vmatpush.xpose.msra.mxu0 0.0
      %3974 = vmatpush.xpose.msra.mxu0 0.0
      %3975 = vmatpush.xpose.msra.mxu0 0.0
      %3976 = vmatpush.xpose.msra.mxu0 0.0
      %3977 = vmatpush.xpose.msra.mxu0 0.0
      %3978 = vmatpush.xpose.msra.mxu0 0.0
      %3979 = vmatpush.xpose.msra.mxu0 %v386
      %3980 = vmatpush.xpose.msra.mxu0 %v384
      %3981 = vmatmul.f32.gmra.mxu0 %v3957
      %v3982 = vpop.f32.mrf.mxu0
      %v3983 = vadd.f32 0.0, %v3982
      %3984 = vmatmul.f32.gmra.mxu0 %v3959
      %v3985 = vpop.f32.mrf.mxu0
      %v3986 = vadd.f32 0.0, %v3985
      %3987 = vmatmul.f32.gmra.mxu0 %v3961
      %v3988 = vpop.f32.mrf.mxu0
      %v3989 = vadd.f32 0.0, %v3988
      %3990 = vmatmul.f32.gmra.mxu0 %v3963
      %v3991 = vpop.f32.mrf.mxu0
      %v3992 = vadd.f32 0.0, %v3991
      %3993 = vdwg.mxu0
      %3994 = vmatpush.xpose.msra.mxu0 0.0
      %3995 = vmatpush.xpose.msra.mxu0 0.0
      %3996 = vmatpush.xpose.msra.mxu0 0.0
      %3997 = vmatpush.xpose.msra.mxu0 0.0
      %3998 = vmatpush.xpose.msra.mxu0 0.0
      %3999 = vmatpush.xpose.msra.mxu0 0.0
      %4000 = vmatpush.xpose.msra.mxu0 0.0
      %4001 = vmatpush.xpose.msra.mxu0 0.0
      %4002 = vmatpush.xpose.msra.mxu0 0.0
      %4003 = vmatpush.xpose.msra.mxu0 0.0
      %4004 = vmatpush.xpose.msra.mxu0 0.0
      %4005 = vmatpush.xpose.msra.mxu0 0.0
      %4006 = vmatpush.xpose.msra.mxu0 0.0
      %4007 = vmatpush.xpose.msra.mxu0 0.0
      %4008 = vmatpush.xpose.msra.mxu0 %v387
      %4009 = vmatpush.xpose.msra.mxu0 %v385
      %4010 = vmatmul.f32.gmra.mxu0 %v3958
      %v4011 = vpop.f32.mrf.mxu0
      %v4012 = vadd.f32 %v3983, %v4011
      %4013 = vmatmul.f32.gmra.mxu0 %v3960
      %v4014 = vpop.f32.mrf.mxu0
      %v4015 = vadd.f32 %v3986, %v4014
      %4016 = vmatmul.f32.gmra.mxu0 %v3962
      %v4017 = vpop.f32.mrf.mxu0
      %v4018 = vadd.f32 %v3989, %v4017
      %4019 = vmatmul.f32.gmra.mxu0 %v3964
      %v4020 = vpop.f32.mrf.mxu0
      %v4021 = vadd.f32 %v3992, %v4020
      %4022 = vdwg.mxu0
      %4023 = vmatpush.xpose.msra.mxu0 0.0
      %4024 = vmatpush.xpose.msra.mxu0 0.0
      %4025 = vmatpush.xpose.msra.mxu0 0.0
      %4026 = vmatpush.xpose.msra.mxu0 0.0
      %4027 = vmatpush.xpose.msra.mxu0 0.0
      %4028 = vmatpush.xpose.msra.mxu0 0.0
      %4029 = vmatpush.xpose.msra.mxu0 0.0
      %4030 = vmatpush.xpose.msra.mxu0 0.0
      %4031 = vmatpush.xpose.msra.mxu0 0.0
      %4032 = vmatpush.xpose.msra.mxu0 0.0
      %4033 = vmatpush.xpose.msra.mxu0 0.0
      %4034 = vmatpush.xpose.msra.mxu0 0.0
      %4035 = vmatpush.xpose.msra.mxu0 0.0
      %4036 = vmatpush.xpose.msra.mxu0 0.0
      %4037 = vmatpush.xpose.msra.mxu0 %v390
      %4038 = vmatpush.xpose.msra.mxu0 %v388
      %4039 = vmatmul.f32.gmra.mxu0 %v3957
      %v4040 = vpop.f32.mrf.mxu0
      %v4041 = vadd.f32 0.0, %v4040
      %4042 = vmatmul.f32.gmra.mxu0 %v3959
      %v4043 = vpop.f32.mrf.mxu0
      %v4044 = vadd.f32 0.0, %v4043
      %4045 = vmatmul.f32.gmra.mxu0 %v3961
      %v4046 = vpop.f32.mrf.mxu0
      %v4047 = vadd.f32 0.0, %v4046
      %4048 = vmatmul.f32.gmra.mxu0 %v3963
      %v4049 = vpop.f32.mrf.mxu0
      %v4050 = vadd.f32 0.0, %v4049
      %4051 = vdwg.mxu0
      %4052 = vmatpush.xpose.msra.mxu0 0.0
      %4053 = vmatpush.xpose.msra.mxu0 0.0
      %4054 = vmatpush.xpose.msra.mxu0 0.0
      %4055 = vmatpush.xpose.msra.mxu0 0.0
      %4056 = vmatpush.xpose.msra.mxu0 0.0
      %4057 = vmatpush.xpose.msra.mxu0 0.0
      %4058 = vmatpush.xpose.msra.mxu0 0.0
      %4059 = vmatpush.xpose.msra.mxu0 0.0
      %4060 = vmatpush.xpose.msra.mxu0 0.0
      %4061 = vmatpush.xpose.msra.mxu0 0.0
      %4062 = vmatpush.xpose.msra.mxu0 0.0
      %4063 = vmatpush.xpose.msra.mxu0 0.0
      %4064 = vmatpush.xpose.msra.mxu0 0.0
      %4065 = vmatpush.xpose.msra.mxu0 0.0
      %4066 = vmatpush.xpose.msra.mxu0 %v391
      %4067 = vmatpush.xpose.msra.mxu0 %v389
      %4068 = vmatmul.f32.gmra.mxu0 %v3958
      %v4069 = vpop.f32.mrf.mxu0
      %v4070 = vadd.f32 %v4041, %v4069
      %4071 = vmatmul.f32.gmra.mxu0 %v3960
      %v4072 = vpop.f32.mrf.mxu0
      %v4073 = vadd.f32 %v4044, %v4072
      %4074 = vmatmul.f32.gmra.mxu0 %v3962
      %v4075 = vpop.f32.mrf.mxu0
      %v4076 = vadd.f32 %v4047, %v4075
      %4077 = vmatmul.f32.gmra.mxu0 %v3964
      %v4078 = vpop.f32.mrf.mxu0
      %v4079 = vadd.f32 %v4050, %v4078
      %4080 = vdwg.mxu0
      %4081 = vmatpush.xpose.msra.mxu0 0.0
      %4082 = vmatpush.xpose.msra.mxu0 0.0
      %4083 = vmatpush.xpose.msra.mxu0 0.0
      %4084 = vmatpush.xpose.msra.mxu0 0.0
      %4085 = vmatpush.xpose.msra.mxu0 0.0
      %4086 = vmatpush.xpose.msra.mxu0 0.0
      %4087 = vmatpush.xpose.msra.mxu0 0.0
      %4088 = vmatpush.xpose.msra.mxu0 0.0
      %4089 = vmatpush.xpose.msra.mxu0 0.0
      %4090 = vmatpush.xpose.msra.mxu0 0.0
      %4091 = vmatpush.xpose.msra.mxu0 0.0
      %4092 = vmatpush.xpose.msra.mxu0 0.0
      %4093 = vmatpush.xpose.msra.mxu0 0.0
      %4094 = vmatpush.xpose.msra.mxu0 0.0
      %4095 = vmatpush.xpose.msra.mxu0 %v394
      %4096 = vmatpush.xpose.msra.mxu0 %v392
      %4097 = vmatmul.f32.gmra.mxu0 %v3957
      %v4098 = vpop.f32.mrf.mxu0
      %v4099 = vadd.f32 0.0, %v4098
      %4100 = vmatmul.f32.gmra.mxu0 %v3959
      %v4101 = vpop.f32.mrf.mxu0
      %v4102 = vadd.f32 0.0, %v4101
      %4103 = vmatmul.f32.gmra.mxu0 %v3961
      %v4104 = vpop.f32.mrf.mxu0
      %v4105 = vadd.f32 0.0, %v4104
      %4106 = vmatmul.f32.gmra.mxu0 %v3963
      %v4107 = vpop.f32.mrf.mxu0
      %v4108 = vadd.f32 0.0, %v4107
      %4109 = vdwg.mxu0
      %4110 = vmatpush.xpose.msra.mxu0 0.0
      %4111 = vmatpush.xpose.msra.mxu0 0.0
      %4112 = vmatpush.xpose.msra.mxu0 0.0
      %4113 = vmatpush.xpose.msra.mxu0 0.0
      %4114 = vmatpush.xpose.msra.mxu0 0.0
      %4115 = vmatpush.xpose.msra.mxu0 0.0
      %4116 = vmatpush.xpose.msra.mxu0 0.0
      %4117 = vmatpush.xpose.msra.mxu0 0.0
      %4118 = vmatpush.xpose.msra.mxu0 0.0
      %4119 = vmatpush.xpose.msra.mxu0 0.0
      %4120 = vmatpush.xpose.msra.mxu0 0.0
      %4121 = vmatpush.xpose.msra.mxu0 0.0
      %4122 = vmatpush.xpose.msra.mxu0 0.0
      %4123 = vmatpush.xpose.msra.mxu0 0.0
      %4124 = vmatpush.xpose.msra.mxu0 %v395
      %4125 = vmatpush.xpose.msra.mxu0 %v393
      %4126 = vmatmul.f32.gmra.mxu0 %v3958
      %v4127 = vpop.f32.mrf.mxu0
      %v4128 = vadd.f32 %v4099, %v4127
      %4129 = vmatmul.f32.gmra.mxu0 %v3960
      %v4130 = vpop.f32.mrf.mxu0
      %v4131 = vadd.f32 %v4102, %v4130
      %4132 = vmatmul.f32.gmra.mxu0 %v3962
      %v4133 = vpop.f32.mrf.mxu0
      %v4134 = vadd.f32 %v4105, %v4133
      %4135 = vmatmul.f32.gmra.mxu0 %v3964
      %v4136 = vpop.f32.mrf.mxu0
      %v4137 = vadd.f32 %v4108, %v4136
      %4138 = vdwg.mxu0
      %v4139 = vsel %vm967, %v4012, 0.0
      %4140 = vadd.xlane.f32.xlu0 %v4139
      %v4141 = vpop.xlane.xlu0 %4140
      %v4142 = vsel %vm967, %v4015, 0.0
      %4143 = vadd.xlane.f32.xlu0 %v4142
      %v4144 = vpop.xlane.xlu0 %4143
      %v4145 = vsel %vm967, %v4018, 0.0
      %4146 = vadd.xlane.f32.xlu0 %v4145
      %v4147 = vpop.xlane.xlu0 %4146
      %v4148 = vsel %vm967, %v4021, 0.0
      %4149 = vadd.xlane.f32.xlu0 %v4148
      %v4150 = vpop.xlane.xlu0 %4149
      %v4151 = vmul.f32 %v4141, 0.0625
      %v4152 = vmul.f32 %v4144, 0.0625
      %v4153 = vmul.f32 %v4147, 0.0625
      %v4154 = vmul.f32 %v4150, 0.0625
      %v4155 = vsel %vm967, %v4070, 0.0
      %4156 = vadd.xlane.f32.xlu0 %v4155
      %v4157 = vpop.xlane.xlu0 %4156
      %v4158 = vsel %vm967, %v4073, 0.0
      %4159 = vadd.xlane.f32.xlu0 %v4158
      %v4160 = vpop.xlane.xlu0 %4159
      %v4161 = vsel %vm967, %v4076, 0.0
      %4162 = vadd.xlane.f32.xlu0 %v4161
      %v4163 = vpop.xlane.xlu0 %4162
      %v4164 = vsel %vm967, %v4079, 0.0
      %4165 = vadd.xlane.f32.xlu0 %v4164
      %v4166 = vpop.xlane.xlu0 %4165
      %v4167 = vmul.f32 %v4157, 0.00390625
      %v4168 = vmul.f32 %v4160, 0.00390625
      %v4169 = vmul.f32 %v4163, 0.00390625
      %v4170 = vmul.f32 %v4166, 0.00390625
      %v4171 = vmul.f32 %v4070, 0.0625
      %v4172 = vmul.f32 %v4073, 0.0625
      %v4173 = vmul.f32 %v4076, 0.0625
      %v4174 = vmul.f32 %v4079, 0.0625
      %v4175 = vmul.f32 %v4128, 0.0625
      %v4176 = vmul.f32 %v4131, 0.0625
      %v4177 = vmul.f32 %v4134, 0.0625
      %v4178 = vmul.f32 %v4137, 0.0625
      %v4179 = vld [vmem:[%s9] sm:$0xff]
      %v4180 = vld [vmem:[%s9 + $0x8] sm:$0xff]
      %v4181 = vld [vmem:[%s9 + $0x10] sm:$0xff]
      %v4182 = vld [vmem:[%s9 + $0x18] sm:$0xff]
      %v4183 = vld [vmem:[%s9 + $0x20] sm:$0xff]
      %v4184 = vld [vmem:[%s9 + $0x28] sm:$0xff]
      %v4185 = vld [vmem:[%s9 + $0x30] sm:$0xff]
      %v4186 = vld [vmem:[%s9 + $0x38] sm:$0xff]
      %v4187 = vld [vmem:[%s10] sm:$0xff]
      %v4188 = vld [vmem:[%s10 + $0x8] sm:$0xff]
      %v4189 = vld [vmem:[%s10 + $0x10] sm:$0xff]
      %v4190 = vld [vmem:[%s10 + $0x18] sm:$0xff]
      %4192 = vset.pattern.permute.xlu0 0
      %4193 = vperm.xlu0 %4192, %v4187
      %v4194 = vpop.permute.xlu0 %4193
      %4197 = vset.pattern.permute.xlu0 0
      %4198 = vperm.xlu0 %4197, %v4188
      %v4199 = vpop.permute.xlu0 %4198
      %4202 = vset.pattern.permute.xlu0 0
      %4203 = vperm.xlu0 %4202, %v4189
      %v4204 = vpop.permute.xlu0 %4203
      %4207 = vset.pattern.permute.xlu0 0
      %4208 = vperm.xlu0 %4207, %v4190
      %v4209 = vpop.permute.xlu0 %4208
      %v4212 = vsel %vm1464, %v4180, 0
      %v4215 = vsel %vm1464, %v4182, 0
      %v4218 = vsel %vm1464, %v4184, 0
      %v4221 = vsel %vm1464, %v4186, 0
      %4223 = vmatpush.msra.mxu0 %v4154
      %4224 = vmatpush.msra.mxu0 %v4153
      %4225 = vmatpush.msra.mxu0 %v4152
      %4226 = vmatpush.msra.mxu0 %v4151
      %4227 = vmatpush.msra.mxu0 %v4178
      %4228 = vmatpush.msra.mxu0 %v4177
      %4229 = vmatpush.msra.mxu0 %v4176
      %4230 = vmatpush.msra.mxu0 %v4175
      %4231 = vmatpush.msra.mxu0 %v4174
      %4232 = vmatpush.msra.mxu0 %v4173
      %4233 = vmatpush.msra.mxu0 %v4172
      %4234 = vmatpush.msra.mxu0 %v4171
      %4235 = vmatpush.msra.mxu0 %v4021
      %4236 = vmatpush.msra.mxu0 %v4018
      %4237 = vmatpush.msra.mxu0 %v4015
      %4238 = vmatpush.msra.mxu0 %v4012
      %4239 = vmatmul.f32.gmra.mxu0 %v4179
      %v4240 = vpop.f32.mrf.mxu0
      %v4241 = vadd.f32 %v4194, %v4240
      %4242 = vmatmul.f32.gmra.mxu0 %v4181
      %v4243 = vpop.f32.mrf.mxu0
      %v4244 = vadd.f32 %v4199, %v4243
      %4245 = vmatmul.f32.gmra.mxu0 %v4183
      %v4246 = vpop.f32.mrf.mxu0
      %v4247 = vadd.f32 %v4204, %v4246
      %4248 = vmatmul.f32.gmra.mxu0 %v4185
      %v4249 = vpop.f32.mrf.mxu0
      %v4250 = vadd.f32 %v4209, %v4249
      %4251 = vdwg.mxu0
      %4252 = vmatpush.msra.mxu0 0.0
      %4253 = vmatpush.msra.mxu0 0.0
      %4254 = vmatpush.msra.mxu0 0.0
      %4255 = vmatpush.msra.mxu0 0.0
      %4256 = vmatpush.msra.mxu0 0.0
      %4257 = vmatpush.msra.mxu0 0.0
      %4258 = vmatpush.msra.mxu0 0.0
      %4259 = vmatpush.msra.mxu0 0.0
      %4260 = vmatpush.msra.mxu0 0.0
      %4261 = vmatpush.msra.mxu0 0.0
      %4262 = vmatpush.msra.mxu0 0.0
      %4263 = vmatpush.msra.mxu0 0.0
      %4264 = vmatpush.msra.mxu0 %v4170
      %4265 = vmatpush.msra.mxu0 %v4169
      %4266 = vmatpush.msra.mxu0 %v4168
      %4267 = vmatpush.msra.mxu0 %v4167
      %4268 = vmatmul.f32.gmra.mxu0 %v4212
      %v4269 = vpop.f32.mrf.mxu0
      %v4270 = vadd.f32 %v4241, %v4269
      %4271 = vmatmul.f32.gmra.mxu0 %v4215
      %v4272 = vpop.f32.mrf.mxu0
      %v4273 = vadd.f32 %v4244, %v4272
      %4274 = vmatmul.f32.gmra.mxu0 %v4218
      %v4275 = vpop.f32.mrf.mxu0
      %v4276 = vadd.f32 %v4247, %v4275
      %4277 = vmatmul.f32.gmra.mxu0 %v4221
      %v4278 = vpop.f32.mrf.mxu0
      %v4279 = vadd.f32 %v4250, %v4278
      %4280 = vdwg.mxu0
      %4281 = vst.msk [vmem:[%s383] sm:$0xff] %vm967, %v4270
      %4282 = vst.msk [vmem:[%s383 + $0x8] sm:$0xff] %vm967, %v4273
      %4283 = vst.msk [vmem:[%s383 + $0x10] sm:$0xff] %vm967, %v4276
      %4284 = vst.msk [vmem:[%s383 + $0x18] sm:$0xff] %vm967, %v4279
      %p4285 = scmp.lt.s32.totalorder %s22, 1
      %s4286 = scalar_select %p4285, %s22, 1
      %s4287 = smul.addr %s4286, 4
      %s4288 = smul.addr %s4287, 8
      %s4289 = scalar_lea.vmem %s11, %s4288
      // Predicated region
      $region65: #{tpu_custom_call.1} parent=63 // pred_check
        %p4290 = pneg %p276
      $region66: #{tpu_custom_call.1} parent=63 // pred_check_branch
        %4292 = sbr.rel (%p4290) target = $region68
      $region67: #{tpu_custom_call.1} parent=63 // pred_region
        _
      $region68: #{tpu_custom_call.1} parent=63 // pred_fallthru
        _
    $region64: #{tpu_custom_call.1} parent=5 // pred_fallthru
      _
    %p4293 = scmp.le.s32.totalorder 2, %s17
    // Predicated region
    $region69: #{tpu_custom_call.1} parent=5 // pred_check
      %p4294 = pneg %p4293
    $region70: #{tpu_custom_call.1} parent=5 // pred_check_branch
      %4296 = sbr.rel (%p4294) target = $region72
    $region71: #{tpu_custom_call.1} parent=5 // pred_region
      %s4297 = ssub.s32 %s17, 2
      // Predicated region
      $region73: #{tpu_custom_call.1} parent=71 // pred_check
        %p4298 = pneg %p282
      $region74: #{tpu_custom_call.1} parent=71 // pred_check_branch
        %4300 = sbr.rel (%p4298) target = $region76
      $region75: #{tpu_custom_call.1} parent=71 // pred_region
        %p4301 = scmp.lt.s32.totalorder %s23, 1
        %s4302 = scalar_select %p4301, %s23, 1
        %s4303 = smul.addr %s4302, 4
        %s4304 = smul.addr %s4303, 8
        %s4305 = scalar_lea.vmem %s11, %s4304
      $region76: #{tpu_custom_call.1} parent=71 // pred_fallthru
        _
    $region72: #{tpu_custom_call.1} parent=5 // pred_fallthru
      _
  $region6: #{tpu_custom_call.1} parent=0 // loop_footer
    %s21 = sadd.s32 1, %s17
  $region7: #{tpu_custom_call.1} parent=0 // loop_footer_branch
    %16 = sbr.rel target = $region3
  $region8: #{tpu_custom_call.1} parent=0 // loop_exit
    _

</llo_original>
